<compile_context>
chip_gen: v7x
topology: tpu7x:2x2x1
jax: 0.10.0
libtpu: 0.0.40
codegen_flags: <defaults>
</compile_context>

<pallas_src>
import math

import jax
import jax.numpy as jnp
from jax.experimental import pallas as pl
from jax.experimental.pallas import tpu as pltpu

# ---- model shape constants (small shapes consistent with LargeModel's structure) ----
BATCH = 2
MAX_LENGTH = 8          # sequence length L
VOCAB_SIZE = 100
EMBED_DIM = 32          # E
NUM_HEADS = 4           # H
HEAD_DIM = EMBED_DIM // NUM_HEADS
FF_DIM = 64
NUM_BLOCKS = 2
NUM_CLASSES = 10
LOGIT_PAD = 128         # lane-dense padded classifier width
LN_EPS = 1e-5

NUM_ROWS = BATCH * MAX_LENGTH          # 16 activation rows, row r = b*L + l
VOCAB_PAD = 104                        # vocab rounded up to a sublane multiple (one-hot K dim)
POS_ROW0 = VOCAB_PAD                   # pre-replicated positional rows start here
EMB_ROWS = VOCAB_PAD + NUM_ROWS        # 120

# per-block row offsets inside the packed weight slab (all sublane-aligned, width 64)
W_Q, W_K, W_V, W_O, W_F1, W_F2 = 0, 32, 64, 96, 128, 160
W_ROWS_PER_BLOCK = 224
W_COLS = 64

# per-block rows inside the packed bias / layernorm slab (width 64)
B_Q, B_K, B_V, B_O, B_F1, B_F2, B_LN1W, B_LN1B, B_LN2W, B_LN2B = range(10)
BV_ROWS_PER_BLOCK = 16
BV_COLS = 64

# rows inside the global constants slab (width 128)
M_RED0 = 0        # (E,E) all-1/E reduction matrix (LayerNorm mean on the MXU)
M_WC0 = 32        # (E,128) classifier weight^T, lane-padded
M_LNFW = 64       # final LayerNorm weight row
M_LNFB = 65       # final LayerNorm bias row
M_BC = 66         # classifier bias row (lane-padded)
M_POOLT0 = 72     # (H,E) head -> lane expansion
M_POOL0 = 80      # (E,H) lane -> head pooling
M_G00 = 112       # (NS,NS) select group member j=0
M_G10 = 128       # (NS,NS) select group member j=1
M_GD0 = 144       # (NS,NS) G0 - G1 (key difference selection)
M_MEAN0 = 160     # (B,NS) mean-over-L pooling matrix (1/L entries)
MISC_ROWS = 168
MISC_COLS = 128

# Set to jnp.bfloat16 on v6e/v7x for ~2x MXU throughput (per review).  Numerics then
# deviate slightly from the f32 PyTorch reference; LN/softmax/elementwise stay f32.
MATMUL_DTYPE = jnp.float32


def _mdot(a, b):
    return jnp.dot(a.astype(MATMUL_DTYPE), b.astype(MATMUL_DTYPE),
                   preferred_element_type=jnp.float32)


def _fdot(a, b):
    return jnp.dot(a, b, preferred_element_type=jnp.float32)


def _layernorm(x, w, b, red):
    # Cross-lane reductions on the MXU: `red` is an (E,E) matrix of 1/E entries, so
    # x @ red gives the per-row mean already broadcast across every lane.
    mu = _fdot(x, red)
    msq = _fdot(x * x, red)
    var = msq - mu * mu        # E[x^2] - mu^2 (slightly different rounding than torch)
    return (x - mu) * jax.lax.rsqrt(var + LN_EPS) * w + b


def fused_model_kernel(tok_ref, emb_ref, w_ref, bv_ref, misc_ref, out_ref):
    E, H, NS, FF = EMBED_DIM, NUM_HEADS, NUM_ROWS, FF_DIM

    # ---- global constants (one packed DMA; static aligned ref slices only) ----
    red = misc_ref[M_RED0:M_RED0 + E, 0:E]
    wc = misc_ref[M_WC0:M_WC0 + E, :]
    lnf_w = misc_ref[pl.ds(M_LNFW, 1), 0:E]
    lnf_b = misc_ref[pl.ds(M_LNFB, 1), 0:E]
    bc = misc_ref[pl.ds(M_BC, 1), :]
    poolt = misc_ref[M_POOLT0:M_POOLT0 + H, 0:E]
    pool = misc_ref[M_POOL0:M_POOL0 + E, 0:H]
    g0 = misc_ref[M_G00:M_G00 + NS, 0:NS]
    g1 = misc_ref[M_G10:M_G10 + NS, 0:NS]
    gd = misc_ref[M_GD0:M_GD0 + NS, 0:NS]
    mmean = misc_ref[M_MEAN0:M_MEAN0 + BATCH, 0:NS]

    # ---- embedding prologue: one-hot token gather on the MXU + pre-replicated positions ----
    tok = tok_ref[...]                                                    # (NS,1) int32
    vocab_iota = jax.lax.broadcasted_iota(jnp.int32, (NS, VOCAB_PAD), 1)
    onehot = (vocab_iota == tok).astype(jnp.float32)                      # (NS,104)
    xf = _fdot(onehot, emb_ref[0:VOCAB_PAD, :]) + emb_ref[POS_ROW0:POS_ROW0 + NS, :]

    # ---- transformer blocks (statically unrolled); all math stays 2-D (NS, lanes) ----
    for blk in range(NUM_BLOCKS):
        r = blk * W_ROWS_PER_BLOCK
        s = blk * BV_ROWS_PER_BLOCK
        wq = w_ref[r + W_Q:r + W_Q + E, 0:E]
        wk = w_ref[r + W_K:r + W_K + E, 0:E]
        wv = w_ref[r + W_V:r + W_V + E, 0:E]
        wo = w_ref[r + W_O:r + W_O + E, 0:E]
        w1 = w_ref[r + W_F1:r + W_F1 + E, 0:FF]
        w2 = w_ref[r + W_F2:r + W_F2 + FF, 0:E]
        b_q = bv_ref[pl.ds(s + B_Q, 1), 0:E]
        b_k = bv_ref[pl.ds(s + B_K, 1), 0:E]
        b_v = bv_ref[pl.ds(s + B_V, 1), 0:E]
        b_o = bv_ref[pl.ds(s + B_O, 1), 0:E]
        b_1 = bv_ref[pl.ds(s + B_F1, 1), 0:FF]
        b_2 = bv_ref[pl.ds(s + B_F2, 1), 0:E]
        ln1w = bv_ref[pl.ds(s + B_LN1W, 1), 0:E]
        ln1b = bv_ref[pl.ds(s + B_LN1B, 1), 0:E]
        ln2w = bv_ref[pl.ds(s + B_LN2W, 1), 0:E]
        ln2b = bv_ref[pl.ds(s + B_LN2B, 1), 0:E]

        # --- multi-head self-attention: "sequence" axis = original batch (length B=2),
        #     one softmax group per position l, expressed with constant selection matmuls ---
        q = _mdot(xf, wq) + b_q               # (NS,E); 1/sqrt(head_dim) folded into wq/b_q
        k = _mdot(xf, wk) + b_k
        v = _mdot(xf, wv) + b_v
        kd = _mdot(gd, k)                     # (NS,E): k[j=0] - k[j=1] of this row's group
        dlt = _mdot(q * kd, pool)             # (NS,H): per-head score gap s0 - s1
        p1 = pl.reciprocal(1.0 + jnp.exp(dlt), approx=True)   # 2-key softmax, single exp
        p0 = 1.0 - p1
        v0 = _mdot(g0, v)                     # (NS,E): value of group member j=0
        v1 = _mdot(g1, v)
        o = _mdot(p0, poolt) * v0 + _mdot(p1, poolt) * v1     # (NS,E) attention output
        attn = _mdot(o, wo) + b_o

        # --- residual + LN1, feed-forward, residual + LN2 ---
        # TODO(synk): dropout layers are identity (inference/eval semantics).
        x1 = _layernorm(xf + attn, ln1w, ln1b, red)
        h = jnp.maximum(_mdot(x1, w1) + b_1, 0.0)
        ff = _mdot(h, w2) + b_2
        xf = _layernorm(x1 + ff, ln2w, ln2b, red)

    # ---- torch.mean(x, dim=1) as a constant (B,NS) matmul, final LN, classifier ----
    pooled = _fdot(mmean, xf)                 # (B,E)
    y = _layernorm(pooled, lnf_w, lnf_b, red)
    out_ref[...] = _mdot(y, wc) + bc          # (B,128) lane-dense (unmasked) store


def fused_forward(tok_ids, params):
    # Gridless single-TensorCore call: total VMEM footprint ~0.25 MiB, no tiling needed.
    # TODO(synk): if batch/seq ever grow, add a row-tile grid with
    # dimension_semantics=("parallel",) to engage both v7x TensorCores.
    return pl.pallas_call(
        fused_model_kernel,
        out_shape=jax.ShapeDtypeStruct((BATCH, LOGIT_PAD), jnp.float32),
        in_specs=[pl.BlockSpec(memory_space=pltpu.MemorySpace.VMEM)] * 5,
        out_specs=pl.BlockSpec(memory_space=pltpu.MemorySpace.VMEM),
    )(tok_ids, params['emb_slab'], params['w_slab'], params['bv_slab'], params['misc_slab'])


def init_params(key):
    E, H, Dh, FF, L, B = EMBED_DIM, NUM_HEADS, HEAD_DIM, FF_DIM, MAX_LENGTH, BATCH
    scale = 1.0 / math.sqrt(Dh)

    def normal(k, shape, s=0.02):
        return s * jax.random.normal(k, shape, dtype=jnp.float32)

    keys = jax.random.split(key, 4 + NUM_BLOCKS)

    # ---- embedding slab: token table (one-hot gathered on the MXU) + replicated positions ----
    tok_emb = normal(keys[0], (VOCAB_SIZE, E))
    pos_emb = normal(keys[1], (MAX_LENGTH, E))
    emb_slab = jnp.zeros((EMB_ROWS, E), jnp.float32)
    emb_slab = emb_slab.at[:VOCAB_SIZE].set(tok_emb)
    emb_slab = emb_slab.at[POS_ROW0:POS_ROW0 + NUM_ROWS].set(jnp.tile(pos_emb, (B, 1)))

    # ---- per-block weight / bias slabs (PyTorch Linear weights are (out,in); store W^T) ----
    w_slab = jnp.zeros((NUM_BLOCKS * W_ROWS_PER_BLOCK, W_COLS), jnp.float32)
    bv_slab = jnp.zeros((NUM_BLOCKS * BV_ROWS_PER_BLOCK, BV_COLS), jnp.float32)
    for i in range(NUM_BLOCKS):
        bk = jax.random.split(keys[4 + i], 8)
        in_proj_w = normal(bk[0], (3 * E, E))       # MHA in_proj_weight
        in_proj_b = normal(bk[1], (3 * E,))         # MHA in_proj_bias
        out_w, out_b = normal(bk[2], (E, E)), normal(bk[3], (E,))
        ff1_w, ff1_b = normal(bk[4], (FF, E)), normal(bk[5], (FF,))
        ff2_w, ff2_b = normal(bk[6], (E, FF)), normal(bk[7], (E,))

        r = i * W_ROWS_PER_BLOCK
        w_slab = w_slab.at[r + W_Q:r + W_Q + E, :E].set(in_proj_w[:E].T * scale)  # scale folded
        w_slab = w_slab.at[r + W_K:r + W_K + E, :E].set(in_proj_w[E:2 * E].T)
        w_slab = w_slab.at[r + W_V:r + W_V + E, :E].set(in_proj_w[2 * E:].T)
        w_slab = w_slab.at[r + W_O:r + W_O + E, :E].set(out_w.T)
        w_slab = w_slab.at[r + W_F1:r + W_F1 + E, :FF].set(ff1_w.T)
        w_slab = w_slab.at[r + W_F2:r + W_F2 + FF, :E].set(ff2_w.T)

        s = i * BV_ROWS_PER_BLOCK
        bv_slab = bv_slab.at[s + B_Q, :E].set(in_proj_b[:E] * scale)
        bv_slab = bv_slab.at[s + B_K, :E].set(in_proj_b[E:2 * E])
        bv_slab = bv_slab.at[s + B_V, :E].set(in_proj_b[2 * E:])
        bv_slab = bv_slab.at[s + B_O, :E].set(out_b)
        bv_slab = bv_slab.at[s + B_F1, :FF].set(ff1_b)
        bv_slab = bv_slab.at[s + B_F2, :E].set(ff2_b)
        bv_slab = bv_slab.at[s + B_LN1W, :E].set(jnp.ones((E,), jnp.float32))
        bv_slab = bv_slab.at[s + B_LN2W, :E].set(jnp.ones((E,), jnp.float32))
        # LayerNorm biases stay zero

    # ---- global constants slab ----
    misc = jnp.zeros((MISC_ROWS, MISC_COLS), jnp.float32)
    misc = misc.at[M_RED0:M_RED0 + E, :E].set(jnp.full((E, E), 1.0 / E, jnp.float32))
    wc = normal(keys[2], (NUM_CLASSES, E))              # classifier weight (out,in)
    bc = normal(keys[3], (NUM_CLASSES,))
    misc = misc.at[M_WC0:M_WC0 + E, :NUM_CLASSES].set(wc.T)
    misc = misc.at[M_LNFW, :E].set(jnp.ones((E,), jnp.float32))
    misc = misc.at[M_BC, :NUM_CLASSES].set(bc)
    # head pooling: pool[e,h] = 1 iff embedding lane e belongs to head h
    pool = jnp.kron(jnp.eye(H, dtype=jnp.float32), jnp.ones((Dh, 1), jnp.float32))   # (E,H)
    misc = misc.at[M_POOLT0:M_POOLT0 + H, :E].set(pool.T)
    misc = misc.at[M_POOL0:M_POOL0 + E, :H].set(pool)
    # group selection matrices for row layout r = b*L + l (softmax group = same l)
    eye_l = jnp.eye(L, dtype=jnp.float32)
    g0 = jnp.kron(jnp.zeros((B, B), jnp.float32).at[:, 0].set(1.0), eye_l)           # (NS,NS)
    g1 = jnp.kron(jnp.zeros((B, B), jnp.float32).at[:, 1].set(1.0), eye_l)
    misc = misc.at[M_G00:M_G00 + NUM_ROWS, :NUM_ROWS].set(g0)
    misc = misc.at[M_G10:M_G10 + NUM_ROWS, :NUM_ROWS].set(g1)
    misc = misc.at[M_GD0:M_GD0 + NUM_ROWS, :NUM_ROWS].set(g0 - g1)
    mmean = jnp.kron(jnp.eye(B, dtype=jnp.float32),
                     jnp.full((1, L), 1.0 / L, jnp.float32))                          # (B,NS)
    misc = misc.at[M_MEAN0:M_MEAN0 + B, :NUM_ROWS].set(mmean)

    return {'emb_slab': emb_slab, 'w_slab': w_slab, 'bv_slab': bv_slab, 'misc_slab': misc}


@jax.jit
def large_model_forward(tokens, params):
    # The only wrapper-side ops are a trivial (2,8)->(16,1) reshape of the int32 ids and
    # the final lane un-pad slice; the gather, positional add, both transformer blocks,
    # mean-pool, final LN and classifier all run inside one pallas_call.
    tok_ids = tokens.reshape(NUM_ROWS, 1).astype(jnp.int32)     # row r = b*L + l
    logits_pad = fused_forward(tok_ids, params)                 # (B, 128)
    return logits_pad[:, :NUM_CLASSES]


if __name__ == "__main__":
    tokens = jax.random.randint(jax.random.PRNGKey(0), (BATCH, MAX_LENGTH),
                                0, VOCAB_SIZE, dtype=jnp.int32)
    params = init_params(jax.random.PRNGKey(42))
    logits = large_model_forward(tokens, params)
    jax.block_until_ready(logits)
    assert logits.shape == (BATCH, NUM_CLASSES) and logits.dtype == jnp.float32
    print("KERNEL_OK")
</pallas_src>

<mosaic_0001>
module attributes {stable_mosaic.version = 11 : i64} {
  func.func @fused_model_kernel(%arg0: memref<16x1xi32, #tpu.memory_space<vmem>>, %arg1: memref<120x32xf32, #tpu.memory_space<vmem>>, %arg2: memref<448x64xf32, #tpu.memory_space<vmem>>, %arg3: memref<32x64xf32, #tpu.memory_space<vmem>>, %arg4: memref<168x128xf32, #tpu.memory_space<vmem>>, %arg5: memref<2x128xf32, #tpu.memory_space<vmem>>) attributes {dimension_semantics = [], scalar_prefetch = 0 : i64, scratch_operands = 0 : i64, tpu.core_type = #tpu.core_type<tc>} {
    %c0 = arith.constant 0 : index
    %c0_0 = arith.constant 0 : index
    %0 = vector.load %arg4[%c0, %c0_0] : memref<168x128xf32, #tpu.memory_space<vmem>>, vector<32x32xf32>
    %c32 = arith.constant 32 : index
    %c0_1 = arith.constant 0 : index
    %1 = vector.load %arg4[%c32, %c0_1] : memref<168x128xf32, #tpu.memory_space<vmem>>, vector<32x128xf32>
    %c64 = arith.constant 64 : index
    %c0_2 = arith.constant 0 : index
    %2 = vector.load %arg4[%c64, %c0_2] : memref<168x128xf32, #tpu.memory_space<vmem>>, vector<1x32xf32>
    %c65 = arith.constant 65 : index
    %c0_3 = arith.constant 0 : index
    %3 = vector.load %arg4[%c65, %c0_3] : memref<168x128xf32, #tpu.memory_space<vmem>>, vector<1x32xf32>
    %c66 = arith.constant 66 : index
    %c0_4 = arith.constant 0 : index
    %4 = vector.load %arg4[%c66, %c0_4] : memref<168x128xf32, #tpu.memory_space<vmem>>, vector<1x128xf32>
    %c72 = arith.constant 72 : index
    %c0_5 = arith.constant 0 : index
    %5 = vector.load %arg4[%c72, %c0_5] : memref<168x128xf32, #tpu.memory_space<vmem>>, vector<4x32xf32>
    %c80 = arith.constant 80 : index
    %c0_6 = arith.constant 0 : index
    %6 = vector.load %arg4[%c80, %c0_6] : memref<168x128xf32, #tpu.memory_space<vmem>>, vector<32x4xf32>
    %c112 = arith.constant 112 : index
    %c0_7 = arith.constant 0 : index
    %7 = vector.load %arg4[%c112, %c0_7] : memref<168x128xf32, #tpu.memory_space<vmem>>, vector<16x16xf32>
    %c128 = arith.constant 128 : index
    %c0_8 = arith.constant 0 : index
    %8 = vector.load %arg4[%c128, %c0_8] : memref<168x128xf32, #tpu.memory_space<vmem>>, vector<16x16xf32>
    %c144 = arith.constant 144 : index
    %c0_9 = arith.constant 0 : index
    %9 = vector.load %arg4[%c144, %c0_9] : memref<168x128xf32, #tpu.memory_space<vmem>>, vector<16x16xf32>
    %c160 = arith.constant 160 : index
    %c0_10 = arith.constant 0 : index
    %10 = vector.load %arg4[%c160, %c0_10] : memref<168x128xf32, #tpu.memory_space<vmem>>, vector<2x16xf32>
    %c0_11 = arith.constant 0 : index
    %c0_12 = arith.constant 0 : index
    %11 = vector.load %arg0[%c0_11, %c0_12] : memref<16x1xi32, #tpu.memory_space<vmem>>, vector<16x1xi32>
    %12 = tpu.iota {dimensions = array<i32: 1>} : vector<16x104xi32>
    %13 = vector.broadcast %11 : vector<16x1xi32> to vector<16x104xi32>
    %14 = arith.cmpi eq, %12, %13 : vector<16x104xi32>
    %15 = arith.extui %14 : vector<16x104xi1> to vector<16x104xi32>
    %16 = arith.sitofp %15 : vector<16x104xi32> to vector<16x104xf32>
    %c0_13 = arith.constant 0 : index
    %c0_14 = arith.constant 0 : index
    %17 = vector.load %arg1[%c0_13, %c0_14] : memref<120x32xf32, #tpu.memory_space<vmem>>, vector<104x32xf32>
    %cst = arith.constant dense<0.000000e+00> : vector<16x32xf32>
    %18 = tpu.matmul %16, %17, %cst {dimension_numbers = #tpu.dot_dimension_numbers<[1], [0], [0], [1], [0, 0, 1, 1], [], []>} : vector<16x104xf32>, vector<104x32xf32>, vector<16x32xf32> -> vector<16x32xf32>
    %c104 = arith.constant 104 : index
    %c0_15 = arith.constant 0 : index
    %19 = vector.load %arg1[%c104, %c0_15] : memref<120x32xf32, #tpu.memory_space<vmem>>, vector<16x32xf32>
    %20 = arith.addf %18, %19 : vector<16x32xf32>
    %c0_16 = arith.constant 0 : index
    %c0_17 = arith.constant 0 : index
    %21 = vector.load %arg2[%c0_16, %c0_17] : memref<448x64xf32, #tpu.memory_space<vmem>>, vector<32x32xf32>
    %c32_18 = arith.constant 32 : index
    %c0_19 = arith.constant 0 : index
    %22 = vector.load %arg2[%c32_18, %c0_19] : memref<448x64xf32, #tpu.memory_space<vmem>>, vector<32x32xf32>
    %c64_20 = arith.constant 64 : index
    %c0_21 = arith.constant 0 : index
    %23 = vector.load %arg2[%c64_20, %c0_21] : memref<448x64xf32, #tpu.memory_space<vmem>>, vector<32x32xf32>
    %c96 = arith.constant 96 : index
    %c0_22 = arith.constant 0 : index
    %24 = vector.load %arg2[%c96, %c0_22] : memref<448x64xf32, #tpu.memory_space<vmem>>, vector<32x32xf32>
    %c128_23 = arith.constant 128 : index
    %c0_24 = arith.constant 0 : index
    %25 = vector.load %arg2[%c128_23, %c0_24] : memref<448x64xf32, #tpu.memory_space<vmem>>, vector<32x64xf32>
    %c160_25 = arith.constant 160 : index
    %c0_26 = arith.constant 0 : index
    %26 = vector.load %arg2[%c160_25, %c0_26] : memref<448x64xf32, #tpu.memory_space<vmem>>, vector<64x32xf32>
    %c0_27 = arith.constant 0 : index
    %c0_28 = arith.constant 0 : index
    %27 = vector.load %arg3[%c0_27, %c0_28] : memref<32x64xf32, #tpu.memory_space<vmem>>, vector<1x32xf32>
    %c1 = arith.constant 1 : index
    %c0_29 = arith.constant 0 : index
    %28 = vector.load %arg3[%c1, %c0_29] : memref<32x64xf32, #tpu.memory_space<vmem>>, vector<1x32xf32>
    %c2 = arith.constant 2 : index
    %c0_30 = arith.constant 0 : index
    %29 = vector.load %arg3[%c2, %c0_30] : memref<32x64xf32, #tpu.memory_space<vmem>>, vector<1x32xf32>
    %c3 = arith.constant 3 : index
    %c0_31 = arith.constant 0 : index
    %30 = vector.load %arg3[%c3, %c0_31] : memref<32x64xf32, #tpu.memory_space<vmem>>, vector<1x32xf32>
    %c4 = arith.constant 4 : index
    %c0_32 = arith.constant 0 : index
    %31 = vector.load %arg3[%c4, %c0_32] : memref<32x64xf32, #tpu.memory_space<vmem>>, vector<1x64xf32>
    %c5 = arith.constant 5 : index
    %c0_33 = arith.constant 0 : index
    %32 = vector.load %arg3[%c5, %c0_33] : memref<32x64xf32, #tpu.memory_space<vmem>>, vector<1x32xf32>
    %c6 = arith.constant 6 : index
    %c0_34 = arith.constant 0 : index
    %33 = vector.load %arg3[%c6, %c0_34] : memref<32x64xf32, #tpu.memory_space<vmem>>, vector<1x32xf32>
    %c7 = arith.constant 7 : index
    %c0_35 = arith.constant 0 : index
    %34 = vector.load %arg3[%c7, %c0_35] : memref<32x64xf32, #tpu.memory_space<vmem>>, vector<1x32xf32>
    %c8 = arith.constant 8 : index
    %c0_36 = arith.constant 0 : index
    %35 = vector.load %arg3[%c8, %c0_36] : memref<32x64xf32, #tpu.memory_space<vmem>>, vector<1x32xf32>
    %c9 = arith.constant 9 : index
    %c0_37 = arith.constant 0 : index
    %36 = vector.load %arg3[%c9, %c0_37] : memref<32x64xf32, #tpu.memory_space<vmem>>, vector<1x32xf32>
    %cst_38 = arith.constant dense<0.000000e+00> : vector<16x32xf32>
    %37 = tpu.matmul %20, %21, %cst_38 {dimension_numbers = #tpu.dot_dimension_numbers<[1], [0], [0], [1], [0, 0, 1, 1], [], []>} : vector<16x32xf32>, vector<32x32xf32>, vector<16x32xf32> -> vector<16x32xf32>
    %38 = vector.broadcast %27 : vector<1x32xf32> to vector<16x32xf32>
    %39 = arith.addf %37, %38 : vector<16x32xf32>
    %cst_39 = arith.constant dense<0.000000e+00> : vector<16x32xf32>
    %40 = tpu.matmul %20, %22, %cst_39 {dimension_numbers = #tpu.dot_dimension_numbers<[1], [0], [0], [1], [0, 0, 1, 1], [], []>} : vector<16x32xf32>, vector<32x32xf32>, vector<16x32xf32> -> vector<16x32xf32>
    %41 = vector.broadcast %28 : vector<1x32xf32> to vector<16x32xf32>
    %42 = arith.addf %40, %41 : vector<16x32xf32>
    %cst_40 = arith.constant dense<0.000000e+00> : vector<16x32xf32>
    %43 = tpu.matmul %20, %23, %cst_40 {dimension_numbers = #tpu.dot_dimension_numbers<[1], [0], [0], [1], [0, 0, 1, 1], [], []>} : vector<16x32xf32>, vector<32x32xf32>, vector<16x32xf32> -> vector<16x32xf32>
    %44 = vector.broadcast %29 : vector<1x32xf32> to vector<16x32xf32>
    %45 = arith.addf %43, %44 : vector<16x32xf32>
    %cst_41 = arith.constant dense<0.000000e+00> : vector<16x32xf32>
    %46 = tpu.matmul %9, %42, %cst_41 {dimension_numbers = #tpu.dot_dimension_numbers<[1], [0], [0], [1], [0, 0, 1, 1], [], []>} : vector<16x16xf32>, vector<16x32xf32>, vector<16x32xf32> -> vector<16x32xf32>
    %47 = arith.mulf %39, %46 : vector<16x32xf32>
    %cst_42 = arith.constant dense<0.000000e+00> : vector<16x4xf32>
    %48 = tpu.matmul %47, %6, %cst_42 {dimension_numbers = #tpu.dot_dimension_numbers<[1], [0], [0], [1], [0, 0, 1, 1], [], []>} : vector<16x32xf32>, vector<32x4xf32>, vector<16x4xf32> -> vector<16x4xf32>
    %49 = math.exp %48 : vector<16x4xf32>
    %cst_43 = arith.constant 1.000000e+00 : f32
    %50 = vector.broadcast %cst_43 : f32 to vector<16x4xf32>
    %51 = arith.addf %50, %49 : vector<16x4xf32>
    %52 = tpu.reciprocal %51 {approx = true} : vector<16x4xf32> -> vector<16x4xf32>
    %cst_44 = arith.constant 1.000000e+00 : f32
    %53 = vector.broadcast %cst_44 : f32 to vector<16x4xf32>
    %54 = arith.subf %53, %52 : vector<16x4xf32>
    %cst_45 = arith.constant dense<0.000000e+00> : vector<16x32xf32>
    %55 = tpu.matmul %7, %45, %cst_45 {dimension_numbers = #tpu.dot_dimension_numbers<[1], [0], [0], [1], [0, 0, 1, 1], [], []>} : vector<16x16xf32>, vector<16x32xf32>, vector<16x32xf32> -> vector<16x32xf32>
    %cst_46 = arith.constant dense<0.000000e+00> : vector<16x32xf32>
    %56 = tpu.matmul %8, %45, %cst_46 {dimension_numbers = #tpu.dot_dimension_numbers<[1], [0], [0], [1], [0, 0, 1, 1], [], []>} : vector<16x16xf32>, vector<16x32xf32>, vector<16x32xf32> -> vector<16x32xf32>
    %cst_47 = arith.constant dense<0.000000e+00> : vector<16x32xf32>
    %57 = tpu.matmul %54, %5, %cst_47 {dimension_numbers = #tpu.dot_dimension_numbers<[1], [0], [0], [1], [0, 0, 1, 1], [], []>} : vector<16x4xf32>, vector<4x32xf32>, vector<16x32xf32> -> vector<16x32xf32>
    %58 = arith.mulf %57, %55 : vector<16x32xf32>
    %cst_48 = arith.constant dense<0.000000e+00> : vector<16x32xf32>
    %59 = tpu.matmul %52, %5, %cst_48 {dimension_numbers = #tpu.dot_dimension_numbers<[1], [0], [0], [1], [0, 0, 1, 1], [], []>} : vector<16x4xf32>, vector<4x32xf32>, vector<16x32xf32> -> vector<16x32xf32>
    %60 = arith.mulf %59, %56 : vector<16x32xf32>
    %61 = arith.addf %58, %60 : vector<16x32xf32>
    %cst_49 = arith.constant dense<0.000000e+00> : vector<16x32xf32>
    %62 = tpu.matmul %61, %24, %cst_49 {dimension_numbers = #tpu.dot_dimension_numbers<[1], [0], [0], [1], [0, 0, 1, 1], [], []>} : vector<16x32xf32>, vector<32x32xf32>, vector<16x32xf32> -> vector<16x32xf32>
    %63 = vector.broadcast %30 : vector<1x32xf32> to vector<16x32xf32>
    %64 = arith.addf %62, %63 : vector<16x32xf32>
    %65 = arith.addf %20, %64 : vector<16x32xf32>
    %cst_50 = arith.constant dense<0.000000e+00> : vector<16x32xf32>
    %66 = tpu.matmul %65, %0, %cst_50 {dimension_numbers = #tpu.dot_dimension_numbers<[1], [0], [0], [1], [0, 0, 1, 1], [], []>} : vector<16x32xf32>, vector<32x32xf32>, vector<16x32xf32> -> vector<16x32xf32>
    %67 = arith.mulf %65, %65 : vector<16x32xf32>
    %cst_51 = arith.constant dense<0.000000e+00> : vector<16x32xf32>
    %68 = tpu.matmul %67, %0, %cst_51 {dimension_numbers = #tpu.dot_dimension_numbers<[1], [0], [0], [1], [0, 0, 1, 1], [], []>} : vector<16x32xf32>, vector<32x32xf32>, vector<16x32xf32> -> vector<16x32xf32>
    %69 = arith.mulf %66, %66 : vector<16x32xf32>
    %70 = arith.subf %68, %69 : vector<16x32xf32>
    %71 = arith.subf %65, %66 : vector<16x32xf32>
    %cst_52 = arith.constant 9.99999974E-6 : f32
    %72 = vector.broadcast %cst_52 : f32 to vector<16x32xf32>
    %73 = arith.addf %70, %72 : vector<16x32xf32>
    %74 = math.rsqrt %73 : vector<16x32xf32>
    %75 = arith.mulf %71, %74 : vector<16x32xf32>
    %76 = vector.broadcast %33 : vector<1x32xf32> to vector<16x32xf32>
    %77 = arith.mulf %75, %76 : vector<16x32xf32>
    %78 = vector.broadcast %34 : vector<1x32xf32> to vector<16x32xf32>
    %79 = arith.addf %77, %78 : vector<16x32xf32>
    %cst_53 = arith.constant dense<0.000000e+00> : vector<16x64xf32>
    %80 = tpu.matmul %79, %25, %cst_53 {dimension_numbers = #tpu.dot_dimension_numbers<[1], [0], [0], [1], [0, 0, 1, 1], [], []>} : vector<16x32xf32>, vector<32x64xf32>, vector<16x64xf32> -> vector<16x64xf32>
    %81 = vector.broadcast %31 : vector<1x64xf32> to vector<16x64xf32>
    %82 = arith.addf %80, %81 : vector<16x64xf32>
    %cst_54 = arith.constant 0.000000e+00 : f32
    %83 = vector.broadcast %cst_54 : f32 to vector<16x64xf32>
    %84 = arith.maximumf %82, %83 : vector<16x64xf32>
    %cst_55 = arith.constant dense<0.000000e+00> : vector<16x32xf32>
    %85 = tpu.matmul %84, %26, %cst_55 {dimension_numbers = #tpu.dot_dimension_numbers<[1], [0], [0], [1], [0, 0, 1, 1], [], []>} : vector<16x64xf32>, vector<64x32xf32>, vector<16x32xf32> -> vector<16x32xf32>
    %86 = vector.broadcast %32 : vector<1x32xf32> to vector<16x32xf32>
    %87 = arith.addf %85, %86 : vector<16x32xf32>
    %88 = arith.addf %79, %87 : vector<16x32xf32>
    %cst_56 = arith.constant dense<0.000000e+00> : vector<16x32xf32>
    %89 = tpu.matmul %88, %0, %cst_56 {dimension_numbers = #tpu.dot_dimension_numbers<[1], [0], [0], [1], [0, 0, 1, 1], [], []>} : vector<16x32xf32>, vector<32x32xf32>, vector<16x32xf32> -> vector<16x32xf32>
    %90 = arith.mulf %88, %88 : vector<16x32xf32>
    %cst_57 = arith.constant dense<0.000000e+00> : vector<16x32xf32>
    %91 = tpu.matmul %90, %0, %cst_57 {dimension_numbers = #tpu.dot_dimension_numbers<[1], [0], [0], [1], [0, 0, 1, 1], [], []>} : vector<16x32xf32>, vector<32x32xf32>, vector<16x32xf32> -> vector<16x32xf32>
    %92 = arith.mulf %89, %89 : vector<16x32xf32>
    %93 = arith.subf %91, %92 : vector<16x32xf32>
    %94 = arith.subf %88, %89 : vector<16x32xf32>
    %cst_58 = arith.constant 9.99999974E-6 : f32
    %95 = vector.broadcast %cst_58 : f32 to vector<16x32xf32>
    %96 = arith.addf %93, %95 : vector<16x32xf32>
    %97 = math.rsqrt %96 : vector<16x32xf32>
    %98 = arith.mulf %94, %97 : vector<16x32xf32>
    %99 = vector.broadcast %35 : vector<1x32xf32> to vector<16x32xf32>
    %100 = arith.mulf %98, %99 : vector<16x32xf32>
    %101 = vector.broadcast %36 : vector<1x32xf32> to vector<16x32xf32>
    %102 = arith.addf %100, %101 : vector<16x32xf32>
    %c224 = arith.constant 224 : index
    %c0_59 = arith.constant 0 : index
    %103 = vector.load %arg2[%c224, %c0_59] : memref<448x64xf32, #tpu.memory_space<vmem>>, vector<32x32xf32>
    %c256 = arith.constant 256 : index
    %c0_60 = arith.constant 0 : index
    %104 = vector.load %arg2[%c256, %c0_60] : memref<448x64xf32, #tpu.memory_space<vmem>>, vector<32x32xf32>
    %c288 = arith.constant 288 : index
    %c0_61 = arith.constant 0 : index
    %105 = vector.load %arg2[%c288, %c0_61] : memref<448x64xf32, #tpu.memory_space<vmem>>, vector<32x32xf32>
    %c320 = arith.constant 320 : index
    %c0_62 = arith.constant 0 : index
    %106 = vector.load %arg2[%c320, %c0_62] : memref<448x64xf32, #tpu.memory_space<vmem>>, vector<32x32xf32>
    %c352 = arith.constant 352 : index
    %c0_63 = arith.constant 0 : index
    %107 = vector.load %arg2[%c352, %c0_63] : memref<448x64xf32, #tpu.memory_space<vmem>>, vector<32x64xf32>
    %c384 = arith.constant 384 : index
    %c0_64 = arith.constant 0 : index
    %108 = vector.load %arg2[%c384, %c0_64] : memref<448x64xf32, #tpu.memory_space<vmem>>, vector<64x32xf32>
    %c16 = arith.constant 16 : index
    %c0_65 = arith.constant 0 : index
    %109 = vector.load %arg3[%c16, %c0_65] : memref<32x64xf32, #tpu.memory_space<vmem>>, vector<1x32xf32>
    %c17 = arith.constant 17 : index
    %c0_66 = arith.constant 0 : index
    %110 = vector.load %arg3[%c17, %c0_66] : memref<32x64xf32, #tpu.memory_space<vmem>>, vector<1x32xf32>
    %c18 = arith.constant 18 : index
    %c0_67 = arith.constant 0 : index
    %111 = vector.load %arg3[%c18, %c0_67] : memref<32x64xf32, #tpu.memory_space<vmem>>, vector<1x32xf32>
    %c19 = arith.constant 19 : index
    %c0_68 = arith.constant 0 : index
    %112 = vector.load %arg3[%c19, %c0_68] : memref<32x64xf32, #tpu.memory_space<vmem>>, vector<1x32xf32>
    %c20 = arith.constant 20 : index
    %c0_69 = arith.constant 0 : index
    %113 = vector.load %arg3[%c20, %c0_69] : memref<32x64xf32, #tpu.memory_space<vmem>>, vector<1x64xf32>
    %c21 = arith.constant 21 : index
    %c0_70 = arith.constant 0 : index
    %114 = vector.load %arg3[%c21, %c0_70] : memref<32x64xf32, #tpu.memory_space<vmem>>, vector<1x32xf32>
    %c22 = arith.constant 22 : index
    %c0_71 = arith.constant 0 : index
    %115 = vector.load %arg3[%c22, %c0_71] : memref<32x64xf32, #tpu.memory_space<vmem>>, vector<1x32xf32>
    %c23 = arith.constant 23 : index
    %c0_72 = arith.constant 0 : index
    %116 = vector.load %arg3[%c23, %c0_72] : memref<32x64xf32, #tpu.memory_space<vmem>>, vector<1x32xf32>
    %c24 = arith.constant 24 : index
    %c0_73 = arith.constant 0 : index
    %117 = vector.load %arg3[%c24, %c0_73] : memref<32x64xf32, #tpu.memory_space<vmem>>, vector<1x32xf32>
    %c25 = arith.constant 25 : index
    %c0_74 = arith.constant 0 : index
    %118 = vector.load %arg3[%c25, %c0_74] : memref<32x64xf32, #tpu.memory_space<vmem>>, vector<1x32xf32>
    %cst_75 = arith.constant dense<0.000000e+00> : vector<16x32xf32>
    %119 = tpu.matmul %102, %103, %cst_75 {dimension_numbers = #tpu.dot_dimension_numbers<[1], [0], [0], [1], [0, 0, 1, 1], [], []>} : vector<16x32xf32>, vector<32x32xf32>, vector<16x32xf32> -> vector<16x32xf32>
    %120 = vector.broadcast %109 : vector<1x32xf32> to vector<16x32xf32>
    %121 = arith.addf %119, %120 : vector<16x32xf32>
    %cst_76 = arith.constant dense<0.000000e+00> : vector<16x32xf32>
    %122 = tpu.matmul %102, %104, %cst_76 {dimension_numbers = #tpu.dot_dimension_numbers<[1], [0], [0], [1], [0, 0, 1, 1], [], []>} : vector<16x32xf32>, vector<32x32xf32>, vector<16x32xf32> -> vector<16x32xf32>
    %123 = vector.broadcast %110 : vector<1x32xf32> to vector<16x32xf32>
    %124 = arith.addf %122, %123 : vector<16x32xf32>
    %cst_77 = arith.constant dense<0.000000e+00> : vector<16x32xf32>
    %125 = tpu.matmul %102, %105, %cst_77 {dimension_numbers = #tpu.dot_dimension_numbers<[1], [0], [0], [1], [0, 0, 1, 1], [], []>} : vector<16x32xf32>, vector<32x32xf32>, vector<16x32xf32> -> vector<16x32xf32>
    %126 = vector.broadcast %111 : vector<1x32xf32> to vector<16x32xf32>
    %127 = arith.addf %125, %126 : vector<16x32xf32>
    %cst_78 = arith.constant dense<0.000000e+00> : vector<16x32xf32>
    %128 = tpu.matmul %9, %124, %cst_78 {dimension_numbers = #tpu.dot_dimension_numbers<[1], [0], [0], [1], [0, 0, 1, 1], [], []>} : vector<16x16xf32>, vector<16x32xf32>, vector<16x32xf32> -> vector<16x32xf32>
    %129 = arith.mulf %121, %128 : vector<16x32xf32>
    %cst_79 = arith.constant dense<0.000000e+00> : vector<16x4xf32>
    %130 = tpu.matmul %129, %6, %cst_79 {dimension_numbers = #tpu.dot_dimension_numbers<[1], [0], [0], [1], [0, 0, 1, 1], [], []>} : vector<16x32xf32>, vector<32x4xf32>, vector<16x4xf32> -> vector<16x4xf32>
    %131 = math.exp %130 : vector<16x4xf32>
    %cst_80 = arith.constant 1.000000e+00 : f32
    %132 = vector.broadcast %cst_80 : f32 to vector<16x4xf32>
    %133 = arith.addf %132, %131 : vector<16x4xf32>
    %134 = tpu.reciprocal %133 {approx = true} : vector<16x4xf32> -> vector<16x4xf32>
    %cst_81 = arith.constant 1.000000e+00 : f32
    %135 = vector.broadcast %cst_81 : f32 to vector<16x4xf32>
    %136 = arith.subf %135, %134 : vector<16x4xf32>
    %cst_82 = arith.constant dense<0.000000e+00> : vector<16x32xf32>
    %137 = tpu.matmul %7, %127, %cst_82 {dimension_numbers = #tpu.dot_dimension_numbers<[1], [0], [0], [1], [0, 0, 1, 1], [], []>} : vector<16x16xf32>, vector<16x32xf32>, vector<16x32xf32> -> vector<16x32xf32>
    %cst_83 = arith.constant dense<0.000000e+00> : vector<16x32xf32>
    %138 = tpu.matmul %8, %127, %cst_83 {dimension_numbers = #tpu.dot_dimension_numbers<[1], [0], [0], [1], [0, 0, 1, 1], [], []>} : vector<16x16xf32>, vector<16x32xf32>, vector<16x32xf32> -> vector<16x32xf32>
    %cst_84 = arith.constant dense<0.000000e+00> : vector<16x32xf32>
    %139 = tpu.matmul %136, %5, %cst_84 {dimension_numbers = #tpu.dot_dimension_numbers<[1], [0], [0], [1], [0, 0, 1, 1], [], []>} : vector<16x4xf32>, vector<4x32xf32>, vector<16x32xf32> -> vector<16x32xf32>
    %140 = arith.mulf %139, %137 : vector<16x32xf32>
    %cst_85 = arith.constant dense<0.000000e+00> : vector<16x32xf32>
    %141 = tpu.matmul %134, %5, %cst_85 {dimension_numbers = #tpu.dot_dimension_numbers<[1], [0], [0], [1], [0, 0, 1, 1], [], []>} : vector<16x4xf32>, vector<4x32xf32>, vector<16x32xf32> -> vector<16x32xf32>
    %142 = arith.mulf %141, %138 : vector<16x32xf32>
    %143 = arith.addf %140, %142 : vector<16x32xf32>
    %cst_86 = arith.constant dense<0.000000e+00> : vector<16x32xf32>
    %144 = tpu.matmul %143, %106, %cst_86 {dimension_numbers = #tpu.dot_dimension_numbers<[1], [0], [0], [1], [0, 0, 1, 1], [], []>} : vector<16x32xf32>, vector<32x32xf32>, vector<16x32xf32> -> vector<16x32xf32>
    %145 = vector.broadcast %112 : vector<1x32xf32> to vector<16x32xf32>
    %146 = arith.addf %144, %145 : vector<16x32xf32>
    %147 = arith.addf %102, %146 : vector<16x32xf32>
    %cst_87 = arith.constant dense<0.000000e+00> : vector<16x32xf32>
    %148 = tpu.matmul %147, %0, %cst_87 {dimension_numbers = #tpu.dot_dimension_numbers<[1], [0], [0], [1], [0, 0, 1, 1], [], []>} : vector<16x32xf32>, vector<32x32xf32>, vector<16x32xf32> -> vector<16x32xf32>
    %149 = arith.mulf %147, %147 : vector<16x32xf32>
    %cst_88 = arith.constant dense<0.000000e+00> : vector<16x32xf32>
    %150 = tpu.matmul %149, %0, %cst_88 {dimension_numbers = #tpu.dot_dimension_numbers<[1], [0], [0], [1], [0, 0, 1, 1], [], []>} : vector<16x32xf32>, vector<32x32xf32>, vector<16x32xf32> -> vector<16x32xf32>
    %151 = arith.mulf %148, %148 : vector<16x32xf32>
    %152 = arith.subf %150, %151 : vector<16x32xf32>
    %153 = arith.subf %147, %148 : vector<16x32xf32>
    %cst_89 = arith.constant 9.99999974E-6 : f32
    %154 = vector.broadcast %cst_89 : f32 to vector<16x32xf32>
    %155 = arith.addf %152, %154 : vector<16x32xf32>
    %156 = math.rsqrt %155 : vector<16x32xf32>
    %157 = arith.mulf %153, %156 : vector<16x32xf32>
    %158 = vector.broadcast %115 : vector<1x32xf32> to vector<16x32xf32>
    %159 = arith.mulf %157, %158 : vector<16x32xf32>
    %160 = vector.broadcast %116 : vector<1x32xf32> to vector<16x32xf32>
    %161 = arith.addf %159, %160 : vector<16x32xf32>
    %cst_90 = arith.constant dense<0.000000e+00> : vector<16x64xf32>
    %162 = tpu.matmul %161, %107, %cst_90 {dimension_numbers = #tpu.dot_dimension_numbers<[1], [0], [0], [1], [0, 0, 1, 1], [], []>} : vector<16x32xf32>, vector<32x64xf32>, vector<16x64xf32> -> vector<16x64xf32>
    %163 = vector.broadcast %113 : vector<1x64xf32> to vector<16x64xf32>
    %164 = arith.addf %162, %163 : vector<16x64xf32>
    %cst_91 = arith.constant 0.000000e+00 : f32
    %165 = vector.broadcast %cst_91 : f32 to vector<16x64xf32>
    %166 = arith.maximumf %164, %165 : vector<16x64xf32>
    %cst_92 = arith.constant dense<0.000000e+00> : vector<16x32xf32>
    %167 = tpu.matmul %166, %108, %cst_92 {dimension_numbers = #tpu.dot_dimension_numbers<[1], [0], [0], [1], [0, 0, 1, 1], [], []>} : vector<16x64xf32>, vector<64x32xf32>, vector<16x32xf32> -> vector<16x32xf32>
    %168 = vector.broadcast %114 : vector<1x32xf32> to vector<16x32xf32>
    %169 = arith.addf %167, %168 : vector<16x32xf32>
    %170 = arith.addf %161, %169 : vector<16x32xf32>
    %cst_93 = arith.constant dense<0.000000e+00> : vector<16x32xf32>
    %171 = tpu.matmul %170, %0, %cst_93 {dimension_numbers = #tpu.dot_dimension_numbers<[1], [0], [0], [1], [0, 0, 1, 1], [], []>} : vector<16x32xf32>, vector<32x32xf32>, vector<16x32xf32> -> vector<16x32xf32>
    %172 = arith.mulf %170, %170 : vector<16x32xf32>
    %cst_94 = arith.constant dense<0.000000e+00> : vector<16x32xf32>
    %173 = tpu.matmul %172, %0, %cst_94 {dimension_numbers = #tpu.dot_dimension_numbers<[1], [0], [0], [1], [0, 0, 1, 1], [], []>} : vector<16x32xf32>, vector<32x32xf32>, vector<16x32xf32> -> vector<16x32xf32>
    %174 = arith.mulf %171, %171 : vector<16x32xf32>
    %175 = arith.subf %173, %174 : vector<16x32xf32>
    %176 = arith.subf %170, %171 : vector<16x32xf32>
    %cst_95 = arith.constant 9.99999974E-6 : f32
    %177 = vector.broadcast %cst_95 : f32 to vector<16x32xf32>
    %178 = arith.addf %175, %177 : vector<16x32xf32>
    %179 = math.rsqrt %178 : vector<16x32xf32>
    %180 = arith.mulf %176, %179 : vector<16x32xf32>
    %181 = vector.broadcast %117 : vector<1x32xf32> to vector<16x32xf32>
    %182 = arith.mulf %180, %181 : vector<16x32xf32>
    %183 = vector.broadcast %118 : vector<1x32xf32> to vector<16x32xf32>
    %184 = arith.addf %182, %183 : vector<16x32xf32>
    %cst_96 = arith.constant dense<0.000000e+00> : vector<2x32xf32>
    %185 = tpu.matmul %10, %184, %cst_96 {dimension_numbers = #tpu.dot_dimension_numbers<[1], [0], [0], [1], [0, 0, 1, 1], [], []>} : vector<2x16xf32>, vector<16x32xf32>, vector<2x32xf32> -> vector<2x32xf32>
    %cst_97 = arith.constant dense<0.000000e+00> : vector<2x32xf32>
    %186 = tpu.matmul %185, %0, %cst_97 {dimension_numbers = #tpu.dot_dimension_numbers<[1], [0], [0], [1], [0, 0, 1, 1], [], []>} : vector<2x32xf32>, vector<32x32xf32>, vector<2x32xf32> -> vector<2x32xf32>
    %187 = arith.mulf %185, %185 : vector<2x32xf32>
    %cst_98 = arith.constant dense<0.000000e+00> : vector<2x32xf32>
    %188 = tpu.matmul %187, %0, %cst_98 {dimension_numbers = #tpu.dot_dimension_numbers<[1], [0], [0], [1], [0, 0, 1, 1], [], []>} : vector<2x32xf32>, vector<32x32xf32>, vector<2x32xf32> -> vector<2x32xf32>
    %189 = arith.mulf %186, %186 : vector<2x32xf32>
    %190 = arith.subf %188, %189 : vector<2x32xf32>
    %191 = arith.subf %185, %186 : vector<2x32xf32>
    %cst_99 = arith.constant 9.99999974E-6 : f32
    %192 = vector.broadcast %cst_99 : f32 to vector<2x32xf32>
    %193 = arith.addf %190, %192 : vector<2x32xf32>
    %194 = math.rsqrt %193 : vector<2x32xf32>
    %195 = arith.mulf %191, %194 : vector<2x32xf32>
    %196 = vector.broadcast %2 : vector<1x32xf32> to vector<2x32xf32>
    %197 = arith.mulf %195, %196 : vector<2x32xf32>
    %198 = vector.broadcast %3 : vector<1x32xf32> to vector<2x32xf32>
    %199 = arith.addf %197, %198 : vector<2x32xf32>
    %cst_100 = arith.constant dense<0.000000e+00> : vector<2x128xf32>
    %200 = tpu.matmul %199, %1, %cst_100 {dimension_numbers = #tpu.dot_dimension_numbers<[1], [0], [0], [1], [0, 0, 1, 1], [], []>} : vector<2x32xf32>, vector<32x128xf32>, vector<2x128xf32> -> vector<2x128xf32>
    %201 = vector.broadcast %4 : vector<1x128xf32> to vector<2x128xf32>
    %202 = arith.addf %200, %201 : vector<2x128xf32>
    %c0_101 = arith.constant 0 : index
    %c0_102 = arith.constant 0 : index
    %203 = vector.load %arg5[%c0_101, %c0_102] : memref<2x128xf32, #tpu.memory_space<vmem>>, vector<2x128xf32>
    tpu.vector_store %arg5[%c0_101, %c0_102], %202 {strides = array<i32>} : memref<2x128xf32, #tpu.memory_space<vmem>>, vector<2x128xf32>,
    return
  }
}

</mosaic_0001>

<llo_original>
// kernel: large_model_forward.1
$region0: #{large_model_forward.1}
  #allocation0 [shape = 'u32[]', space=smem, size = 0x4, offset = 0x4, fixed_abs, tag = 'smem constant byte address 0x4 - core index']
  #allocation1 [shape = 'u32[144,128]{1,0:T(1,128)}', space=vmem, size = 0x12000, scoped, tag = 'internal scratch']
  %s0 = inlined_call_operand.vmem [shape: s32[16,1], index: 0, kind: input, shape index: {}]
  %s1 = inlined_call_operand.vmem [shape: f32[120,32], index: 1, kind: input, shape index: {}]
  %s2 = inlined_call_operand.vmem [shape: f32[448,64], index: 2, kind: input, shape index: {}]
  %s3 = inlined_call_operand.vmem [shape: f32[32,64], index: 3, kind: input, shape index: {}]
  %s4 = inlined_call_operand.vmem [shape: f32[168,128], index: 4, kind: input, shape index: {}]
  %s5 = inlined_call_operand.hbm [shape: f32[2,128], index: 5, kind: output, shape index: {}]
  %s6 = sld [smem:[#allocation0]]
  $region30: #{large_model_forward.1} parent=0
    _
  %s8 = ssub.s32 1, %s6
  %s9 = scalar_select 0, %s8, %s6
  $region1: #{large_model_forward.1} parent=0
    #allocation2 [shape = 'u8[1024]{0}', space=vmem, size = 0x400, scoped, tag = 'output window, operand 0, single buffered']
    #allocation3 [shape = 's32[1]{0}', space=sflag, size = 0x4, scoped, tag = 'scoped memory for large_model_forward.1']
    %10 = vsyncpa [#allocation3], 0
    // Predicated region
    $region2: #{large_model_forward.1} parent=1 // pred_check
      _
    $region3: #{large_model_forward.1} parent=1 // pred_check_branch
      %12 = sbr.rel (0) target = $region5
    $region4: #{large_model_forward.1} parent=1 // pred_region
      _
    $region5: #{large_model_forward.1} parent=1 // pred_fallthru
      _
    // Predicated region
    $region6: #{large_model_forward.1} parent=1 // pred_check
      _
    $region7: #{large_model_forward.1} parent=1 // pred_check_branch
      %14 = sbr.rel (0) target = $region9
    $region8: #{large_model_forward.1} parent=1 // pred_region
      _
    $region9: #{large_model_forward.1} parent=1 // pred_fallthru
      _
    // Predicated region
    $region10: #{large_model_forward.1} parent=1 // pred_check
      _
    $region11: #{large_model_forward.1} parent=1 // pred_check_branch
      %16 = sbr.rel (0) target = $region13
    $region12: #{large_model_forward.1} parent=1 // pred_region
      _
    $region13: #{large_model_forward.1} parent=1 // pred_fallthru
      _
    // Predicated region
    $region14: #{large_model_forward.1} parent=1 // pred_check
      _
    $region15: #{large_model_forward.1} parent=1 // pred_check_branch
      %18 = sbr.rel (0) target = $region17
    $region16: #{large_model_forward.1} parent=1 // pred_region
      _
    $region17: #{large_model_forward.1} parent=1 // pred_fallthru
      _
    // Predicated region
    $region18: #{large_model_forward.1} parent=1 // pred_check
      _
    $region19: #{large_model_forward.1} parent=1 // pred_check_branch
      %20 = sbr.rel (0) target = $region21
    $region20: #{large_model_forward.1} parent=1 // pred_region
      _
    $region21: #{large_model_forward.1} parent=1 // pred_fallthru
      _
    %v21 = vld [vmem:[%s4] sm:$0xff]
    %v22 = vld [vmem:[%s4 + $0x8] sm:$0xff]
    %v23 = vld [vmem:[%s4 + $0x10] sm:$0xff]
    %v24 = vld [vmem:[%s4 + $0x18] sm:$0xff]
    %v25 = vld [vmem:[%s4 + $0x20] sm:$0xff]
    %v26 = vld [vmem:[%s4 + $0x28] sm:$0xff]
    %v27 = vld [vmem:[%s4 + $0x30] sm:$0xff]
    %v28 = vld [vmem:[%s4 + $0x38] sm:$0xff]
    %v29 = vld [vmem:[%s4 + $0x40] sm:$0x1]
    %v30 = vld [vmem:[%s4 + $0x41] sm:$0x1]
    %v31 = vld [vmem:[%s4 + $0x42] sm:$0x1]
    %v32 = vld [vmem:[%s4 + $0x48] sm:$0xf]
    %v33 = vld [vmem:[%s4 + $0x50] sm:$0xff]
    %v34 = vld [vmem:[%s4 + $0x58] sm:$0xff]
    %v35 = vld [vmem:[%s4 + $0x60] sm:$0xff]
    %v36 = vld [vmem:[%s4 + $0x68] sm:$0xff]
    %v37 = vld [vmem:[%s4 + $0x70] sm:$0xff]
    %v38 = vld [vmem:[%s4 + $0x78] sm:$0xff]
    %v39 = vld [vmem:[%s4 + $0x80] sm:$0xff]
    %v40 = vld [vmem:[%s4 + $0x88] sm:$0xff]
    %v41 = vld [vmem:[%s4 + $0x90] sm:$0xff]
    %v42 = vld [vmem:[%s4 + $0x98] sm:$0xff]
    %v43 = vld [vmem:[%s4 + $0xa0] sm:$0x3]
    %v44 = vld [vmem:[%s0] sm:$0xff]
    %v45 = vld [vmem:[%s0 + $0x8] sm:$0xff]
    %v46 = vlaneseq
    %v47 = vand.u32 %v46, 127
    %48 = vset.pattern.permute.xlu0 0
    %49 = vperm.xlu0 %48, %v44
    %v50 = vpop.permute.xlu0 %49
    %51 = vset.pattern.permute.xlu0 0
    %52 = vperm.xlu0 %51, %v45
    %v53 = vpop.permute.xlu0 %52
    %vm54 = vcmp.eq.s32.totalorder %v47, %v50
    %vm55 = vcmp.eq.s32.totalorder %v47, %v53
    %v56 = vsel %vm54, 1, 0
    %v57 = vsel %vm55, 1, 0
    %v58 = vcvt.s32.f32 %v56
    %v59 = vcvt.s32.f32 %v57
    %v60 = vld [vmem:[%s1] sm:$0xff]
    %v61 = vld [vmem:[%s1 + $0x8] sm:$0xff]
    %v62 = vld [vmem:[%s1 + $0x10] sm:$0xff]
    %v63 = vld [vmem:[%s1 + $0x18] sm:$0xff]
    %v64 = vld [vmem:[%s1 + $0x20] sm:$0xff]
    %v65 = vld [vmem:[%s1 + $0x28] sm:$0xff]
    %v66 = vld [vmem:[%s1 + $0x30] sm:$0xff]
    %v67 = vld [vmem:[%s1 + $0x38] sm:$0xff]
    %v68 = vld [vmem:[%s1 + $0x40] sm:$0xff]
    %v69 = vld [vmem:[%s1 + $0x48] sm:$0xff]
    %v70 = vld [vmem:[%s1 + $0x50] sm:$0xff]
    %v71 = vld [vmem:[%s1 + $0x58] sm:$0xff]
    %v72 = vld [vmem:[%s1 + $0x60] sm:$0xff]
    %v73 = vld [vmem:[%s1 + $0x68] sm:$0xff]
    %v74 = vld [vmem:[%s1 + $0x70] sm:$0xff]
    %vm75 = vcmask 850944
    %v77 = vsel %vm75, %v58, 0
    %v80 = vsel %vm75, %v59, 0
    %82 = vmatprep.subr.mxu0 0.0
    %83 = vmatpush1.msra.mxu0 %v60
    %84 = vmatprep.subr.mxu0 0.0
    %85 = vmatpush1.msra.mxu0 %v61
    %86 = vmatprep.subr.mxu0 0.0
    %87 = vmatpush1.msra.mxu0 %v62
    %88 = vmatprep.subr.mxu0 0.0
    %89 = vmatpush1.msra.mxu0 %v63
    %90 = vmatprep.subr.mxu0 0.0
    %91 = vmatpush1.msra.mxu0 %v64
    %92 = vmatprep.subr.mxu0 0.0
    %93 = vmatpush1.msra.mxu0 %v65
    %94 = vmatprep.subr.mxu0 0.0
    %95 = vmatpush1.msra.mxu0 %v66
    %96 = vmatprep.subr.mxu0 0.0
    %97 = vmatpush1.msra.mxu0 %v67
    %98 = vmatprep.subr.mxu0 0.0
    %99 = vmatpush1.msra.mxu0 %v68
    %100 = vmatprep.subr.mxu0 0.0
    %101 = vmatpush1.msra.mxu0 %v69
    %102 = vmatprep.subr.mxu0 0.0
    %103 = vmatpush1.msra.mxu0 %v70
    %104 = vmatprep.subr.mxu0 0.0
    %105 = vmatpush1.msra.mxu0 %v71
    %106 = vmatprep.subr.mxu0 0.0
    %107 = vmatpush1.msra.mxu0 %v72
    %108 = vmatprep.subr.mxu0 0.0
    %109 = vmatpush1.msra.mxu0 0.0
    %110 = vmatprep.subr.mxu0 0.0
    %111 = vmatpush1.msra.mxu0 0.0
    %112 = vmatprep.subr.mxu0 0.0
    %113 = vmatpush1.msra.mxu0 0.0
    %114 = vmatprep.subr.mxu0 0.0
    %115 = vmatpush1.msra.mxu0 0.0
    %116 = vmatprep.subr.mxu0 0.0
    %117 = vmatpush1.msra.mxu0 0.0
    %118 = vmatprep.subr.mxu0 0.0
    %119 = vmatpush1.msra.mxu0 0.0
    %120 = vmatprep.subr.mxu0 0.0
    %121 = vmatpush1.msra.mxu0 0.0
    %122 = vmatprep.subr.mxu0 0.0
    %123 = vmatpush1.msra.mxu0 0.0
    %124 = vmatprep.subr.mxu0 0.0
    %125 = vmatpush1.msra.mxu0 0.0
    %126 = vmatprep.subr.mxu0 0.0
    %127 = vmatpush1.msra.mxu0 0.0
    %128 = vmatprep.subr.mxu0 0.0
    %129 = vmatpush1.msra.mxu0 0.0
    %130 = vmatprep.subr.mxu0 0.0
    %131 = vmatpush1.msra.mxu0 0.0
    %132 = vmatprep.subr.mxu0 0.0
    %133 = vmatpush1.msra.mxu0 0.0
    %134 = vmatprep.subr.mxu0 0.0
    %135 = vmatpush1.msra.mxu0 0.0
    %136 = vmatprep.subr.mxu0 0.0
    %137 = vmatpush1.msra.mxu0 0.0
    %138 = vmatprep.subr.mxu0 0.0
    %139 = vmatpush1.msra.mxu0 0.0
    %140 = vmatprep.subr.mxu0 0.0
    %141 = vmatpush1.msra.mxu0 0.0
    %142 = vmatprep.subr.mxu0 0.0
    %143 = vmatpush1.msra.mxu0 0.0
    %144 = vmatprep.subr.mxu0 0.0
    %145 = vmatpush1.msra.mxu0 0.0
    %146 = vmatprep.mubr.f32.mxu0 0.0
    %147 = vmatmul.mubr.f32.gmra.mrb[0].mxu0 %v77
    %v148 = vpop.f32.mrb[0].mxu0
    %v149 = vadd.f32 %v73, %v148
    %v150 = vpop.f32.mrb[0].mxu0
    %151 = vmatprep.mubr.f32.mxu0 0.0
    %152 = vmatmul.mubr.f32.gmra.mrb[0].mxu0 %v80
    %v153 = vpop.f32.mrb[0].mxu0
    %v154 = vadd.f32 %v74, %v153
    %v155 = vpop.f32.mrb[0].mxu0
    %156 = vdwg.mxu0
    %v157 = vld [vmem:[%s2] sm:$0xff]
    %v158 = vld [vmem:[%s2 + $0x8] sm:$0xff]
    %v159 = vld [vmem:[%s2 + $0x10] sm:$0xff]
    %v160 = vld [vmem:[%s2 + $0x18] sm:$0xff]
    %v161 = vld [vmem:[%s2 + $0x20] sm:$0xff]
    %v162 = vld [vmem:[%s2 + $0x28] sm:$0xff]
    %v163 = vld [vmem:[%s2 + $0x30] sm:$0xff]
    %v164 = vld [vmem:[%s2 + $0x38] sm:$0xff]
    %v165 = vld [vmem:[%s2 + $0x40] sm:$0xff]
    %v166 = vld [vmem:[%s2 + $0x48] sm:$0xff]
    %v167 = vld [vmem:[%s2 + $0x50] sm:$0xff]
    %v168 = vld [vmem:[%s2 + $0x58] sm:$0xff]
    %v169 = vld [vmem:[%s2 + $0x60] sm:$0xff]
    %v170 = vld [vmem:[%s2 + $0x68] sm:$0xff]
    %v171 = vld [vmem:[%s2 + $0x70] sm:$0xff]
    %v172 = vld [vmem:[%s2 + $0x78] sm:$0xff]
    %v173 = vld [vmem:[%s2 + $0x80] sm:$0xff]
    %v174 = vld [vmem:[%s2 + $0x88] sm:$0xff]
    %v175 = vld [vmem:[%s2 + $0x90] sm:$0xff]
    %v176 = vld [vmem:[%s2 + $0x98] sm:$0xff]
    %v177 = vld [vmem:[%s2 + $0xa0] sm:$0xff]
    %v178 = vld [vmem:[%s2 + $0xa8] sm:$0xff]
    %v179 = vld [vmem:[%s2 + $0xb0] sm:$0xff]
    %v180 = vld [vmem:[%s2 + $0xb8] sm:$0xff]
    %v181 = vld [vmem:[%s2 + $0xc0] sm:$0xff]
    %v182 = vld [vmem:[%s2 + $0xc8] sm:$0xff]
    %v183 = vld [vmem:[%s2 + $0xd0] sm:$0xff]
    %v184 = vld [vmem:[%s2 + $0xd8] sm:$0xff]
    %v185 = vld [vmem:[%s3] sm:$0x1]
    %v186 = vld [vmem:[%s3 + $0x1] sm:$0x1]
    %v187 = vld [vmem:[%s3 + $0x2] sm:$0x1]
    %v188 = vld [vmem:[%s3 + $0x3] sm:$0x1]
    %v189 = vld [vmem:[%s3 + $0x4] sm:$0x1]
    %v190 = vld [vmem:[%s3 + $0x5] sm:$0x1]
    %v191 = vld [vmem:[%s3 + $0x6] sm:$0x1]
    %v192 = vld [vmem:[%s3 + $0x7] sm:$0x1]
    %v193 = vld [vmem:[%s3 + $0x8] sm:$0x1]
    %v194 = vld [vmem:[%s3 + $0x9] sm:$0x1]
    %v195 = vlaneseq
    %v196 = vshrl.u32 %v195, 7
    %v197 = vsub.s32 0, %v196
    %v198 = vrot.slane %v185, %v197
    %vm199 = vcmask 261120
    %v201 = vsel %vm199, %v149, 0
    %v204 = vsel %vm199, %v154, 0
    %206 = vmatprep.subr.mxu0 0.0
    %207 = vmatpush1.msra.mxu0 %v157
    %208 = vmatprep.subr.mxu0 0.0
    %209 = vmatpush1.msra.mxu0 %v158
    %210 = vmatprep.subr.mxu0 0.0
    %211 = vmatpush1.msra.mxu0 %v159
    %212 = vmatprep.subr.mxu0 0.0
    %213 = vmatpush1.msra.mxu0 %v160
    %214 = vmatprep.subr.mxu0 0.0
    %215 = vmatpush1.msra.mxu0 0.0
    %216 = vmatprep.subr.mxu0 0.0
    %217 = vmatpush1.msra.mxu0 0.0
    %218 = vmatprep.subr.mxu0 0.0
    %219 = vmatpush1.msra.mxu0 0.0
    %220 = vmatprep.subr.mxu0 0.0
    %221 = vmatpush1.msra.mxu0 0.0
    %222 = vmatprep.subr.mxu0 0.0
    %223 = vmatpush1.msra.mxu0 0.0
    %224 = vmatprep.subr.mxu0 0.0
    %225 = vmatpush1.msra.mxu0 0.0
    %226 = vmatprep.subr.mxu0 0.0
    %227 = vmatpush1.msra.mxu0 0.0
    %228 = vmatprep.subr.mxu0 0.0
    %229 = vmatpush1.msra.mxu0 0.0
    %230 = vmatprep.subr.mxu0 0.0
    %231 = vmatpush1.msra.mxu0 0.0
    %232 = vmatprep.subr.mxu0 0.0
    %233 = vmatpush1.msra.mxu0 0.0
    %234 = vmatprep.subr.mxu0 0.0
    %235 = vmatpush1.msra.mxu0 0.0
    %236 = vmatprep.subr.mxu0 0.0
    %237 = vmatpush1.msra.mxu0 0.0
    %238 = vmatprep.subr.mxu0 0.0
    %239 = vmatpush1.msra.mxu0 0.0
    %240 = vmatprep.subr.mxu0 0.0
    %241 = vmatpush1.msra.mxu0 0.0
    %242 = vmatprep.subr.mxu0 0.0
    %243 = vmatpush1.msra.mxu0 0.0
    %244 = vmatprep.subr.mxu0 0.0
    %245 = vmatpush1.msra.mxu0 0.0
    %246 = vmatprep.subr.mxu0 0.0
    %247 = vmatpush1.msra.mxu0 0.0
    %248 = vmatprep.subr.mxu0 0.0
    %249 = vmatpush1.msra.mxu0 0.0
    %250 = vmatprep.subr.mxu0 0.0
    %251 = vmatpush1.msra.mxu0 0.0
    %252 = vmatprep.subr.mxu0 0.0
    %253 = vmatpush1.msra.mxu0 0.0
    %254 = vmatprep.subr.mxu0 0.0
    %255 = vmatpush1.msra.mxu0 0.0
    %256 = vmatprep.subr.mxu0 0.0
    %257 = vmatpush1.msra.mxu0 0.0
    %258 = vmatprep.subr.mxu0 0.0
    %259 = vmatpush1.msra.mxu0 0.0
    %260 = vmatprep.subr.mxu0 0.0
    %261 = vmatpush1.msra.mxu0 0.0
    %262 = vmatprep.subr.mxu0 0.0
    %263 = vmatpush1.msra.mxu0 0.0
    %264 = vmatprep.subr.mxu0 0.0
    %265 = vmatpush1.msra.mxu0 0.0
    %266 = vmatprep.subr.mxu0 0.0
    %267 = vmatpush1.msra.mxu0 0.0
    %268 = vmatprep.subr.mxu0 0.0
    %269 = vmatpush1.msra.mxu0 0.0
    %270 = vmatprep.mubr.f32.mxu0 0.0
    %271 = vmatmul.mubr.f32.gmra.mrb[0].mxu0 %v201
    %v272 = vpop.f32.mrb[0].mxu0
    %v273 = vadd.f32 %v198, %v272
    %v274 = vpop.f32.mrb[0].mxu0
    %275 = vmatprep.mubr.f32.mxu0 0.0
    %276 = vmatmul.mubr.f32.gmra.mrb[0].mxu0 %v204
    %v277 = vpop.f32.mrb[0].mxu0
    %v278 = vadd.f32 %v198, %v277
    %v279 = vpop.f32.mrb[0].mxu0
    %280 = vdwg.mxu0
    %v281 = vlaneseq
    %v282 = vshrl.u32 %v281, 7
    %v283 = vsub.s32 0, %v282
    %v284 = vrot.slane %v186, %v283
    %285 = vmatprep.subr.mxu0 0.0
    %286 = vmatpush1.msra.mxu0 %v161
    %287 = vmatprep.subr.mxu0 0.0
    %288 = vmatpush1.msra.mxu0 %v162
    %289 = vmatprep.subr.mxu0 0.0
    %290 = vmatpush1.msra.mxu0 %v163
    %291 = vmatprep.subr.mxu0 0.0
    %292 = vmatpush1.msra.mxu0 %v164
    %293 = vmatprep.subr.mxu0 0.0
    %294 = vmatpush1.msra.mxu0 0.0
    %295 = vmatprep.subr.mxu0 0.0
    %296 = vmatpush1.msra.mxu0 0.0
    %297 = vmatprep.subr.mxu0 0.0
    %298 = vmatpush1.msra.mxu0 0.0
    %299 = vmatprep.subr.mxu0 0.0
    %300 = vmatpush1.msra.mxu0 0.0
    %301 = vmatprep.subr.mxu0 0.0
    %302 = vmatpush1.msra.mxu0 0.0
    %303 = vmatprep.subr.mxu0 0.0
    %304 = vmatpush1.msra.mxu0 0.0
    %305 = vmatprep.subr.mxu0 0.0
    %306 = vmatpush1.msra.mxu0 0.0
    %307 = vmatprep.subr.mxu0 0.0
    %308 = vmatpush1.msra.mxu0 0.0
    %309 = vmatprep.subr.mxu0 0.0
    %310 = vmatpush1.msra.mxu0 0.0
    %311 = vmatprep.subr.mxu0 0.0
    %312 = vmatpush1.msra.mxu0 0.0
    %313 = vmatprep.subr.mxu0 0.0
    %314 = vmatpush1.msra.mxu0 0.0
    %315 = vmatprep.subr.mxu0 0.0
    %316 = vmatpush1.msra.mxu0 0.0
    %317 = vmatprep.subr.mxu0 0.0
    %318 = vmatpush1.msra.mxu0 0.0
    %319 = vmatprep.subr.mxu0 0.0
    %320 = vmatpush1.msra.mxu0 0.0
    %321 = vmatprep.subr.mxu0 0.0
    %322 = vmatpush1.msra.mxu0 0.0
    %323 = vmatprep.subr.mxu0 0.0
    %324 = vmatpush1.msra.mxu0 0.0
    %325 = vmatprep.subr.mxu0 0.0
    %326 = vmatpush1.msra.mxu0 0.0
    %327 = vmatprep.subr.mxu0 0.0
    %328 = vmatpush1.msra.mxu0 0.0
    %329 = vmatprep.subr.mxu0 0.0
    %330 = vmatpush1.msra.mxu0 0.0
    %331 = vmatprep.subr.mxu0 0.0
    %332 = vmatpush1.msra.mxu0 0.0
    %333 = vmatprep.subr.mxu0 0.0
    %334 = vmatpush1.msra.mxu0 0.0
    %335 = vmatprep.subr.mxu0 0.0
    %336 = vmatpush1.msra.mxu0 0.0
    %337 = vmatprep.subr.mxu0 0.0
    %338 = vmatpush1.msra.mxu0 0.0
    %339 = vmatprep.subr.mxu0 0.0
    %340 = vmatpush1.msra.mxu0 0.0
    %341 = vmatprep.subr.mxu0 0.0
    %342 = vmatpush1.msra.mxu0 0.0
    %343 = vmatprep.subr.mxu0 0.0
    %344 = vmatpush1.msra.mxu0 0.0
    %345 = vmatprep.subr.mxu0 0.0
    %346 = vmatpush1.msra.mxu0 0.0
    %347 = vmatprep.subr.mxu0 0.0
    %348 = vmatpush1.msra.mxu0 0.0
    %349 = vmatprep.mubr.f32.mxu0 0.0
    %350 = vmatmul.mubr.f32.gmra.mrb[0].mxu0 %v201
    %v351 = vpop.f32.mrb[0].mxu0
    %v352 = vadd.f32 %v284, %v351
    %v353 = vpop.f32.mrb[0].mxu0
    %354 = vmatprep.mubr.f32.mxu0 0.0
    %355 = vmatmul.mubr.f32.gmra.mrb[0].mxu0 %v204
    %v356 = vpop.f32.mrb[0].mxu0
    %v357 = vadd.f32 %v284, %v356
    %v358 = vpop.f32.mrb[0].mxu0
    %359 = vdwg.mxu0
    %v360 = vlaneseq
    %v361 = vshrl.u32 %v360, 7
    %v362 = vsub.s32 0, %v361
    %v363 = vrot.slane %v187, %v362
    %364 = vmatprep.subr.mxu0 0.0
    %365 = vmatpush1.msra.mxu0 %v165
    %366 = vmatprep.subr.mxu0 0.0
    %367 = vmatpush1.msra.mxu0 %v166
    %368 = vmatprep.subr.mxu0 0.0
    %369 = vmatpush1.msra.mxu0 %v167
    %370 = vmatprep.subr.mxu0 0.0
    %371 = vmatpush1.msra.mxu0 %v168
    %372 = vmatprep.subr.mxu0 0.0
    %373 = vmatpush1.msra.mxu0 0.0
    %374 = vmatprep.subr.mxu0 0.0
    %375 = vmatpush1.msra.mxu0 0.0
    %376 = vmatprep.subr.mxu0 0.0
    %377 = vmatpush1.msra.mxu0 0.0
    %378 = vmatprep.subr.mxu0 0.0
    %379 = vmatpush1.msra.mxu0 0.0
    %380 = vmatprep.subr.mxu0 0.0
    %381 = vmatpush1.msra.mxu0 0.0
    %382 = vmatprep.subr.mxu0 0.0
    %383 = vmatpush1.msra.mxu0 0.0
    %384 = vmatprep.subr.mxu0 0.0
    %385 = vmatpush1.msra.mxu0 0.0
    %386 = vmatprep.subr.mxu0 0.0
    %387 = vmatpush1.msra.mxu0 0.0
    %388 = vmatprep.subr.mxu0 0.0
    %389 = vmatpush1.msra.mxu0 0.0
    %390 = vmatprep.subr.mxu0 0.0
    %391 = vmatpush1.msra.mxu0 0.0
    %392 = vmatprep.subr.mxu0 0.0
    %393 = vmatpush1.msra.mxu0 0.0
    %394 = vmatprep.subr.mxu0 0.0
    %395 = vmatpush1.msra.mxu0 0.0
    %396 = vmatprep.subr.mxu0 0.0
    %397 = vmatpush1.msra.mxu0 0.0
    %398 = vmatprep.subr.mxu0 0.0
    %399 = vmatpush1.msra.mxu0 0.0
    %400 = vmatprep.subr.mxu0 0.0
    %401 = vmatpush1.msra.mxu0 0.0
    %402 = vmatprep.subr.mxu0 0.0
    %403 = vmatpush1.msra.mxu0 0.0
    %404 = vmatprep.subr.mxu0 0.0
    %405 = vmatpush1.msra.mxu0 0.0
    %406 = vmatprep.subr.mxu0 0.0
    %407 = vmatpush1.msra.mxu0 0.0
    %408 = vmatprep.subr.mxu0 0.0
    %409 = vmatpush1.msra.mxu0 0.0
    %410 = vmatprep.subr.mxu0 0.0
    %411 = vmatpush1.msra.mxu0 0.0
    %412 = vmatprep.subr.mxu0 0.0
    %413 = vmatpush1.msra.mxu0 0.0
    %414 = vmatprep.subr.mxu0 0.0
    %415 = vmatpush1.msra.mxu0 0.0
    %416 = vmatprep.subr.mxu0 0.0
    %417 = vmatpush1.msra.mxu0 0.0
    %418 = vmatprep.subr.mxu0 0.0
    %419 = vmatpush1.msra.mxu0 0.0
    %420 = vmatprep.subr.mxu0 0.0
    %421 = vmatpush1.msra.mxu0 0.0
    %422 = vmatprep.subr.mxu0 0.0
    %423 = vmatpush1.msra.mxu0 0.0
    %424 = vmatprep.subr.mxu0 0.0
    %425 = vmatpush1.msra.mxu0 0.0
    %426 = vmatprep.subr.mxu0 0.0
    %427 = vmatpush1.msra.mxu0 0.0
    %428 = vmatprep.mubr.f32.mxu0 0.0
    %429 = vmatmul.mubr.f32.gmra.mrb[0].mxu0 %v201
    %v430 = vpop.f32.mrb[0].mxu0
    %v431 = vadd.f32 %v363, %v430
    %v432 = vpop.f32.mrb[0].mxu0
    %433 = vmatprep.mubr.f32.mxu0 0.0
    %434 = vmatmul.mubr.f32.gmra.mrb[0].mxu0 %v204
    %v435 = vpop.f32.mrb[0].mxu0
    %v436 = vadd.f32 %v363, %v435
    %v437 = vpop.f32.mrb[0].mxu0
    %438 = vdwg.mxu0
    %vm439 = vcmask 130048
    %v441 = vsel %vm439, %v41, 0
    %v444 = vsel %vm439, %v42, 0
    %446 = vmatprep.subr.mxu0 0.0
    %447 = vmatpush1.msra.mxu0 %v352
    %448 = vmatprep.subr.mxu0 0.0
    %449 = vmatpush1.msra.mxu0 %v357
    %450 = vmatprep.subr.mxu0 0.0
    %451 = vmatpush1.msra.mxu0 0.0
    %452 = vmatprep.subr.mxu0 0.0
    %453 = vmatpush1.msra.mxu0 0.0
    %454 = vmatprep.subr.mxu0 0.0
    %455 = vmatpush1.msra.mxu0 0.0
    %456 = vmatprep.subr.mxu0 0.0
    %457 = vmatpush1.msra.mxu0 0.0
    %458 = vmatprep.subr.mxu0 0.0
    %459 = vmatpush1.msra.mxu0 0.0
    %460 = vmatprep.subr.mxu0 0.0
    %461 = vmatpush1.msra.mxu0 0.0
    %462 = vmatprep.subr.mxu0 0.0
    %463 = vmatpush1.msra.mxu0 0.0
    %464 = vmatprep.subr.mxu0 0.0
    %465 = vmatpush1.msra.mxu0 0.0
    %466 = vmatprep.subr.mxu0 0.0
    %467 = vmatpush1.msra.mxu0 0.0
    %468 = vmatprep.subr.mxu0 0.0
    %469 = vmatpush1.msra.mxu0 0.0
    %470 = vmatprep.subr.mxu0 0.0
    %471 = vmatpush1.msra.mxu0 0.0
    %472 = vmatprep.subr.mxu0 0.0
    %473 = vmatpush1.msra.mxu0 0.0
    %474 = vmatprep.subr.mxu0 0.0
    %475 = vmatpush1.msra.mxu0 0.0
    %476 = vmatprep.subr.mxu0 0.0
    %477 = vmatpush1.msra.mxu0 0.0
    %478 = vmatprep.subr.mxu0 0.0
    %479 = vmatpush1.msra.mxu0 0.0
    %480 = vmatprep.subr.mxu0 0.0
    %481 = vmatpush1.msra.mxu0 0.0
    %482 = vmatprep.subr.mxu0 0.0
    %483 = vmatpush1.msra.mxu0 0.0
    %484 = vmatprep.subr.mxu0 0.0
    %485 = vmatpush1.msra.mxu0 0.0
    %486 = vmatprep.subr.mxu0 0.0
    %487 = vmatpush1.msra.mxu0 0.0
    %488 = vmatprep.subr.mxu0 0.0
    %489 = vmatpush1.msra.mxu0 0.0
    %490 = vmatprep.subr.mxu0 0.0
    %491 = vmatpush1.msra.mxu0 0.0
    %492 = vmatprep.subr.mxu0 0.0
    %493 = vmatpush1.msra.mxu0 0.0
    %494 = vmatprep.subr.mxu0 0.0
    %495 = vmatpush1.msra.mxu0 0.0
    %496 = vmatprep.subr.mxu0 0.0
    %497 = vmatpush1.msra.mxu0 0.0
    %498 = vmatprep.subr.mxu0 0.0
    %499 = vmatpush1.msra.mxu0 0.0
    %500 = vmatprep.subr.mxu0 0.0
    %501 = vmatpush1.msra.mxu0 0.0
    %502 = vmatprep.subr.mxu0 0.0
    %503 = vmatpush1.msra.mxu0 0.0
    %504 = vmatprep.subr.mxu0 0.0
    %505 = vmatpush1.msra.mxu0 0.0
    %506 = vmatprep.subr.mxu0 0.0
    %507 = vmatpush1.msra.mxu0 0.0
    %508 = vmatprep.subr.mxu0 0.0
    %509 = vmatpush1.msra.mxu0 0.0
    %510 = vmatprep.mubr.f32.mxu0 0.0
    %511 = vmatmul.mubr.f32.gmra.mrb[0].mxu0 %v441
    %v512 = vpop.f32.mrb[0].mxu0
    %v513 = vadd.f32 0.0, %v512
    %v514 = vpop.f32.mrb[0].mxu0
    %515 = vmatprep.mubr.f32.mxu0 0.0
    %516 = vmatmul.mubr.f32.gmra.mrb[0].mxu0 %v444
    %v517 = vpop.f32.mrb[0].mxu0
    %v518 = vadd.f32 0.0, %v517
    %v519 = vpop.f32.mrb[0].mxu0
    %520 = vdwg.mxu0
    %v521 = vmul.f32 %v273, %v513
    %v522 = vmul.f32 %v278, %v518
    %v524 = vsel %vm199, %v521, 0
    %v527 = vsel %vm199, %v522, 0
    %529 = vmatprep.subr.mxu0 0.0
    %530 = vmatpush1.msra.mxu0 %v33
    %531 = vmatprep.subr.mxu0 0.0
    %532 = vmatpush1.msra.mxu0 %v34
    %533 = vmatprep.subr.mxu0 0.0
    %534 = vmatpush1.msra.mxu0 %v35
    %535 = vmatprep.subr.mxu0 0.0
    %536 = vmatpush1.msra.mxu0 %v36
    %537 = vmatprep.subr.mxu0 0.0
    %538 = vmatpush1.msra.mxu0 0.0
    %539 = vmatprep.subr.mxu0 0.0
    %540 = vmatpush1.msra.mxu0 0.0
    %541 = vmatprep.subr.mxu0 0.0
    %542 = vmatpush1.msra.mxu0 0.0
    %543 = vmatprep.subr.mxu0 0.0
    %544 = vmatpush1.msra.mxu0 0.0
    %545 = vmatprep.subr.mxu0 0.0
    %546 = vmatpush1.msra.mxu0 0.0
    %547 = vmatprep.subr.mxu0 0.0
    %548 = vmatpush1.msra.mxu0 0.0
    %549 = vmatprep.subr.mxu0 0.0
    %550 = vmatpush1.msra.mxu0 0.0
    %551 = vmatprep.subr.mxu0 0.0
    %552 = vmatpush1.msra.mxu0 0.0
    %553 = vmatprep.subr.mxu0 0.0
    %554 = vmatpush1.msra.mxu0 0.0
    %555 = vmatprep.subr.mxu0 0.0
    %556 = vmatpush1.msra.mxu0 0.0
    %557 = vmatprep.subr.mxu0 0.0
    %558 = vmatpush1.msra.mxu0 0.0
    %559 = vmatprep.subr.mxu0 0.0
    %560 = vmatpush1.msra.mxu0 0.0
    %561 = vmatprep.subr.mxu0 0.0
    %562 = vmatpush1.msra.mxu0 0.0
    %563 = vmatprep.subr.mxu0 0.0
    %564 = vmatpush1.msra.mxu0 0.0
    %565 = vmatprep.subr.mxu0 0.0
    %566 = vmatpush1.msra.mxu0 0.0
    %567 = vmatprep.subr.mxu0 0.0
    %568 = vmatpush1.msra.mxu0 0.0
    %569 = vmatprep.subr.mxu0 0.0
    %570 = vmatpush1.msra.mxu0 0.0
    %571 = vmatprep.subr.mxu0 0.0
    %572 = vmatpush1.msra.mxu0 0.0
    %573 = vmatprep.subr.mxu0 0.0
    %574 = vmatpush1.msra.mxu0 0.0
    %575 = vmatprep.subr.mxu0 0.0
    %576 = vmatpush1.msra.mxu0 0.0
    %577 = vmatprep.subr.mxu0 0.0
    %578 = vmatpush1.msra.mxu0 0.0
    %579 = vmatprep.subr.mxu0 0.0
    %580 = vmatpush1.msra.mxu0 0.0
    %581 = vmatprep.subr.mxu0 0.0
    %582 = vmatpush1.msra.mxu0 0.0
    %583 = vmatprep.subr.mxu0 0.0
    %584 = vmatpush1.msra.mxu0 0.0
    %585 = vmatprep.subr.mxu0 0.0
    %586 = vmatpush1.msra.mxu0 0.0
    %587 = vmatprep.subr.mxu0 0.0
    %588 = vmatpush1.msra.mxu0 0.0
    %589 = vmatprep.subr.mxu0 0.0
    %590 = vmatpush1.msra.mxu0 0.0
    %591 = vmatprep.subr.mxu0 0.0
    %592 = vmatpush1.msra.mxu0 0.0
    %593 = vmatprep.mubr.f32.mxu0 0.0
    %594 = vmatmul.mubr.f32.gmra.mrb[0].mxu0 %v524
    %v595 = vpop.f32.mrb[0].mxu0
    %v596 = vadd.f32 0.0, %v595
    %v597 = vpop.f32.mrb[0].mxu0
    %598 = vmatprep.mubr.f32.mxu0 0.0
    %599 = vmatmul.mubr.f32.gmra.mrb[0].mxu0 %v527
    %v600 = vpop.f32.mrb[0].mxu0
    %v601 = vadd.f32 0.0, %v600
    %v602 = vpop.f32.mrb[0].mxu0
    %603 = vdwg.mxu0
    %v604 = vmul.f32 %v596, 1.442695
    %v605 = vpow.pop %v604
    %v606 = vmul.f32 %v601, 1.442695
    %v607 = vpow.pop %v606
    %v608 = vadd.f32 %v605, 1.0
    %v609 = vadd.f32 %v607, 1.0
    %v610 = vrcp.pop %v608
    %v611 = vrcp.pop %v609
    %v612 = vsub.f32 1.0, %v610
    %v613 = vsub.f32 1.0, %v611
    %v615 = vsel %vm439, %v37, 0
    %v618 = vsel %vm439, %v38, 0
    %620 = vmatprep.subr.mxu0 0.0
    %621 = vmatpush1.msra.mxu0 %v431
    %622 = vmatprep.subr.mxu0 0.0
    %623 = vmatpush1.msra.mxu0 %v436
    %624 = vmatprep.subr.mxu0 0.0
    %625 = vmatpush1.msra.mxu0 0.0
    %626 = vmatprep.subr.mxu0 0.0
    %627 = vmatpush1.msra.mxu0 0.0
    %628 = vmatprep.subr.mxu0 0.0
    %629 = vmatpush1.msra.mxu0 0.0
    %630 = vmatprep.subr.mxu0 0.0
    %631 = vmatpush1.msra.mxu0 0.0
    %632 = vmatprep.subr.mxu0 0.0
    %633 = vmatpush1.msra.mxu0 0.0
    %634 = vmatprep.subr.mxu0 0.0
    %635 = vmatpush1.msra.mxu0 0.0
    %636 = vmatprep.subr.mxu0 0.0
    %637 = vmatpush1.msra.mxu0 0.0
    %638 = vmatprep.subr.mxu0 0.0
    %639 = vmatpush1.msra.mxu0 0.0
    %640 = vmatprep.subr.mxu0 0.0
    %641 = vmatpush1.msra.mxu0 0.0
    %642 = vmatprep.subr.mxu0 0.0
    %643 = vmatpush1.msra.mxu0 0.0
    %644 = vmatprep.subr.mxu0 0.0
    %645 = vmatpush1.msra.mxu0 0.0
    %646 = vmatprep.subr.mxu0 0.0
    %647 = vmatpush1.msra.mxu0 0.0
    %648 = vmatprep.subr.mxu0 0.0
    %649 = vmatpush1.msra.mxu0 0.0
    %650 = vmatprep.subr.mxu0 0.0
    %651 = vmatpush1.msra.mxu0 0.0
    %652 = vmatprep.subr.mxu0 0.0
    %653 = vmatpush1.msra.mxu0 0.0
    %654 = vmatprep.subr.mxu0 0.0
    %655 = vmatpush1.msra.mxu0 0.0
    %656 = vmatprep.subr.mxu0 0.0
    %657 = vmatpush1.msra.mxu0 0.0
    %658 = vmatprep.subr.mxu0 0.0
    %659 = vmatpush1.msra.mxu0 0.0
    %660 = vmatprep.subr.mxu0 0.0
    %661 = vmatpush1.msra.mxu0 0.0
    %662 = vmatprep.subr.mxu0 0.0
    %663 = vmatpush1.msra.mxu0 0.0
    %664 = vmatprep.subr.mxu0 0.0
    %665 = vmatpush1.msra.mxu0 0.0
    %666 = vmatprep.subr.mxu0 0.0
    %667 = vmatpush1.msra.mxu0 0.0
    %668 = vmatprep.subr.mxu0 0.0
    %669 = vmatpush1.msra.mxu0 0.0
    %670 = vmatprep.subr.mxu0 0.0
    %671 = vmatpush1.msra.mxu0 0.0
    %672 = vmatprep.subr.mxu0 0.0
    %673 = vmatpush1.msra.mxu0 0.0
    %674 = vmatprep.subr.mxu0 0.0
    %675 = vmatpush1.msra.mxu0 0.0
    %676 = vmatprep.subr.mxu0 0.0
    %677 = vmatpush1.msra.mxu0 0.0
    %678 = vmatprep.subr.mxu0 0.0
    %679 = vmatpush1.msra.mxu0 0.0
    %680 = vmatprep.subr.mxu0 0.0
    %681 = vmatpush1.msra.mxu0 0.0
    %682 = vmatprep.subr.mxu0 0.0
    %683 = vmatpush1.msra.mxu0 0.0
    %684 = vmatprep.mubr.f32.mxu0 0.0
    %685 = vmatmul.mubr.f32.gmra.mrb[0].mxu0 %v615
    %v686 = vpop.f32.mrb[0].mxu0
    %v687 = vadd.f32 0.0, %v686
    %v688 = vpop.f32.mrb[0].mxu0
    %689 = vmatprep.mubr.f32.mxu0 0.0
    %690 = vmatmul.mubr.f32.gmra.mrb[0].mxu0 %v618
    %v691 = vpop.f32.mrb[0].mxu0
    %v692 = vadd.f32 0.0, %v691
    %v693 = vpop.f32.mrb[0].mxu0
    %694 = vdwg.mxu0
    %v696 = vsel %vm439, %v39, 0
    %v699 = vsel %vm439, %v40, 0
    %701 = vmatprep.subr.mxu0 0.0
    %702 = vmatpush1.msra.mxu0 %v431
    %703 = vmatprep.subr.mxu0 0.0
    %704 = vmatpush1.msra.mxu0 %v436
    %705 = vmatprep.subr.mxu0 0.0
    %706 = vmatpush1.msra.mxu0 0.0
    %707 = vmatprep.subr.mxu0 0.0
    %708 = vmatpush1.msra.mxu0 0.0
    %709 = vmatprep.subr.mxu0 0.0
    %710 = vmatpush1.msra.mxu0 0.0
    %711 = vmatprep.subr.mxu0 0.0
    %712 = vmatpush1.msra.mxu0 0.0
    %713 = vmatprep.subr.mxu0 0.0
    %714 = vmatpush1.msra.mxu0 0.0
    %715 = vmatprep.subr.mxu0 0.0
    %716 = vmatpush1.msra.mxu0 0.0
    %717 = vmatprep.subr.mxu0 0.0
    %718 = vmatpush1.msra.mxu0 0.0
    %719 = vmatprep.subr.mxu0 0.0
    %720 = vmatpush1.msra.mxu0 0.0
    %721 = vmatprep.subr.mxu0 0.0
    %722 = vmatpush1.msra.mxu0 0.0
    %723 = vmatprep.subr.mxu0 0.0
    %724 = vmatpush1.msra.mxu0 0.0
    %725 = vmatprep.subr.mxu0 0.0
    %726 = vmatpush1.msra.mxu0 0.0
    %727 = vmatprep.subr.mxu0 0.0
    %728 = vmatpush1.msra.mxu0 0.0
    %729 = vmatprep.subr.mxu0 0.0
    %730 = vmatpush1.msra.mxu0 0.0
    %731 = vmatprep.subr.mxu0 0.0
    %732 = vmatpush1.msra.mxu0 0.0
    %733 = vmatprep.subr.mxu0 0.0
    %734 = vmatpush1.msra.mxu0 0.0
    %735 = vmatprep.subr.mxu0 0.0
    %736 = vmatpush1.msra.mxu0 0.0
    %737 = vmatprep.subr.mxu0 0.0
    %738 = vmatpush1.msra.mxu0 0.0
    %739 = vmatprep.subr.mxu0 0.0
    %740 = vmatpush1.msra.mxu0 0.0
    %741 = vmatprep.subr.mxu0 0.0
    %742 = vmatpush1.msra.mxu0 0.0
    %743 = vmatprep.subr.mxu0 0.0
    %744 = vmatpush1.msra.mxu0 0.0
    %745 = vmatprep.subr.mxu0 0.0
    %746 = vmatpush1.msra.mxu0 0.0
    %747 = vmatprep.subr.mxu0 0.0
    %748 = vmatpush1.msra.mxu0 0.0
    %749 = vmatprep.subr.mxu0 0.0
    %750 = vmatpush1.msra.mxu0 0.0
    %751 = vmatprep.subr.mxu0 0.0
    %752 = vmatpush1.msra.mxu0 0.0
    %753 = vmatprep.subr.mxu0 0.0
    %754 = vmatpush1.msra.mxu0 0.0
    %755 = vmatprep.subr.mxu0 0.0
    %756 = vmatpush1.msra.mxu0 0.0
    %757 = vmatprep.subr.mxu0 0.0
    %758 = vmatpush1.msra.mxu0 0.0
    %759 = vmatprep.subr.mxu0 0.0
    %760 = vmatpush1.msra.mxu0 0.0
    %761 = vmatprep.subr.mxu0 0.0
    %762 = vmatpush1.msra.mxu0 0.0
    %763 = vmatprep.subr.mxu0 0.0
    %764 = vmatpush1.msra.mxu0 0.0
    %765 = vmatprep.mubr.f32.mxu0 0.0
    %766 = vmatmul.mubr.f32.gmra.mrb[0].mxu0 %v696
    %v767 = vpop.f32.mrb[0].mxu0
    %v768 = vadd.f32 0.0, %v767
    %v769 = vpop.f32.mrb[0].mxu0
    %770 = vmatprep.mubr.f32.mxu0 0.0
    %771 = vmatmul.mubr.f32.gmra.mrb[0].mxu0 %v699
    %v772 = vpop.f32.mrb[0].mxu0
    %v773 = vadd.f32 0.0, %v772
    %v774 = vpop.f32.mrb[0].mxu0
    %775 = vdwg.mxu0
    %vm776 = vcmask 31744
    %v778 = vsel %vm776, %v612, 0
    %v781 = vsel %vm776, %v613, 0
    %vm783 = vcmask 1043456
    %v785 = vsel %vm783, %v32, 0
    %787 = vmatprep.subr.mxu0 0.0
    %788 = vmatpush1.msra.mxu0 %v785
    %789 = vmatprep.subr.mxu0 0.0
    %790 = vmatpush1.msra.mxu0 0.0
    %791 = vmatprep.subr.mxu0 0.0
    %792 = vmatpush1.msra.mxu0 0.0
    %793 = vmatprep.subr.mxu0 0.0
    %794 = vmatpush1.msra.mxu0 0.0
    %795 = vmatprep.subr.mxu0 0.0
    %796 = vmatpush1.msra.mxu0 0.0
    %797 = vmatprep.subr.mxu0 0.0
    %798 = vmatpush1.msra.mxu0 0.0
    %799 = vmatprep.subr.mxu0 0.0
    %800 = vmatpush1.msra.mxu0 0.0
    %801 = vmatprep.subr.mxu0 0.0
    %802 = vmatpush1.msra.mxu0 0.0
    %803 = vmatprep.subr.mxu0 0.0
    %804 = vmatpush1.msra.mxu0 0.0
    %805 = vmatprep.subr.mxu0 0.0
    %806 = vmatpush1.msra.mxu0 0.0
    %807 = vmatprep.subr.mxu0 0.0
    %808 = vmatpush1.msra.mxu0 0.0
    %809 = vmatprep.subr.mxu0 0.0
    %810 = vmatpush1.msra.mxu0 0.0
    %811 = vmatprep.subr.mxu0 0.0
    %812 = vmatpush1.msra.mxu0 0.0
    %813 = vmatprep.subr.mxu0 0.0
    %814 = vmatpush1.msra.mxu0 0.0
    %815 = vmatprep.subr.mxu0 0.0
    %816 = vmatpush1.msra.mxu0 0.0
    %817 = vmatprep.subr.mxu0 0.0
    %818 = vmatpush1.msra.mxu0 0.0
    %819 = vmatprep.subr.mxu0 0.0
    %820 = vmatpush1.msra.mxu0 0.0
    %821 = vmatprep.subr.mxu0 0.0
    %822 = vmatpush1.msra.mxu0 0.0
    %823 = vmatprep.subr.mxu0 0.0
    %824 = vmatpush1.msra.mxu0 0.0
    %825 = vmatprep.subr.mxu0 0.0
    %826 = vmatpush1.msra.mxu0 0.0
    %827 = vmatprep.subr.mxu0 0.0
    %828 = vmatpush1.msra.mxu0 0.0
    %829 = vmatprep.subr.mxu0 0.0
    %830 = vmatpush1.msra.mxu0 0.0
    %831 = vmatprep.subr.mxu0 0.0
    %832 = vmatpush1.msra.mxu0 0.0
    %833 = vmatprep.subr.mxu0 0.0
    %834 = vmatpush1.msra.mxu0 0.0
    %835 = vmatprep.subr.mxu0 0.0
    %836 = vmatpush1.msra.mxu0 0.0
    %837 = vmatprep.subr.mxu0 0.0
    %838 = vmatpush1.msra.mxu0 0.0
    %839 = vmatprep.subr.mxu0 0.0
    %840 = vmatpush1.msra.mxu0 0.0
    %841 = vmatprep.subr.mxu0 0.0
    %842 = vmatpush1.msra.mxu0 0.0
    %843 = vmatprep.subr.mxu0 0.0
    %844 = vmatpush1.msra.mxu0 0.0
    %845 = vmatprep.subr.mxu0 0.0
    %846 = vmatpush1.msra.mxu0 0.0
    %847 = vmatprep.subr.mxu0 0.0
    %848 = vmatpush1.msra.mxu0 0.0
    %849 = vmatprep.subr.mxu0 0.0
    %850 = vmatpush1.msra.mxu0 0.0
    %851 = vmatprep.mubr.f32.mxu0 0.0
    %852 = vmatmul.mubr.f32.gmra.mrb[0].mxu0 %v778
    %v853 = vpop.f32.mrb[0].mxu0
    %v854 = vadd.f32 0.0, %v853
    %v855 = vpop.f32.mrb[0].mxu0
    %856 = vmatprep.mubr.f32.mxu0 0.0
    %857 = vmatmul.mubr.f32.gmra.mrb[0].mxu0 %v781
    %v858 = vpop.f32.mrb[0].mxu0
    %v859 = vadd.f32 0.0, %v858
    %v860 = vpop.f32.mrb[0].mxu0
    %861 = vdwg.mxu0
    %v862 = vmul.f32 %v854, %v687
    %v863 = vmul.f32 %v859, %v692
    %v865 = vsel %vm776, %v610, 0
    %v868 = vsel %vm776, %v611, 0
    %870 = vmatprep.subr.mxu0 0.0
    %871 = vmatpush1.msra.mxu0 %v785
    %872 = vmatprep.subr.mxu0 0.0
    %873 = vmatpush1.msra.mxu0 0.0
    %874 = vmatprep.subr.mxu0 0.0
    %875 = vmatpush1.msra.mxu0 0.0
    %876 = vmatprep.subr.mxu0 0.0
    %877 = vmatpush1.msra.mxu0 0.0
    %878 = vmatprep.subr.mxu0 0.0
    %879 = vmatpush1.msra.mxu0 0.0
    %880 = vmatprep.subr.mxu0 0.0
    %881 = vmatpush1.msra.mxu0 0.0
    %882 = vmatprep.subr.mxu0 0.0
    %883 = vmatpush1.msra.mxu0 0.0
    %884 = vmatprep.subr.mxu0 0.0
    %885 = vmatpush1.msra.mxu0 0.0
    %886 = vmatprep.subr.mxu0 0.0
    %887 = vmatpush1.msra.mxu0 0.0
    %888 = vmatprep.subr.mxu0 0.0
    %889 = vmatpush1.msra.mxu0 0.0
    %890 = vmatprep.subr.mxu0 0.0
    %891 = vmatpush1.msra.mxu0 0.0
    %892 = vmatprep.subr.mxu0 0.0
    %893 = vmatpush1.msra.mxu0 0.0
    %894 = vmatprep.subr.mxu0 0.0
    %895 = vmatpush1.msra.mxu0 0.0
    %896 = vmatprep.subr.mxu0 0.0
    %897 = vmatpush1.msra.mxu0 0.0
    %898 = vmatprep.subr.mxu0 0.0
    %899 = vmatpush1.msra.mxu0 0.0
    %900 = vmatprep.subr.mxu0 0.0
    %901 = vmatpush1.msra.mxu0 0.0
    %902 = vmatprep.subr.mxu0 0.0
    %903 = vmatpush1.msra.mxu0 0.0
    %904 = vmatprep.subr.mxu0 0.0
    %905 = vmatpush1.msra.mxu0 0.0
    %906 = vmatprep.subr.mxu0 0.0
    %907 = vmatpush1.msra.mxu0 0.0
    %908 = vmatprep.subr.mxu0 0.0
    %909 = vmatpush1.msra.mxu0 0.0
    %910 = vmatprep.subr.mxu0 0.0
    %911 = vmatpush1.msra.mxu0 0.0
    %912 = vmatprep.subr.mxu0 0.0
    %913 = vmatpush1.msra.mxu0 0.0
    %914 = vmatprep.subr.mxu0 0.0
    %915 = vmatpush1.msra.mxu0 0.0
    %916 = vmatprep.subr.mxu0 0.0
    %917 = vmatpush1.msra.mxu0 0.0
    %918 = vmatprep.subr.mxu0 0.0
    %919 = vmatpush1.msra.mxu0 0.0
    %920 = vmatprep.subr.mxu0 0.0
    %921 = vmatpush1.msra.mxu0 0.0
    %922 = vmatprep.subr.mxu0 0.0
    %923 = vmatpush1.msra.mxu0 0.0
    %924 = vmatprep.subr.mxu0 0.0
    %925 = vmatpush1.msra.mxu0 0.0
    %926 = vmatprep.subr.mxu0 0.0
    %927 = vmatpush1.msra.mxu0 0.0
    %928 = vmatprep.subr.mxu0 0.0
    %929 = vmatpush1.msra.mxu0 0.0
    %930 = vmatprep.subr.mxu0 0.0
    %931 = vmatpush1.msra.mxu0 0.0
    %932 = vmatprep.subr.mxu0 0.0
    %933 = vmatpush1.msra.mxu0 0.0
    %934 = vmatprep.mubr.f32.mxu0 0.0
    %935 = vmatmul.mubr.f32.gmra.mrb[0].mxu0 %v865
    %v936 = vpop.f32.mrb[0].mxu0
    %v937 = vadd.f32 0.0, %v936
    %v938 = vpop.f32.mrb[0].mxu0
    %939 = vmatprep.mubr.f32.mxu0 0.0
    %940 = vmatmul.mubr.f32.gmra.mrb[0].mxu0 %v868
    %v941 = vpop.f32.mrb[0].mxu0
    %v942 = vadd.f32 0.0, %v941
    %v943 = vpop.f32.mrb[0].mxu0
    %944 = vdwg.mxu0
    %v945 = vmul.f32 %v937, %v768
    %v946 = vmul.f32 %v942, %v773
    %v947 = vadd.f32 %v862, %v945
    %v948 = vadd.f32 %v863, %v946
    %v949 = vlaneseq
    %v950 = vshrl.u32 %v949, 7
    %v951 = vsub.s32 0, %v950
    %v952 = vrot.slane %v188, %v951
    %v954 = vsel %vm199, %v947, 0
    %v957 = vsel %vm199, %v948, 0
    %959 = vmatprep.subr.mxu0 0.0
    %960 = vmatpush1.msra.mxu0 %v169
    %961 = vmatprep.subr.mxu0 0.0
    %962 = vmatpush1.msra.mxu0 %v170
    %963 = vmatprep.subr.mxu0 0.0
    %964 = vmatpush1.msra.mxu0 %v171
    %965 = vmatprep.subr.mxu0 0.0
    %966 = vmatpush1.msra.mxu0 %v172
    %967 = vmatprep.subr.mxu0 0.0
    %968 = vmatpush1.msra.mxu0 0.0
    %969 = vmatprep.subr.mxu0 0.0
    %970 = vmatpush1.msra.mxu0 0.0
    %971 = vmatprep.subr.mxu0 0.0
    %972 = vmatpush1.msra.mxu0 0.0
    %973 = vmatprep.subr.mxu0 0.0
    %974 = vmatpush1.msra.mxu0 0.0
    %975 = vmatprep.subr.mxu0 0.0
    %976 = vmatpush1.msra.mxu0 0.0
    %977 = vmatprep.subr.mxu0 0.0
    %978 = vmatpush1.msra.mxu0 0.0
    %979 = vmatprep.subr.mxu0 0.0
    %980 = vmatpush1.msra.mxu0 0.0
    %981 = vmatprep.subr.mxu0 0.0
    %982 = vmatpush1.msra.mxu0 0.0
    %983 = vmatprep.subr.mxu0 0.0
    %984 = vmatpush1.msra.mxu0 0.0
    %985 = vmatprep.subr.mxu0 0.0
    %986 = vmatpush1.msra.mxu0 0.0
    %987 = vmatprep.subr.mxu0 0.0
    %988 = vmatpush1.msra.mxu0 0.0
    %989 = vmatprep.subr.mxu0 0.0
    %990 = vmatpush1.msra.mxu0 0.0
    %991 = vmatprep.subr.mxu0 0.0
    %992 = vmatpush1.msra.mxu0 0.0
    %993 = vmatprep.subr.mxu0 0.0
    %994 = vmatpush1.msra.mxu0 0.0
    %995 = vmatprep.subr.mxu0 0.0
    %996 = vmatpush1.msra.mxu0 0.0
    %997 = vmatprep.subr.mxu0 0.0
    %998 = vmatpush1.msra.mxu0 0.0
    %999 = vmatprep.subr.mxu0 0.0
    %1000 = vmatpush1.msra.mxu0 0.0
    %1001 = vmatprep.subr.mxu0 0.0
    %1002 = vmatpush1.msra.mxu0 0.0
    %1003 = vmatprep.subr.mxu0 0.0
    %1004 = vmatpush1.msra.mxu0 0.0
    %1005 = vmatprep.subr.mxu0 0.0
    %1006 = vmatpush1.msra.mxu0 0.0
    %1007 = vmatprep.subr.mxu0 0.0
    %1008 = vmatpush1.msra.mxu0 0.0
    %1009 = vmatprep.subr.mxu0 0.0
    %1010 = vmatpush1.msra.mxu0 0.0
    %1011 = vmatprep.subr.mxu0 0.0
    %1012 = vmatpush1.msra.mxu0 0.0
    %1013 = vmatprep.subr.mxu0 0.0
    %1014 = vmatpush1.msra.mxu0 0.0
    %1015 = vmatprep.subr.mxu0 0.0
    %1016 = vmatpush1.msra.mxu0 0.0
    %1017 = vmatprep.subr.mxu0 0.0
    %1018 = vmatpush1.msra.mxu0 0.0
    %1019 = vmatprep.subr.mxu0 0.0
    %1020 = vmatpush1.msra.mxu0 0.0
    %1021 = vmatprep.subr.mxu0 0.0
    %1022 = vmatpush1.msra.mxu0 0.0
    %1023 = vmatprep.mubr.f32.mxu0 0.0
    %1024 = vmatmul.mubr.f32.gmra.mrb[0].mxu0 %v954
    %v1025 = vpop.f32.mrb[0].mxu0
    %v1026 = vadd.f32 %v952, %v1025
    %v1027 = vpop.f32.mrb[0].mxu0
    %1028 = vmatprep.mubr.f32.mxu0 0.0
    %1029 = vmatmul.mubr.f32.gmra.mrb[0].mxu0 %v957
    %v1030 = vpop.f32.mrb[0].mxu0
    %v1031 = vadd.f32 %v952, %v1030
    %v1032 = vpop.f32.mrb[0].mxu0
    %1033 = vdwg.mxu0
    %v1034 = vadd.f32 %v149, %v1026
    %v1035 = vadd.f32 %v154, %v1031
    %v1037 = vsel %vm199, %v1034, 0
    %v1040 = vsel %vm199, %v1035, 0
    %1042 = vmatprep.subr.mxu0 0.0
    %1043 = vmatpush1.msra.mxu0 %v21
    %1044 = vmatprep.subr.mxu0 0.0
    %1045 = vmatpush1.msra.mxu0 %v22
    %1046 = vmatprep.subr.mxu0 0.0
    %1047 = vmatpush1.msra.mxu0 %v23
    %1048 = vmatprep.subr.mxu0 0.0
    %1049 = vmatpush1.msra.mxu0 %v24
    %1050 = vmatprep.subr.mxu0 0.0
    %1051 = vmatpush1.msra.mxu0 0.0
    %1052 = vmatprep.subr.mxu0 0.0
    %1053 = vmatpush1.msra.mxu0 0.0
    %1054 = vmatprep.subr.mxu0 0.0
    %1055 = vmatpush1.msra.mxu0 0.0
    %1056 = vmatprep.subr.mxu0 0.0
    %1057 = vmatpush1.msra.mxu0 0.0
    %1058 = vmatprep.subr.mxu0 0.0
    %1059 = vmatpush1.msra.mxu0 0.0
    %1060 = vmatprep.subr.mxu0 0.0
    %1061 = vmatpush1.msra.mxu0 0.0
    %1062 = vmatprep.subr.mxu0 0.0
    %1063 = vmatpush1.msra.mxu0 0.0
    %1064 = vmatprep.subr.mxu0 0.0
    %1065 = vmatpush1.msra.mxu0 0.0
    %1066 = vmatprep.subr.mxu0 0.0
    %1067 = vmatpush1.msra.mxu0 0.0
    %1068 = vmatprep.subr.mxu0 0.0
    %1069 = vmatpush1.msra.mxu0 0.0
    %1070 = vmatprep.subr.mxu0 0.0
    %1071 = vmatpush1.msra.mxu0 0.0
    %1072 = vmatprep.subr.mxu0 0.0
    %1073 = vmatpush1.msra.mxu0 0.0
    %1074 = vmatprep.subr.mxu0 0.0
    %1075 = vmatpush1.msra.mxu0 0.0
    %1076 = vmatprep.subr.mxu0 0.0
    %1077 = vmatpush1.msra.mxu0 0.0
    %1078 = vmatprep.subr.mxu0 0.0
    %1079 = vmatpush1.msra.mxu0 0.0
    %1080 = vmatprep.subr.mxu0 0.0
    %1081 = vmatpush1.msra.mxu0 0.0
    %1082 = vmatprep.subr.mxu0 0.0
    %1083 = vmatpush1.msra.mxu0 0.0
    %1084 = vmatprep.subr.mxu0 0.0
    %1085 = vmatpush1.msra.mxu0 0.0
    %1086 = vmatprep.subr.mxu0 0.0
    %1087 = vmatpush1.msra.mxu0 0.0
    %1088 = vmatprep.subr.mxu0 0.0
    %1089 = vmatpush1.msra.mxu0 0.0
    %1090 = vmatprep.subr.mxu0 0.0
    %1091 = vmatpush1.msra.mxu0 0.0
    %1092 = vmatprep.subr.mxu0 0.0
    %1093 = vmatpush1.msra.mxu0 0.0
    %1094 = vmatprep.subr.mxu0 0.0
    %1095 = vmatpush1.msra.mxu0 0.0
    %1096 = vmatprep.subr.mxu0 0.0
    %1097 = vmatpush1.msra.mxu0 0.0
    %1098 = vmatprep.subr.mxu0 0.0
    %1099 = vmatpush1.msra.mxu0 0.0
    %1100 = vmatprep.subr.mxu0 0.0
    %1101 = vmatpush1.msra.mxu0 0.0
    %1102 = vmatprep.subr.mxu0 0.0
    %1103 = vmatpush1.msra.mxu0 0.0
    %1104 = vmatprep.subr.mxu0 0.0
    %1105 = vmatpush1.msra.mxu0 0.0
    %1106 = vmatprep.mubr.f32.mxu0 0.0
    %1107 = vmatmul.mubr.f32.gmra.mrb[0].mxu0 %v1037
    %v1108 = vpop.f32.mrb[0].mxu0
    %v1109 = vadd.f32 0.0, %v1108
    %v1110 = vpop.f32.mrb[0].mxu0
    %1111 = vmatprep.mubr.f32.mxu0 0.0
    %1112 = vmatmul.mubr.f32.gmra.mrb[0].mxu0 %v1040
    %v1113 = vpop.f32.mrb[0].mxu0
    %v1114 = vadd.f32 0.0, %v1113
    %v1115 = vpop.f32.mrb[0].mxu0
    %1116 = vdwg.mxu0
    %v1117 = vmul.f32 %v1034, %v1034
    %v1118 = vmul.f32 %v1035, %v1035
    %v1120 = vsel %vm199, %v1117, 0
    %v1123 = vsel %vm199, %v1118, 0
    %1125 = vmatprep.subr.mxu0 0.0
    %1126 = vmatpush1.msra.mxu0 %v21
    %1127 = vmatprep.subr.mxu0 0.0
    %1128 = vmatpush1.msra.mxu0 %v22
    %1129 = vmatprep.subr.mxu0 0.0
    %1130 = vmatpush1.msra.mxu0 %v23
    %1131 = vmatprep.subr.mxu0 0.0
    %1132 = vmatpush1.msra.mxu0 %v24
    %1133 = vmatprep.subr.mxu0 0.0
    %1134 = vmatpush1.msra.mxu0 0.0
    %1135 = vmatprep.subr.mxu0 0.0
    %1136 = vmatpush1.msra.mxu0 0.0
    %1137 = vmatprep.subr.mxu0 0.0
    %1138 = vmatpush1.msra.mxu0 0.0
    %1139 = vmatprep.subr.mxu0 0.0
    %1140 = vmatpush1.msra.mxu0 0.0
    %1141 = vmatprep.subr.mxu0 0.0
    %1142 = vmatpush1.msra.mxu0 0.0
    %1143 = vmatprep.subr.mxu0 0.0
    %1144 = vmatpush1.msra.mxu0 0.0
    %1145 = vmatprep.subr.mxu0 0.0
    %1146 = vmatpush1.msra.mxu0 0.0
    %1147 = vmatprep.subr.mxu0 0.0
    %1148 = vmatpush1.msra.mxu0 0.0
    %1149 = vmatprep.subr.mxu0 0.0
    %1150 = vmatpush1.msra.mxu0 0.0
    %1151 = vmatprep.subr.mxu0 0.0
    %1152 = vmatpush1.msra.mxu0 0.0
    %1153 = vmatprep.subr.mxu0 0.0
    %1154 = vmatpush1.msra.mxu0 0.0
    %1155 = vmatprep.subr.mxu0 0.0
    %1156 = vmatpush1.msra.mxu0 0.0
    %1157 = vmatprep.subr.mxu0 0.0
    %1158 = vmatpush1.msra.mxu0 0.0
    %1159 = vmatprep.subr.mxu0 0.0
    %1160 = vmatpush1.msra.mxu0 0.0
    %1161 = vmatprep.subr.mxu0 0.0
    %1162 = vmatpush1.msra.mxu0 0.0
    %1163 = vmatprep.subr.mxu0 0.0
    %1164 = vmatpush1.msra.mxu0 0.0
    %1165 = vmatprep.subr.mxu0 0.0
    %1166 = vmatpush1.msra.mxu0 0.0
    %1167 = vmatprep.subr.mxu0 0.0
    %1168 = vmatpush1.msra.mxu0 0.0
    %1169 = vmatprep.subr.mxu0 0.0
    %1170 = vmatpush1.msra.mxu0 0.0
    %1171 = vmatprep.subr.mxu0 0.0
    %1172 = vmatpush1.msra.mxu0 0.0
    %1173 = vmatprep.subr.mxu0 0.0
    %1174 = vmatpush1.msra.mxu0 0.0
    %1175 = vmatprep.subr.mxu0 0.0
    %1176 = vmatpush1.msra.mxu0 0.0
    %1177 = vmatprep.subr.mxu0 0.0
    %1178 = vmatpush1.msra.mxu0 0.0
    %1179 = vmatprep.subr.mxu0 0.0
    %1180 = vmatpush1.msra.mxu0 0.0
    %1181 = vmatprep.subr.mxu0 0.0
    %1182 = vmatpush1.msra.mxu0 0.0
    %1183 = vmatprep.subr.mxu0 0.0
    %1184 = vmatpush1.msra.mxu0 0.0
    %1185 = vmatprep.subr.mxu0 0.0
    %1186 = vmatpush1.msra.mxu0 0.0
    %1187 = vmatprep.subr.mxu0 0.0
    %1188 = vmatpush1.msra.mxu0 0.0
    %1189 = vmatprep.mubr.f32.mxu0 0.0
    %1190 = vmatmul.mubr.f32.gmra.mrb[0].mxu0 %v1120
    %v1191 = vpop.f32.mrb[0].mxu0
    %v1192 = vadd.f32 0.0, %v1191
    %v1193 = vpop.f32.mrb[0].mxu0
    %1194 = vmatprep.mubr.f32.mxu0 0.0
    %1195 = vmatmul.mubr.f32.gmra.mrb[0].mxu0 %v1123
    %v1196 = vpop.f32.mrb[0].mxu0
    %v1197 = vadd.f32 0.0, %v1196
    %v1198 = vpop.f32.mrb[0].mxu0
    %1199 = vdwg.mxu0
    %v1200 = vmul.f32 %v1109, %v1109
    %v1201 = vmul.f32 %v1114, %v1114
    %v1202 = vsub.f32 %v1192, %v1200
    %v1203 = vsub.f32 %v1197, %v1201
    %v1204 = vsub.f32 %v1034, %v1109
    %v1205 = vsub.f32 %v1035, %v1114
    %v1206 = vadd.f32 %v1202, 1e-05
    %v1207 = vadd.f32 %v1203, 1e-05
    %v1208 = vrsqrt.pop %v1206
    %v1209 = vrsqrt.pop %v1207
    %v1210 = vmul.f32 %v1204, %v1208
    %v1211 = vmul.f32 %v1205, %v1209
    %v1212 = vlaneseq
    %v1213 = vshrl.u32 %v1212, 7
    %v1214 = vsub.s32 0, %v1213
    %v1215 = vrot.slane %v191, %v1214
    %v1216 = vmul.f32 %v1210, %v1215
    %v1217 = vmul.f32 %v1211, %v1215
    %v1218 = vlaneseq
    %v1219 = vshrl.u32 %v1218, 7
    %v1220 = vsub.s32 0, %v1219
    %v1221 = vrot.slane %v192, %v1220
    %v1222 = vadd.f32 %v1216, %v1221
    %v1223 = vadd.f32 %v1217, %v1221
    %v1224 = vlaneseq
    %v1225 = vshrl.u32 %v1224, 7
    %v1226 = vsub.s32 0, %v1225
    %v1227 = vrot.slane %v189, %v1226
    %v1229 = vsel %vm199, %v1222, 0
    %v1232 = vsel %vm199, %v1223, 0
    %1234 = vmatprep.subr.mxu0 0.0
    %1235 = vmatpush1.msra.mxu0 %v173
    %1236 = vmatprep.subr.mxu0 0.0
    %1237 = vmatpush1.msra.mxu0 %v174
    %1238 = vmatprep.subr.mxu0 0.0
    %1239 = vmatpush1.msra.mxu0 %v175
    %1240 = vmatprep.subr.mxu0 0.0
    %1241 = vmatpush1.msra.mxu0 %v176
    %1242 = vmatprep.subr.mxu0 0.0
    %1243 = vmatpush1.msra.mxu0 0.0
    %1244 = vmatprep.subr.mxu0 0.0
    %1245 = vmatpush1.msra.mxu0 0.0
    %1246 = vmatprep.subr.mxu0 0.0
    %1247 = vmatpush1.msra.mxu0 0.0
    %1248 = vmatprep.subr.mxu0 0.0
    %1249 = vmatpush1.msra.mxu0 0.0
    %1250 = vmatprep.subr.mxu0 0.0
    %1251 = vmatpush1.msra.mxu0 0.0
    %1252 = vmatprep.subr.mxu0 0.0
    %1253 = vmatpush1.msra.mxu0 0.0
    %1254 = vmatprep.subr.mxu0 0.0
    %1255 = vmatpush1.msra.mxu0 0.0
    %1256 = vmatprep.subr.mxu0 0.0
    %1257 = vmatpush1.msra.mxu0 0.0
    %1258 = vmatprep.subr.mxu0 0.0
    %1259 = vmatpush1.msra.mxu0 0.0
    %1260 = vmatprep.subr.mxu0 0.0
    %1261 = vmatpush1.msra.mxu0 0.0
    %1262 = vmatprep.subr.mxu0 0.0
    %1263 = vmatpush1.msra.mxu0 0.0
    %1264 = vmatprep.subr.mxu0 0.0
    %1265 = vmatpush1.msra.mxu0 0.0
    %1266 = vmatprep.subr.mxu0 0.0
    %1267 = vmatpush1.msra.mxu0 0.0
    %1268 = vmatprep.subr.mxu0 0.0
    %1269 = vmatpush1.msra.mxu0 0.0
    %1270 = vmatprep.subr.mxu0 0.0
    %1271 = vmatpush1.msra.mxu0 0.0
    %1272 = vmatprep.subr.mxu0 0.0
    %1273 = vmatpush1.msra.mxu0 0.0
    %1274 = vmatprep.subr.mxu0 0.0
    %1275 = vmatpush1.msra.mxu0 0.0
    %1276 = vmatprep.subr.mxu0 0.0
    %1277 = vmatpush1.msra.mxu0 0.0
    %1278 = vmatprep.subr.mxu0 0.0
    %1279 = vmatpush1.msra.mxu0 0.0
    %1280 = vmatprep.subr.mxu0 0.0
    %1281 = vmatpush1.msra.mxu0 0.0
    %1282 = vmatprep.subr.mxu0 0.0
    %1283 = vmatpush1.msra.mxu0 0.0
    %1284 = vmatprep.subr.mxu0 0.0
    %1285 = vmatpush1.msra.mxu0 0.0
    %1286 = vmatprep.subr.mxu0 0.0
    %1287 = vmatpush1.msra.mxu0 0.0
    %1288 = vmatprep.subr.mxu0 0.0
    %1289 = vmatpush1.msra.mxu0 0.0
    %1290 = vmatprep.subr.mxu0 0.0
    %1291 = vmatpush1.msra.mxu0 0.0
    %1292 = vmatprep.subr.mxu0 0.0
    %1293 = vmatpush1.msra.mxu0 0.0
    %1294 = vmatprep.subr.mxu0 0.0
    %1295 = vmatpush1.msra.mxu0 0.0
    %1296 = vmatprep.subr.mxu0 0.0
    %1297 = vmatpush1.msra.mxu0 0.0
    %1298 = vmatprep.mubr.f32.mxu0 0.0
    %1299 = vmatmul.mubr.f32.gmra.mrb[0].mxu0 %v1229
    %v1300 = vpop.f32.mrb[0].mxu0
    %v1301 = vadd.f32 %v1227, %v1300
    %v1302 = vpop.f32.mrb[0].mxu0
    %1303 = vmatprep.mubr.f32.mxu0 0.0
    %1304 = vmatmul.mubr.f32.gmra.mrb[0].mxu0 %v1232
    %v1305 = vpop.f32.mrb[0].mxu0
    %v1306 = vadd.f32 %v1227, %v1305
    %v1307 = vpop.f32.mrb[0].mxu0
    %1308 = vdwg.mxu0
    %v1309 = vmax.f32 %v1301, 0.0
    %v1310 = vmax.f32 %v1306, 0.0
    %v1311 = vlaneseq
    %v1312 = vshrl.u32 %v1311, 7
    %v1313 = vsub.s32 0, %v1312
    %v1314 = vrot.slane %v190, %v1313
    %vm1315 = vcmask 523264
    %v1317 = vsel %vm1315, %v1309, 0
    %v1320 = vsel %vm1315, %v1310, 0
    %1322 = vmatprep.subr.mxu0 0.0
    %1323 = vmatpush1.msra.mxu0 %v177
    %1324 = vmatprep.subr.mxu0 0.0
    %1325 = vmatpush1.msra.mxu0 %v178
    %1326 = vmatprep.subr.mxu0 0.0
    %1327 = vmatpush1.msra.mxu0 %v179
    %1328 = vmatprep.subr.mxu0 0.0
    %1329 = vmatpush1.msra.mxu0 %v180
    %1330 = vmatprep.subr.mxu0 0.0
    %1331 = vmatpush1.msra.mxu0 %v181
    %1332 = vmatprep.subr.mxu0 0.0
    %1333 = vmatpush1.msra.mxu0 %v182
    %1334 = vmatprep.subr.mxu0 0.0
    %1335 = vmatpush1.msra.mxu0 %v183
    %1336 = vmatprep.subr.mxu0 0.0
    %1337 = vmatpush1.msra.mxu0 %v184
    %1338 = vmatprep.subr.mxu0 0.0
    %1339 = vmatpush1.msra.mxu0 0.0
    %1340 = vmatprep.subr.mxu0 0.0
    %1341 = vmatpush1.msra.mxu0 0.0
    %1342 = vmatprep.subr.mxu0 0.0
    %1343 = vmatpush1.msra.mxu0 0.0
    %1344 = vmatprep.subr.mxu0 0.0
    %1345 = vmatpush1.msra.mxu0 0.0
    %1346 = vmatprep.subr.mxu0 0.0
    %1347 = vmatpush1.msra.mxu0 0.0
    %1348 = vmatprep.subr.mxu0 0.0
    %1349 = vmatpush1.msra.mxu0 0.0
    %1350 = vmatprep.subr.mxu0 0.0
    %1351 = vmatpush1.msra.mxu0 0.0
    %1352 = vmatprep.subr.mxu0 0.0
    %1353 = vmatpush1.msra.mxu0 0.0
    %1354 = vmatprep.subr.mxu0 0.0
    %1355 = vmatpush1.msra.mxu0 0.0
    %1356 = vmatprep.subr.mxu0 0.0
    %1357 = vmatpush1.msra.mxu0 0.0
    %1358 = vmatprep.subr.mxu0 0.0
    %1359 = vmatpush1.msra.mxu0 0.0
    %1360 = vmatprep.subr.mxu0 0.0
    %1361 = vmatpush1.msra.mxu0 0.0
    %1362 = vmatprep.subr.mxu0 0.0
    %1363 = vmatpush1.msra.mxu0 0.0
    %1364 = vmatprep.subr.mxu0 0.0
    %1365 = vmatpush1.msra.mxu0 0.0
    %1366 = vmatprep.subr.mxu0 0.0
    %1367 = vmatpush1.msra.mxu0 0.0
    %1368 = vmatprep.subr.mxu0 0.0
    %1369 = vmatpush1.msra.mxu0 0.0
    %1370 = vmatprep.subr.mxu0 0.0
    %1371 = vmatpush1.msra.mxu0 0.0
    %1372 = vmatprep.subr.mxu0 0.0
    %1373 = vmatpush1.msra.mxu0 0.0
    %1374 = vmatprep.subr.mxu0 0.0
    %1375 = vmatpush1.msra.mxu0 0.0
    %1376 = vmatprep.subr.mxu0 0.0
    %1377 = vmatpush1.msra.mxu0 0.0
    %1378 = vmatprep.subr.mxu0 0.0
    %1379 = vmatpush1.msra.mxu0 0.0
    %1380 = vmatprep.subr.mxu0 0.0
    %1381 = vmatpush1.msra.mxu0 0.0
    %1382 = vmatprep.subr.mxu0 0.0
    %1383 = vmatpush1.msra.mxu0 0.0
    %1384 = vmatprep.subr.mxu0 0.0
    %1385 = vmatpush1.msra.mxu0 0.0
    %1386 = vmatprep.mubr.f32.mxu0 0.0
    %1387 = vmatmul.mubr.f32.gmra.mrb[0].mxu0 %v1317
    %v1388 = vpop.f32.mrb[0].mxu0
    %v1389 = vadd.f32 %v1314, %v1388
    %v1390 = vpop.f32.mrb[0].mxu0
    %1391 = vmatprep.mubr.f32.mxu0 0.0
    %1392 = vmatmul.mubr.f32.gmra.mrb[0].mxu0 %v1320
    %v1393 = vpop.f32.mrb[0].mxu0
    %v1394 = vadd.f32 %v1314, %v1393
    %v1395 = vpop.f32.mrb[0].mxu0
    %1396 = vdwg.mxu0
    %v1397 = vadd.f32 %v1222, %v1389
    %v1398 = vadd.f32 %v1223, %v1394
    %v1400 = vsel %vm199, %v1397, 0
    %v1403 = vsel %vm199, %v1398, 0
    %1405 = vmatprep.subr.mxu0 0.0
    %1406 = vmatpush1.msra.mxu0 %v21
    %1407 = vmatprep.subr.mxu0 0.0
    %1408 = vmatpush1.msra.mxu0 %v22
    %1409 = vmatprep.subr.mxu0 0.0
    %1410 = vmatpush1.msra.mxu0 %v23
    %1411 = vmatprep.subr.mxu0 0.0
    %1412 = vmatpush1.msra.mxu0 %v24
    %1413 = vmatprep.subr.mxu0 0.0
    %1414 = vmatpush1.msra.mxu0 0.0
    %1415 = vmatprep.subr.mxu0 0.0
    %1416 = vmatpush1.msra.mxu0 0.0
    %1417 = vmatprep.subr.mxu0 0.0
    %1418 = vmatpush1.msra.mxu0 0.0
    %1419 = vmatprep.subr.mxu0 0.0
    %1420 = vmatpush1.msra.mxu0 0.0
    %1421 = vmatprep.subr.mxu0 0.0
    %1422 = vmatpush1.msra.mxu0 0.0
    %1423 = vmatprep.subr.mxu0 0.0
    %1424 = vmatpush1.msra.mxu0 0.0
    %1425 = vmatprep.subr.mxu0 0.0
    %1426 = vmatpush1.msra.mxu0 0.0
    %1427 = vmatprep.subr.mxu0 0.0
    %1428 = vmatpush1.msra.mxu0 0.0
    %1429 = vmatprep.subr.mxu0 0.0
    %1430 = vmatpush1.msra.mxu0 0.0
    %1431 = vmatprep.subr.mxu0 0.0
    %1432 = vmatpush1.msra.mxu0 0.0
    %1433 = vmatprep.subr.mxu0 0.0
    %1434 = vmatpush1.msra.mxu0 0.0
    %1435 = vmatprep.subr.mxu0 0.0
    %1436 = vmatpush1.msra.mxu0 0.0
    %1437 = vmatprep.subr.mxu0 0.0
    %1438 = vmatpush1.msra.mxu0 0.0
    %1439 = vmatprep.subr.mxu0 0.0
    %1440 = vmatpush1.msra.mxu0 0.0
    %1441 = vmatprep.subr.mxu0 0.0
    %1442 = vmatpush1.msra.mxu0 0.0
    %1443 = vmatprep.subr.mxu0 0.0
    %1444 = vmatpush1.msra.mxu0 0.0
    %1445 = vmatprep.subr.mxu0 0.0
    %1446 = vmatpush1.msra.mxu0 0.0
    %1447 = vmatprep.subr.mxu0 0.0
    %1448 = vmatpush1.msra.mxu0 0.0
    %1449 = vmatprep.subr.mxu0 0.0
    %1450 = vmatpush1.msra.mxu0 0.0
    %1451 = vmatprep.subr.mxu0 0.0
    %1452 = vmatpush1.msra.mxu0 0.0
    %1453 = vmatprep.subr.mxu0 0.0
    %1454 = vmatpush1.msra.mxu0 0.0
    %1455 = vmatprep.subr.mxu0 0.0
    %1456 = vmatpush1.msra.mxu0 0.0
    %1457 = vmatprep.subr.mxu0 0.0
    %1458 = vmatpush1.msra.mxu0 0.0
    %1459 = vmatprep.subr.mxu0 0.0
    %1460 = vmatpush1.msra.mxu0 0.0
    %1461 = vmatprep.subr.mxu0 0.0
    %1462 = vmatpush1.msra.mxu0 0.0
    %1463 = vmatprep.subr.mxu0 0.0
    %1464 = vmatpush1.msra.mxu0 0.0
    %1465 = vmatprep.subr.mxu0 0.0
    %1466 = vmatpush1.msra.mxu0 0.0
    %1467 = vmatprep.subr.mxu0 0.0
    %1468 = vmatpush1.msra.mxu0 0.0
    %1469 = vmatprep.mubr.f32.mxu0 0.0
    %1470 = vmatmul.mubr.f32.gmra.mrb[0].mxu0 %v1400
    %v1471 = vpop.f32.mrb[0].mxu0
    %v1472 = vadd.f32 0.0, %v1471
    %v1473 = vpop.f32.mrb[0].mxu0
    %1474 = vmatprep.mubr.f32.mxu0 0.0
    %1475 = vmatmul.mubr.f32.gmra.mrb[0].mxu0 %v1403
    %v1476 = vpop.f32.mrb[0].mxu0
    %v1477 = vadd.f32 0.0, %v1476
    %v1478 = vpop.f32.mrb[0].mxu0
    %1479 = vdwg.mxu0
    %v1480 = vmul.f32 %v1397, %v1397
    %v1481 = vmul.f32 %v1398, %v1398
    %v1483 = vsel %vm199, %v1480, 0
    %v1486 = vsel %vm199, %v1481, 0
    %1488 = vmatprep.subr.mxu0 0.0
    %1489 = vmatpush1.msra.mxu0 %v21
    %1490 = vmatprep.subr.mxu0 0.0
    %1491 = vmatpush1.msra.mxu0 %v22
    %1492 = vmatprep.subr.mxu0 0.0
    %1493 = vmatpush1.msra.mxu0 %v23
    %1494 = vmatprep.subr.mxu0 0.0
    %1495 = vmatpush1.msra.mxu0 %v24
    %1496 = vmatprep.subr.mxu0 0.0
    %1497 = vmatpush1.msra.mxu0 0.0
    %1498 = vmatprep.subr.mxu0 0.0
    %1499 = vmatpush1.msra.mxu0 0.0
    %1500 = vmatprep.subr.mxu0 0.0
    %1501 = vmatpush1.msra.mxu0 0.0
    %1502 = vmatprep.subr.mxu0 0.0
    %1503 = vmatpush1.msra.mxu0 0.0
    %1504 = vmatprep.subr.mxu0 0.0
    %1505 = vmatpush1.msra.mxu0 0.0
    %1506 = vmatprep.subr.mxu0 0.0
    %1507 = vmatpush1.msra.mxu0 0.0
    %1508 = vmatprep.subr.mxu0 0.0
    %1509 = vmatpush1.msra.mxu0 0.0
    %1510 = vmatprep.subr.mxu0 0.0
    %1511 = vmatpush1.msra.mxu0 0.0
    %1512 = vmatprep.subr.mxu0 0.0
    %1513 = vmatpush1.msra.mxu0 0.0
    %1514 = vmatprep.subr.mxu0 0.0
    %1515 = vmatpush1.msra.mxu0 0.0
    %1516 = vmatprep.subr.mxu0 0.0
    %1517 = vmatpush1.msra.mxu0 0.0
    %1518 = vmatprep.subr.mxu0 0.0
    %1519 = vmatpush1.msra.mxu0 0.0
    %1520 = vmatprep.subr.mxu0 0.0
    %1521 = vmatpush1.msra.mxu0 0.0
    %1522 = vmatprep.subr.mxu0 0.0
    %1523 = vmatpush1.msra.mxu0 0.0
    %1524 = vmatprep.subr.mxu0 0.0
    %1525 = vmatpush1.msra.mxu0 0.0
    %1526 = vmatprep.subr.mxu0 0.0
    %1527 = vmatpush1.msra.mxu0 0.0
    %1528 = vmatprep.subr.mxu0 0.0
    %1529 = vmatpush1.msra.mxu0 0.0
    %1530 = vmatprep.subr.mxu0 0.0
    %1531 = vmatpush1.msra.mxu0 0.0
    %1532 = vmatprep.subr.mxu0 0.0
    %1533 = vmatpush1.msra.mxu0 0.0
    %1534 = vmatprep.subr.mxu0 0.0
    %1535 = vmatpush1.msra.mxu0 0.0
    %1536 = vmatprep.subr.mxu0 0.0
    %1537 = vmatpush1.msra.mxu0 0.0
    %1538 = vmatprep.subr.mxu0 0.0
    %1539 = vmatpush1.msra.mxu0 0.0
    %1540 = vmatprep.subr.mxu0 0.0
    %1541 = vmatpush1.msra.mxu0 0.0
    %1542 = vmatprep.subr.mxu0 0.0
    %1543 = vmatpush1.msra.mxu0 0.0
    %1544 = vmatprep.subr.mxu0 0.0
    %1545 = vmatpush1.msra.mxu0 0.0
    %1546 = vmatprep.subr.mxu0 0.0
    %1547 = vmatpush1.msra.mxu0 0.0
    %1548 = vmatprep.subr.mxu0 0.0
    %1549 = vmatpush1.msra.mxu0 0.0
    %1550 = vmatprep.subr.mxu0 0.0
    %1551 = vmatpush1.msra.mxu0 0.0
    %1552 = vmatprep.mubr.f32.mxu0 0.0
    %1553 = vmatmul.mubr.f32.gmra.mrb[0].mxu0 %v1483
    %v1554 = vpop.f32.mrb[0].mxu0
    %v1555 = vadd.f32 0.0, %v1554
    %v1556 = vpop.f32.mrb[0].mxu0
    %1557 = vmatprep.mubr.f32.mxu0 0.0
    %1558 = vmatmul.mubr.f32.gmra.mrb[0].mxu0 %v1486
    %v1559 = vpop.f32.mrb[0].mxu0
    %v1560 = vadd.f32 0.0, %v1559
    %v1561 = vpop.f32.mrb[0].mxu0
    %1562 = vdwg.mxu0
    %v1563 = vmul.f32 %v1472, %v1472
    %v1564 = vmul.f32 %v1477, %v1477
    %v1565 = vsub.f32 %v1555, %v1563
    %v1566 = vsub.f32 %v1560, %v1564
    %v1567 = vsub.f32 %v1397, %v1472
    %v1568 = vsub.f32 %v1398, %v1477
    %v1569 = vadd.f32 %v1565, 1e-05
    %v1570 = vadd.f32 %v1566, 1e-05
    %v1571 = vrsqrt.pop %v1569
    %v1572 = vrsqrt.pop %v1570
    %v1573 = vmul.f32 %v1567, %v1571
    %v1574 = vmul.f32 %v1568, %v1572
    %v1575 = vlaneseq
    %v1576 = vshrl.u32 %v1575, 7
    %v1577 = vsub.s32 0, %v1576
    %v1578 = vrot.slane %v193, %v1577
    %v1579 = vmul.f32 %v1573, %v1578
    %v1580 = vmul.f32 %v1574, %v1578
    %v1581 = vlaneseq
    %v1582 = vshrl.u32 %v1581, 7
    %v1583 = vsub.s32 0, %v1582
    %v1584 = vrot.slane %v194, %v1583
    %v1585 = vadd.f32 %v1579, %v1584
    %v1586 = vadd.f32 %v1580, %v1584
    %v1587 = vld [vmem:[%s2 + $0xe0] sm:$0xff]
    %v1588 = vld [vmem:[%s2 + $0xe8] sm:$0xff]
    %v1589 = vld [vmem:[%s2 + $0xf0] sm:$0xff]
    %v1590 = vld [vmem:[%s2 + $0xf8] sm:$0xff]
    %v1591 = vld [vmem:[%s2 + $0x100] sm:$0xff]
    %v1592 = vld [vmem:[%s2 + $0x108] sm:$0xff]
    %v1593 = vld [vmem:[%s2 + $0x110] sm:$0xff]
    %v1594 = vld [vmem:[%s2 + $0x118] sm:$0xff]
    %v1595 = vld [vmem:[%s2 + $0x120] sm:$0xff]
    %v1596 = vld [vmem:[%s2 + $0x128] sm:$0xff]
    %v1597 = vld [vmem:[%s2 + $0x130] sm:$0xff]
    %v1598 = vld [vmem:[%s2 + $0x138] sm:$0xff]
    %v1599 = vld [vmem:[%s2 + $0x140] sm:$0xff]
    %v1600 = vld [vmem:[%s2 + $0x148] sm:$0xff]
    %v1601 = vld [vmem:[%s2 + $0x150] sm:$0xff]
    %v1602 = vld [vmem:[%s2 + $0x158] sm:$0xff]
    %v1603 = vld [vmem:[%s2 + $0x160] sm:$0xff]
    %v1604 = vld [vmem:[%s2 + $0x168] sm:$0xff]
    %v1605 = vld [vmem:[%s2 + $0x170] sm:$0xff]
    %v1606 = vld [vmem:[%s2 + $0x178] sm:$0xff]
    %v1607 = vld [vmem:[%s2 + $0x180] sm:$0xff]
    %v1608 = vld [vmem:[%s2 + $0x188] sm:$0xff]
    %v1609 = vld [vmem:[%s2 + $0x190] sm:$0xff]
    %v1610 = vld [vmem:[%s2 + $0x198] sm:$0xff]
    %v1611 = vld [vmem:[%s2 + $0x1a0] sm:$0xff]
    %v1612 = vld [vmem:[%s2 + $0x1a8] sm:$0xff]
    %v1613 = vld [vmem:[%s2 + $0x1b0] sm:$0xff]
    %v1614 = vld [vmem:[%s2 + $0x1b8] sm:$0xff]
    %v1615 = vld [vmem:[%s3 + $0x10] sm:$0x1]
    %v1616 = vld [vmem:[%s3 + $0x11] sm:$0x1]
    %v1617 = vld [vmem:[%s3 + $0x12] sm:$0x1]
    %v1618 = vld [vmem:[%s3 + $0x13] sm:$0x1]
    %v1619 = vld [vmem:[%s3 + $0x14] sm:$0x1]
    %v1620 = vld [vmem:[%s3 + $0x15] sm:$0x1]
    %v1621 = vld [vmem:[%s3 + $0x16] sm:$0x1]
    %v1622 = vld [vmem:[%s3 + $0x17] sm:$0x1]
    %v1623 = vld [vmem:[%s3 + $0x18] sm:$0x1]
    %v1624 = vld [vmem:[%s3 + $0x19] sm:$0x1]
    %v1625 = vlaneseq
    %v1626 = vshrl.u32 %v1625, 7
    %v1627 = vsub.s32 0, %v1626
    %v1628 = vrot.slane %v1615, %v1627
    %v1630 = vsel %vm199, %v1585, 0
    %v1633 = vsel %vm199, %v1586, 0
    %1635 = vmatprep.subr.mxu0 0.0
    %1636 = vmatpush1.msra.mxu0 %v1587
    %1637 = vmatprep.subr.mxu0 0.0
    %1638 = vmatpush1.msra.mxu0 %v1588
    %1639 = vmatprep.subr.mxu0 0.0
    %1640 = vmatpush1.msra.mxu0 %v1589
    %1641 = vmatprep.subr.mxu0 0.0
    %1642 = vmatpush1.msra.mxu0 %v1590
    %1643 = vmatprep.subr.mxu0 0.0
    %1644 = vmatpush1.msra.mxu0 0.0
    %1645 = vmatprep.subr.mxu0 0.0
    %1646 = vmatpush1.msra.mxu0 0.0
    %1647 = vmatprep.subr.mxu0 0.0
    %1648 = vmatpush1.msra.mxu0 0.0
    %1649 = vmatprep.subr.mxu0 0.0
    %1650 = vmatpush1.msra.mxu0 0.0
    %1651 = vmatprep.subr.mxu0 0.0
    %1652 = vmatpush1.msra.mxu0 0.0
    %1653 = vmatprep.subr.mxu0 0.0
    %1654 = vmatpush1.msra.mxu0 0.0
    %1655 = vmatprep.subr.mxu0 0.0
    %1656 = vmatpush1.msra.mxu0 0.0
    %1657 = vmatprep.subr.mxu0 0.0
    %1658 = vmatpush1.msra.mxu0 0.0
    %1659 = vmatprep.subr.mxu0 0.0
    %1660 = vmatpush1.msra.mxu0 0.0
    %1661 = vmatprep.subr.mxu0 0.0
    %1662 = vmatpush1.msra.mxu0 0.0
    %1663 = vmatprep.subr.mxu0 0.0
    %1664 = vmatpush1.msra.mxu0 0.0
    %1665 = vmatprep.subr.mxu0 0.0
    %1666 = vmatpush1.msra.mxu0 0.0
    %1667 = vmatprep.subr.mxu0 0.0
    %1668 = vmatpush1.msra.mxu0 0.0
    %1669 = vmatprep.subr.mxu0 0.0
    %1670 = vmatpush1.msra.mxu0 0.0
    %1671 = vmatprep.subr.mxu0 0.0
    %1672 = vmatpush1.msra.mxu0 0.0
    %1673 = vmatprep.subr.mxu0 0.0
    %1674 = vmatpush1.msra.mxu0 0.0
    %1675 = vmatprep.subr.mxu0 0.0
    %1676 = vmatpush1.msra.mxu0 0.0
    %1677 = vmatprep.subr.mxu0 0.0
    %1678 = vmatpush1.msra.mxu0 0.0
    %1679 = vmatprep.subr.mxu0 0.0
    %1680 = vmatpush1.msra.mxu0 0.0
    %1681 = vmatprep.subr.mxu0 0.0
    %1682 = vmatpush1.msra.mxu0 0.0
    %1683 = vmatprep.subr.mxu0 0.0
    %1684 = vmatpush1.msra.mxu0 0.0
    %1685 = vmatprep.subr.mxu0 0.0
    %1686 = vmatpush1.msra.mxu0 0.0
    %1687 = vmatprep.subr.mxu0 0.0
    %1688 = vmatpush1.msra.mxu0 0.0
    %1689 = vmatprep.subr.mxu0 0.0
    %1690 = vmatpush1.msra.mxu0 0.0
    %1691 = vmatprep.subr.mxu0 0.0
    %1692 = vmatpush1.msra.mxu0 0.0
    %1693 = vmatprep.subr.mxu0 0.0
    %1694 = vmatpush1.msra.mxu0 0.0
    %1695 = vmatprep.subr.mxu0 0.0
    %1696 = vmatpush1.msra.mxu0 0.0
    %1697 = vmatprep.subr.mxu0 0.0
    %1698 = vmatpush1.msra.mxu0 0.0
    %1699 = vmatprep.mubr.f32.mxu0 0.0
    %1700 = vmatmul.mubr.f32.gmra.mrb[0].mxu0 %v1630
    %v1701 = vpop.f32.mrb[0].mxu0
    %v1702 = vadd.f32 %v1628, %v1701
    %v1703 = vpop.f32.mrb[0].mxu0
    %1704 = vmatprep.mubr.f32.mxu0 0.0
    %1705 = vmatmul.mubr.f32.gmra.mrb[0].mxu0 %v1633
    %v1706 = vpop.f32.mrb[0].mxu0
    %v1707 = vadd.f32 %v1628, %v1706
    %v1708 = vpop.f32.mrb[0].mxu0
    %1709 = vdwg.mxu0
    %v1710 = vlaneseq
    %v1711 = vshrl.u32 %v1710, 7
    %v1712 = vsub.s32 0, %v1711
    %v1713 = vrot.slane %v1616, %v1712
    %1714 = vmatprep.subr.mxu0 0.0
    %1715 = vmatpush1.msra.mxu0 %v1591
    %1716 = vmatprep.subr.mxu0 0.0
    %1717 = vmatpush1.msra.mxu0 %v1592
    %1718 = vmatprep.subr.mxu0 0.0
    %1719 = vmatpush1.msra.mxu0 %v1593
    %1720 = vmatprep.subr.mxu0 0.0
    %1721 = vmatpush1.msra.mxu0 %v1594
    %1722 = vmatprep.subr.mxu0 0.0
    %1723 = vmatpush1.msra.mxu0 0.0
    %1724 = vmatprep.subr.mxu0 0.0
    %1725 = vmatpush1.msra.mxu0 0.0
    %1726 = vmatprep.subr.mxu0 0.0
    %1727 = vmatpush1.msra.mxu0 0.0
    %1728 = vmatprep.subr.mxu0 0.0
    %1729 = vmatpush1.msra.mxu0 0.0
    %1730 = vmatprep.subr.mxu0 0.0
    %1731 = vmatpush1.msra.mxu0 0.0
    %1732 = vmatprep.subr.mxu0 0.0
    %1733 = vmatpush1.msra.mxu0 0.0
    %1734 = vmatprep.subr.mxu0 0.0
    %1735 = vmatpush1.msra.mxu0 0.0
    %1736 = vmatprep.subr.mxu0 0.0
    %1737 = vmatpush1.msra.mxu0 0.0
    %1738 = vmatprep.subr.mxu0 0.0
    %1739 = vmatpush1.msra.mxu0 0.0
    %1740 = vmatprep.subr.mxu0 0.0
    %1741 = vmatpush1.msra.mxu0 0.0
    %1742 = vmatprep.subr.mxu0 0.0
    %1743 = vmatpush1.msra.mxu0 0.0
    %1744 = vmatprep.subr.mxu0 0.0
    %1745 = vmatpush1.msra.mxu0 0.0
    %1746 = vmatprep.subr.mxu0 0.0
    %1747 = vmatpush1.msra.mxu0 0.0
    %1748 = vmatprep.subr.mxu0 0.0
    %1749 = vmatpush1.msra.mxu0 0.0
    %1750 = vmatprep.subr.mxu0 0.0
    %1751 = vmatpush1.msra.mxu0 0.0
    %1752 = vmatprep.subr.mxu0 0.0
    %1753 = vmatpush1.msra.mxu0 0.0
    %1754 = vmatprep.subr.mxu0 0.0
    %1755 = vmatpush1.msra.mxu0 0.0
    %1756 = vmatprep.subr.mxu0 0.0
    %1757 = vmatpush1.msra.mxu0 0.0
    %1758 = vmatprep.subr.mxu0 0.0
    %1759 = vmatpush1.msra.mxu0 0.0
    %1760 = vmatprep.subr.mxu0 0.0
    %1761 = vmatpush1.msra.mxu0 0.0
    %1762 = vmatprep.subr.mxu0 0.0
    %1763 = vmatpush1.msra.mxu0 0.0
    %1764 = vmatprep.subr.mxu0 0.0
    %1765 = vmatpush1.msra.mxu0 0.0
    %1766 = vmatprep.subr.mxu0 0.0
    %1767 = vmatpush1.msra.mxu0 0.0
    %1768 = vmatprep.subr.mxu0 0.0
    %1769 = vmatpush1.msra.mxu0 0.0
    %1770 = vmatprep.subr.mxu0 0.0
    %1771 = vmatpush1.msra.mxu0 0.0
    %1772 = vmatprep.subr.mxu0 0.0
    %1773 = vmatpush1.msra.mxu0 0.0
    %1774 = vmatprep.subr.mxu0 0.0
    %1775 = vmatpush1.msra.mxu0 0.0
    %1776 = vmatprep.subr.mxu0 0.0
    %1777 = vmatpush1.msra.mxu0 0.0
    %1778 = vmatprep.mubr.f32.mxu0 0.0
    %1779 = vmatmul.mubr.f32.gmra.mrb[0].mxu0 %v1630
    %v1780 = vpop.f32.mrb[0].mxu0
    %v1781 = vadd.f32 %v1713, %v1780
    %v1782 = vpop.f32.mrb[0].mxu0
    %1783 = vmatprep.mubr.f32.mxu0 0.0
    %1784 = vmatmul.mubr.f32.gmra.mrb[0].mxu0 %v1633
    %v1785 = vpop.f32.mrb[0].mxu0
    %v1786 = vadd.f32 %v1713, %v1785
    %v1787 = vpop.f32.mrb[0].mxu0
    %1788 = vdwg.mxu0
    %v1789 = vlaneseq
    %v1790 = vshrl.u32 %v1789, 7
    %v1791 = vsub.s32 0, %v1790
    %v1792 = vrot.slane %v1617, %v1791
    %1793 = vmatprep.subr.mxu0 0.0
    %1794 = vmatpush1.msra.mxu0 %v1595
    %1795 = vmatprep.subr.mxu0 0.0
    %1796 = vmatpush1.msra.mxu0 %v1596
    %1797 = vmatprep.subr.mxu0 0.0
    %1798 = vmatpush1.msra.mxu0 %v1597
    %1799 = vmatprep.subr.mxu0 0.0
    %1800 = vmatpush1.msra.mxu0 %v1598
    %1801 = vmatprep.subr.mxu0 0.0
    %1802 = vmatpush1.msra.mxu0 0.0
    %1803 = vmatprep.subr.mxu0 0.0
    %1804 = vmatpush1.msra.mxu0 0.0
    %1805 = vmatprep.subr.mxu0 0.0
    %1806 = vmatpush1.msra.mxu0 0.0
    %1807 = vmatprep.subr.mxu0 0.0
    %1808 = vmatpush1.msra.mxu0 0.0
    %1809 = vmatprep.subr.mxu0 0.0
    %1810 = vmatpush1.msra.mxu0 0.0
    %1811 = vmatprep.subr.mxu0 0.0
    %1812 = vmatpush1.msra.mxu0 0.0
    %1813 = vmatprep.subr.mxu0 0.0
    %1814 = vmatpush1.msra.mxu0 0.0
    %1815 = vmatprep.subr.mxu0 0.0
    %1816 = vmatpush1.msra.mxu0 0.0
    %1817 = vmatprep.subr.mxu0 0.0
    %1818 = vmatpush1.msra.mxu0 0.0
    %1819 = vmatprep.subr.mxu0 0.0
    %1820 = vmatpush1.msra.mxu0 0.0
    %1821 = vmatprep.subr.mxu0 0.0
    %1822 = vmatpush1.msra.mxu0 0.0
    %1823 = vmatprep.subr.mxu0 0.0
    %1824 = vmatpush1.msra.mxu0 0.0
    %1825 = vmatprep.subr.mxu0 0.0
    %1826 = vmatpush1.msra.mxu0 0.0
    %1827 = vmatprep.subr.mxu0 0.0
    %1828 = vmatpush1.msra.mxu0 0.0
    %1829 = vmatprep.subr.mxu0 0.0
    %1830 = vmatpush1.msra.mxu0 0.0
    %1831 = vmatprep.subr.mxu0 0.0
    %1832 = vmatpush1.msra.mxu0 0.0
    %1833 = vmatprep.subr.mxu0 0.0
    %1834 = vmatpush1.msra.mxu0 0.0
    %1835 = vmatprep.subr.mxu0 0.0
    %1836 = vmatpush1.msra.mxu0 0.0
    %1837 = vmatprep.subr.mxu0 0.0
    %1838 = vmatpush1.msra.mxu0 0.0
    %1839 = vmatprep.subr.mxu0 0.0
    %1840 = vmatpush1.msra.mxu0 0.0
    %1841 = vmatprep.subr.mxu0 0.0
    %1842 = vmatpush1.msra.mxu0 0.0
    %1843 = vmatprep.subr.mxu0 0.0
    %1844 = vmatpush1.msra.mxu0 0.0
    %1845 = vmatprep.subr.mxu0 0.0
    %1846 = vmatpush1.msra.mxu0 0.0
    %1847 = vmatprep.subr.mxu0 0.0
    %1848 = vmatpush1.msra.mxu0 0.0
    %1849 = vmatprep.subr.mxu0 0.0
    %1850 = vmatpush1.msra.mxu0 0.0
    %1851 = vmatprep.subr.mxu0 0.0
    %1852 = vmatpush1.msra.mxu0 0.0
    %1853 = vmatprep.subr.mxu0 0.0
    %1854 = vmatpush1.msra.mxu0 0.0
    %1855 = vmatprep.subr.mxu0 0.0
    %1856 = vmatpush1.msra.mxu0 0.0
    %1857 = vmatprep.mubr.f32.mxu0 0.0
    %1858 = vmatmul.mubr.f32.gmra.mrb[0].mxu0 %v1630
    %v1859 = vpop.f32.mrb[0].mxu0
    %v1860 = vadd.f32 %v1792, %v1859
    %v1861 = vpop.f32.mrb[0].mxu0
    %1862 = vmatprep.mubr.f32.mxu0 0.0
    %1863 = vmatmul.mubr.f32.gmra.mrb[0].mxu0 %v1633
    %v1864 = vpop.f32.mrb[0].mxu0
    %v1865 = vadd.f32 %v1792, %v1864
    %v1866 = vpop.f32.mrb[0].mxu0
    %1867 = vdwg.mxu0
    %1868 = vmatprep.subr.mxu0 0.0
    %1869 = vmatpush1.msra.mxu0 %v1781
    %1870 = vmatprep.subr.mxu0 0.0
    %1871 = vmatpush1.msra.mxu0 %v1786
    %1872 = vmatprep.subr.mxu0 0.0
    %1873 = vmatpush1.msra.mxu0 0.0
    %1874 = vmatprep.subr.mxu0 0.0
    %1875 = vmatpush1.msra.mxu0 0.0
    %1876 = vmatprep.subr.mxu0 0.0
    %1877 = vmatpush1.msra.mxu0 0.0
    %1878 = vmatprep.subr.mxu0 0.0
    %1879 = vmatpush1.msra.mxu0 0.0
    %1880 = vmatprep.subr.mxu0 0.0
    %1881 = vmatpush1.msra.mxu0 0.0
    %1882 = vmatprep.subr.mxu0 0.0
    %1883 = vmatpush1.msra.mxu0 0.0
    %1884 = vmatprep.subr.mxu0 0.0
    %1885 = vmatpush1.msra.mxu0 0.0
    %1886 = vmatprep.subr.mxu0 0.0
    %1887 = vmatpush1.msra.mxu0 0.0
    %1888 = vmatprep.subr.mxu0 0.0
    %1889 = vmatpush1.msra.mxu0 0.0
    %1890 = vmatprep.subr.mxu0 0.0
    %1891 = vmatpush1.msra.mxu0 0.0
    %1892 = vmatprep.subr.mxu0 0.0
    %1893 = vmatpush1.msra.mxu0 0.0
    %1894 = vmatprep.subr.mxu0 0.0
    %1895 = vmatpush1.msra.mxu0 0.0
    %1896 = vmatprep.subr.mxu0 0.0
    %1897 = vmatpush1.msra.mxu0 0.0
    %1898 = vmatprep.subr.mxu0 0.0
    %1899 = vmatpush1.msra.mxu0 0.0
    %1900 = vmatprep.subr.mxu0 0.0
    %1901 = vmatpush1.msra.mxu0 0.0
    %1902 = vmatprep.subr.mxu0 0.0
    %1903 = vmatpush1.msra.mxu0 0.0
    %1904 = vmatprep.subr.mxu0 0.0
    %1905 = vmatpush1.msra.mxu0 0.0
    %1906 = vmatprep.subr.mxu0 0.0
    %1907 = vmatpush1.msra.mxu0 0.0
    %1908 = vmatprep.subr.mxu0 0.0
    %1909 = vmatpush1.msra.mxu0 0.0
    %1910 = vmatprep.subr.mxu0 0.0
    %1911 = vmatpush1.msra.mxu0 0.0
    %1912 = vmatprep.subr.mxu0 0.0
    %1913 = vmatpush1.msra.mxu0 0.0
    %1914 = vmatprep.subr.mxu0 0.0
    %1915 = vmatpush1.msra.mxu0 0.0
    %1916 = vmatprep.subr.mxu0 0.0
    %1917 = vmatpush1.msra.mxu0 0.0
    %1918 = vmatprep.subr.mxu0 0.0
    %1919 = vmatpush1.msra.mxu0 0.0
    %1920 = vmatprep.subr.mxu0 0.0
    %1921 = vmatpush1.msra.mxu0 0.0
    %1922 = vmatprep.subr.mxu0 0.0
    %1923 = vmatpush1.msra.mxu0 0.0
    %1924 = vmatprep.subr.mxu0 0.0
    %1925 = vmatpush1.msra.mxu0 0.0
    %1926 = vmatprep.subr.mxu0 0.0
    %1927 = vmatpush1.msra.mxu0 0.0
    %1928 = vmatprep.subr.mxu0 0.0
    %1929 = vmatpush1.msra.mxu0 0.0
    %1930 = vmatprep.subr.mxu0 0.0
    %1931 = vmatpush1.msra.mxu0 0.0
    %1932 = vmatprep.mubr.f32.mxu0 0.0
    %1933 = vmatmul.mubr.f32.gmra.mrb[0].mxu0 %v441
    %v1934 = vpop.f32.mrb[0].mxu0
    %v1935 = vadd.f32 0.0, %v1934
    %v1936 = vpop.f32.mrb[0].mxu0
    %1937 = vmatprep.mubr.f32.mxu0 0.0
    %1938 = vmatmul.mubr.f32.gmra.mrb[0].mxu0 %v444
    %v1939 = vpop.f32.mrb[0].mxu0
    %v1940 = vadd.f32 0.0, %v1939
    %v1941 = vpop.f32.mrb[0].mxu0
    %1942 = vdwg.mxu0
    %v1943 = vmul.f32 %v1702, %v1935
    %v1944 = vmul.f32 %v1707, %v1940
    %v1946 = vsel %vm199, %v1943, 0
    %v1949 = vsel %vm199, %v1944, 0
    %1951 = vmatprep.subr.mxu0 0.0
    %1952 = vmatpush1.msra.mxu0 %v33
    %1953 = vmatprep.subr.mxu0 0.0
    %1954 = vmatpush1.msra.mxu0 %v34
    %1955 = vmatprep.subr.mxu0 0.0
    %1956 = vmatpush1.msra.mxu0 %v35
    %1957 = vmatprep.subr.mxu0 0.0
    %1958 = vmatpush1.msra.mxu0 %v36
    %1959 = vmatprep.subr.mxu0 0.0
    %1960 = vmatpush1.msra.mxu0 0.0
    %1961 = vmatprep.subr.mxu0 0.0
    %1962 = vmatpush1.msra.mxu0 0.0
    %1963 = vmatprep.subr.mxu0 0.0
    %1964 = vmatpush1.msra.mxu0 0.0
    %1965 = vmatprep.subr.mxu0 0.0
    %1966 = vmatpush1.msra.mxu0 0.0
    %1967 = vmatprep.subr.mxu0 0.0
    %1968 = vmatpush1.msra.mxu0 0.0
    %1969 = vmatprep.subr.mxu0 0.0
    %1970 = vmatpush1.msra.mxu0 0.0
    %1971 = vmatprep.subr.mxu0 0.0
    %1972 = vmatpush1.msra.mxu0 0.0
    %1973 = vmatprep.subr.mxu0 0.0
    %1974 = vmatpush1.msra.mxu0 0.0
    %1975 = vmatprep.subr.mxu0 0.0
    %1976 = vmatpush1.msra.mxu0 0.0
    %1977 = vmatprep.subr.mxu0 0.0
    %1978 = vmatpush1.msra.mxu0 0.0
    %1979 = vmatprep.subr.mxu0 0.0
    %1980 = vmatpush1.msra.mxu0 0.0
    %1981 = vmatprep.subr.mxu0 0.0
    %1982 = vmatpush1.msra.mxu0 0.0
    %1983 = vmatprep.subr.mxu0 0.0
    %1984 = vmatpush1.msra.mxu0 0.0
    %1985 = vmatprep.subr.mxu0 0.0
    %1986 = vmatpush1.msra.mxu0 0.0
    %1987 = vmatprep.subr.mxu0 0.0
    %1988 = vmatpush1.msra.mxu0 0.0
    %1989 = vmatprep.subr.mxu0 0.0
    %1990 = vmatpush1.msra.mxu0 0.0
    %1991 = vmatprep.subr.mxu0 0.0
    %1992 = vmatpush1.msra.mxu0 0.0
    %1993 = vmatprep.subr.mxu0 0.0
    %1994 = vmatpush1.msra.mxu0 0.0
    %1995 = vmatprep.subr.mxu0 0.0
    %1996 = vmatpush1.msra.mxu0 0.0
    %1997 = vmatprep.subr.mxu0 0.0
    %1998 = vmatpush1.msra.mxu0 0.0
    %1999 = vmatprep.subr.mxu0 0.0
    %2000 = vmatpush1.msra.mxu0 0.0
    %2001 = vmatprep.subr.mxu0 0.0
    %2002 = vmatpush1.msra.mxu0 0.0
    %2003 = vmatprep.subr.mxu0 0.0
    %2004 = vmatpush1.msra.mxu0 0.0
    %2005 = vmatprep.subr.mxu0 0.0
    %2006 = vmatpush1.msra.mxu0 0.0
    %2007 = vmatprep.subr.mxu0 0.0
    %2008 = vmatpush1.msra.mxu0 0.0
    %2009 = vmatprep.subr.mxu0 0.0
    %2010 = vmatpush1.msra.mxu0 0.0
    %2011 = vmatprep.subr.mxu0 0.0
    %2012 = vmatpush1.msra.mxu0 0.0
    %2013 = vmatprep.subr.mxu0 0.0
    %2014 = vmatpush1.msra.mxu0 0.0
    %2015 = vmatprep.mubr.f32.mxu0 0.0
    %2016 = vmatmul.mubr.f32.gmra.mrb[0].mxu0 %v1946
    %v2017 = vpop.f32.mrb[0].mxu0
    %v2018 = vadd.f32 0.0, %v2017
    %v2019 = vpop.f32.mrb[0].mxu0
    %2020 = vmatprep.mubr.f32.mxu0 0.0
    %2021 = vmatmul.mubr.f32.gmra.mrb[0].mxu0 %v1949
    %v2022 = vpop.f32.mrb[0].mxu0
    %v2023 = vadd.f32 0.0, %v2022
    %v2024 = vpop.f32.mrb[0].mxu0
    %2025 = vdwg.mxu0
    %v2026 = vmul.f32 %v2018, 1.442695
    %v2027 = vpow.pop %v2026
    %v2028 = vmul.f32 %v2023, 1.442695
    %v2029 = vpow.pop %v2028
    %v2030 = vadd.f32 %v2027, 1.0
    %v2031 = vadd.f32 %v2029, 1.0
    %v2032 = vrcp.pop %v2030
    %v2033 = vrcp.pop %v2031
    %v2034 = vsub.f32 1.0, %v2032
    %v2035 = vsub.f32 1.0, %v2033
    %2036 = vmatprep.subr.mxu0 0.0
    %2037 = vmatpush1.msra.mxu0 %v1860
    %2038 = vmatprep.subr.mxu0 0.0
    %2039 = vmatpush1.msra.mxu0 %v1865
    %2040 = vmatprep.subr.mxu0 0.0
    %2041 = vmatpush1.msra.mxu0 0.0
    %2042 = vmatprep.subr.mxu0 0.0
    %2043 = vmatpush1.msra.mxu0 0.0
    %2044 = vmatprep.subr.mxu0 0.0
    %2045 = vmatpush1.msra.mxu0 0.0
    %2046 = vmatprep.subr.mxu0 0.0
    %2047 = vmatpush1.msra.mxu0 0.0
    %2048 = vmatprep.subr.mxu0 0.0
    %2049 = vmatpush1.msra.mxu0 0.0
    %2050 = vmatprep.subr.mxu0 0.0
    %2051 = vmatpush1.msra.mxu0 0.0
    %2052 = vmatprep.subr.mxu0 0.0
    %2053 = vmatpush1.msra.mxu0 0.0
    %2054 = vmatprep.subr.mxu0 0.0
    %2055 = vmatpush1.msra.mxu0 0.0
    %2056 = vmatprep.subr.mxu0 0.0
    %2057 = vmatpush1.msra.mxu0 0.0
    %2058 = vmatprep.subr.mxu0 0.0
    %2059 = vmatpush1.msra.mxu0 0.0
    %2060 = vmatprep.subr.mxu0 0.0
    %2061 = vmatpush1.msra.mxu0 0.0
    %2062 = vmatprep.subr.mxu0 0.0
    %2063 = vmatpush1.msra.mxu0 0.0
    %2064 = vmatprep.subr.mxu0 0.0
    %2065 = vmatpush1.msra.mxu0 0.0
    %2066 = vmatprep.subr.mxu0 0.0
    %2067 = vmatpush1.msra.mxu0 0.0
    %2068 = vmatprep.subr.mxu0 0.0
    %2069 = vmatpush1.msra.mxu0 0.0
    %2070 = vmatprep.subr.mxu0 0.0
    %2071 = vmatpush1.msra.mxu0 0.0
    %2072 = vmatprep.subr.mxu0 0.0
    %2073 = vmatpush1.msra.mxu0 0.0
    %2074 = vmatprep.subr.mxu0 0.0
    %2075 = vmatpush1.msra.mxu0 0.0
    %2076 = vmatprep.subr.mxu0 0.0
    %2077 = vmatpush1.msra.mxu0 0.0
    %2078 = vmatprep.subr.mxu0 0.0
    %2079 = vmatpush1.msra.mxu0 0.0
    %2080 = vmatprep.subr.mxu0 0.0
    %2081 = vmatpush1.msra.mxu0 0.0
    %2082 = vmatprep.subr.mxu0 0.0
    %2083 = vmatpush1.msra.mxu0 0.0
    %2084 = vmatprep.subr.mxu0 0.0
    %2085 = vmatpush1.msra.mxu0 0.0
    %2086 = vmatprep.subr.mxu0 0.0
    %2087 = vmatpush1.msra.mxu0 0.0
    %2088 = vmatprep.subr.mxu0 0.0
    %2089 = vmatpush1.msra.mxu0 0.0
    %2090 = vmatprep.subr.mxu0 0.0
    %2091 = vmatpush1.msra.mxu0 0.0
    %2092 = vmatprep.subr.mxu0 0.0
    %2093 = vmatpush1.msra.mxu0 0.0
    %2094 = vmatprep.subr.mxu0 0.0
    %2095 = vmatpush1.msra.mxu0 0.0
    %2096 = vmatprep.subr.mxu0 0.0
    %2097 = vmatpush1.msra.mxu0 0.0
    %2098 = vmatprep.subr.mxu0 0.0
    %2099 = vmatpush1.msra.mxu0 0.0
    %2100 = vmatprep.mubr.f32.mxu0 0.0
    %2101 = vmatmul.mubr.f32.gmra.mrb[0].mxu0 %v615
    %v2102 = vpop.f32.mrb[0].mxu0
    %v2103 = vadd.f32 0.0, %v2102
    %v2104 = vpop.f32.mrb[0].mxu0
    %2105 = vmatprep.mubr.f32.mxu0 0.0
    %2106 = vmatmul.mubr.f32.gmra.mrb[0].mxu0 %v618
    %v2107 = vpop.f32.mrb[0].mxu0
    %v2108 = vadd.f32 0.0, %v2107
    %v2109 = vpop.f32.mrb[0].mxu0
    %2110 = vdwg.mxu0
    %2111 = vmatprep.subr.mxu0 0.0
    %2112 = vmatpush1.msra.mxu0 %v1860
    %2113 = vmatprep.subr.mxu0 0.0
    %2114 = vmatpush1.msra.mxu0 %v1865
    %2115 = vmatprep.subr.mxu0 0.0
    %2116 = vmatpush1.msra.mxu0 0.0
    %2117 = vmatprep.subr.mxu0 0.0
    %2118 = vmatpush1.msra.mxu0 0.0
    %2119 = vmatprep.subr.mxu0 0.0
    %2120 = vmatpush1.msra.mxu0 0.0
    %2121 = vmatprep.subr.mxu0 0.0
    %2122 = vmatpush1.msra.mxu0 0.0
    %2123 = vmatprep.subr.mxu0 0.0
    %2124 = vmatpush1.msra.mxu0 0.0
    %2125 = vmatprep.subr.mxu0 0.0
    %2126 = vmatpush1.msra.mxu0 0.0
    %2127 = vmatprep.subr.mxu0 0.0
    %2128 = vmatpush1.msra.mxu0 0.0
    %2129 = vmatprep.subr.mxu0 0.0
    %2130 = vmatpush1.msra.mxu0 0.0
    %2131 = vmatprep.subr.mxu0 0.0
    %2132 = vmatpush1.msra.mxu0 0.0
    %2133 = vmatprep.subr.mxu0 0.0
    %2134 = vmatpush1.msra.mxu0 0.0
    %2135 = vmatprep.subr.mxu0 0.0
    %2136 = vmatpush1.msra.mxu0 0.0
    %2137 = vmatprep.subr.mxu0 0.0
    %2138 = vmatpush1.msra.mxu0 0.0
    %2139 = vmatprep.subr.mxu0 0.0
    %2140 = vmatpush1.msra.mxu0 0.0
    %2141 = vmatprep.subr.mxu0 0.0
    %2142 = vmatpush1.msra.mxu0 0.0
    %2143 = vmatprep.subr.mxu0 0.0
    %2144 = vmatpush1.msra.mxu0 0.0
    %2145 = vmatprep.subr.mxu0 0.0
    %2146 = vmatpush1.msra.mxu0 0.0
    %2147 = vmatprep.subr.mxu0 0.0
    %2148 = vmatpush1.msra.mxu0 0.0
    %2149 = vmatprep.subr.mxu0 0.0
    %2150 = vmatpush1.msra.mxu0 0.0
    %2151 = vmatprep.subr.mxu0 0.0
    %2152 = vmatpush1.msra.mxu0 0.0
    %2153 = vmatprep.subr.mxu0 0.0
    %2154 = vmatpush1.msra.mxu0 0.0
    %2155 = vmatprep.subr.mxu0 0.0
    %2156 = vmatpush1.msra.mxu0 0.0
    %2157 = vmatprep.subr.mxu0 0.0
    %2158 = vmatpush1.msra.mxu0 0.0
    %2159 = vmatprep.subr.mxu0 0.0
    %2160 = vmatpush1.msra.mxu0 0.0
    %2161 = vmatprep.subr.mxu0 0.0
    %2162 = vmatpush1.msra.mxu0 0.0
    %2163 = vmatprep.subr.mxu0 0.0
    %2164 = vmatpush1.msra.mxu0 0.0
    %2165 = vmatprep.subr.mxu0 0.0
    %2166 = vmatpush1.msra.mxu0 0.0
    %2167 = vmatprep.subr.mxu0 0.0
    %2168 = vmatpush1.msra.mxu0 0.0
    %2169 = vmatprep.subr.mxu0 0.0
    %2170 = vmatpush1.msra.mxu0 0.0
    %2171 = vmatprep.subr.mxu0 0.0
    %2172 = vmatpush1.msra.mxu0 0.0
    %2173 = vmatprep.subr.mxu0 0.0
    %2174 = vmatpush1.msra.mxu0 0.0
    %2175 = vmatprep.mubr.f32.mxu0 0.0
    %2176 = vmatmul.mubr.f32.gmra.mrb[0].mxu0 %v696
    %v2177 = vpop.f32.mrb[0].mxu0
    %v2178 = vadd.f32 0.0, %v2177
    %v2179 = vpop.f32.mrb[0].mxu0
    %2180 = vmatprep.mubr.f32.mxu0 0.0
    %2181 = vmatmul.mubr.f32.gmra.mrb[0].mxu0 %v699
    %v2182 = vpop.f32.mrb[0].mxu0
    %v2183 = vadd.f32 0.0, %v2182
    %v2184 = vpop.f32.mrb[0].mxu0
    %2185 = vdwg.mxu0
    %v2187 = vsel %vm776, %v2034, 0
    %v2190 = vsel %vm776, %v2035, 0
    %2192 = vmatprep.subr.mxu0 0.0
    %2193 = vmatpush1.msra.mxu0 %v785
    %2194 = vmatprep.subr.mxu0 0.0
    %2195 = vmatpush1.msra.mxu0 0.0
    %2196 = vmatprep.subr.mxu0 0.0
    %2197 = vmatpush1.msra.mxu0 0.0
    %2198 = vmatprep.subr.mxu0 0.0
    %2199 = vmatpush1.msra.mxu0 0.0
    %2200 = vmatprep.subr.mxu0 0.0
    %2201 = vmatpush1.msra.mxu0 0.0
    %2202 = vmatprep.subr.mxu0 0.0
    %2203 = vmatpush1.msra.mxu0 0.0
    %2204 = vmatprep.subr.mxu0 0.0
    %2205 = vmatpush1.msra.mxu0 0.0
    %2206 = vmatprep.subr.mxu0 0.0
    %2207 = vmatpush1.msra.mxu0 0.0
    %2208 = vmatprep.subr.mxu0 0.0
    %2209 = vmatpush1.msra.mxu0 0.0
    %2210 = vmatprep.subr.mxu0 0.0
    %2211 = vmatpush1.msra.mxu0 0.0
    %2212 = vmatprep.subr.mxu0 0.0
    %2213 = vmatpush1.msra.mxu0 0.0
    %2214 = vmatprep.subr.mxu0 0.0
    %2215 = vmatpush1.msra.mxu0 0.0
    %2216 = vmatprep.subr.mxu0 0.0
    %2217 = vmatpush1.msra.mxu0 0.0
    %2218 = vmatprep.subr.mxu0 0.0
    %2219 = vmatpush1.msra.mxu0 0.0
    %2220 = vmatprep.subr.mxu0 0.0
    %2221 = vmatpush1.msra.mxu0 0.0
    %2222 = vmatprep.subr.mxu0 0.0
    %2223 = vmatpush1.msra.mxu0 0.0
    %2224 = vmatprep.subr.mxu0 0.0
    %2225 = vmatpush1.msra.mxu0 0.0
    %2226 = vmatprep.subr.mxu0 0.0
    %2227 = vmatpush1.msra.mxu0 0.0
    %2228 = vmatprep.subr.mxu0 0.0
    %2229 = vmatpush1.msra.mxu0 0.0
    %2230 = vmatprep.subr.mxu0 0.0
    %2231 = vmatpush1.msra.mxu0 0.0
    %2232 = vmatprep.subr.mxu0 0.0
    %2233 = vmatpush1.msra.mxu0 0.0
    %2234 = vmatprep.subr.mxu0 0.0
    %2235 = vmatpush1.msra.mxu0 0.0
    %2236 = vmatprep.subr.mxu0 0.0
    %2237 = vmatpush1.msra.mxu0 0.0
    %2238 = vmatprep.subr.mxu0 0.0
    %2239 = vmatpush1.msra.mxu0 0.0
    %2240 = vmatprep.subr.mxu0 0.0
    %2241 = vmatpush1.msra.mxu0 0.0
    %2242 = vmatprep.subr.mxu0 0.0
    %2243 = vmatpush1.msra.mxu0 0.0
    %2244 = vmatprep.subr.mxu0 0.0
    %2245 = vmatpush1.msra.mxu0 0.0
    %2246 = vmatprep.subr.mxu0 0.0
    %2247 = vmatpush1.msra.mxu0 0.0
    %2248 = vmatprep.subr.mxu0 0.0
    %2249 = vmatpush1.msra.mxu0 0.0
    %2250 = vmatprep.subr.mxu0 0.0
    %2251 = vmatpush1.msra.mxu0 0.0
    %2252 = vmatprep.subr.mxu0 0.0
    %2253 = vmatpush1.msra.mxu0 0.0
    %2254 = vmatprep.subr.mxu0 0.0
    %2255 = vmatpush1.msra.mxu0 0.0
    %2256 = vmatprep.mubr.f32.mxu0 0.0
    %2257 = vmatmul.mubr.f32.gmra.mrb[0].mxu0 %v2187
    %v2258 = vpop.f32.mrb[0].mxu0
    %v2259 = vadd.f32 0.0, %v2258
    %v2260 = vpop.f32.mrb[0].mxu0
    %2261 = vmatprep.mubr.f32.mxu0 0.0
    %2262 = vmatmul.mubr.f32.gmra.mrb[0].mxu0 %v2190
    %v2263 = vpop.f32.mrb[0].mxu0
    %v2264 = vadd.f32 0.0, %v2263
    %v2265 = vpop.f32.mrb[0].mxu0
    %2266 = vdwg.mxu0
    %v2267 = vmul.f32 %v2259, %v2103
    %v2268 = vmul.f32 %v2264, %v2108
    %v2270 = vsel %vm776, %v2032, 0
    %v2273 = vsel %vm776, %v2033, 0
    %2275 = vmatprep.subr.mxu0 0.0
    %2276 = vmatpush1.msra.mxu0 %v785
    %2277 = vmatprep.subr.mxu0 0.0
    %2278 = vmatpush1.msra.mxu0 0.0
    %2279 = vmatprep.subr.mxu0 0.0
    %2280 = vmatpush1.msra.mxu0 0.0
    %2281 = vmatprep.subr.mxu0 0.0
    %2282 = vmatpush1.msra.mxu0 0.0
    %2283 = vmatprep.subr.mxu0 0.0
    %2284 = vmatpush1.msra.mxu0 0.0
    %2285 = vmatprep.subr.mxu0 0.0
    %2286 = vmatpush1.msra.mxu0 0.0
    %2287 = vmatprep.subr.mxu0 0.0
    %2288 = vmatpush1.msra.mxu0 0.0
    %2289 = vmatprep.subr.mxu0 0.0
    %2290 = vmatpush1.msra.mxu0 0.0
    %2291 = vmatprep.subr.mxu0 0.0
    %2292 = vmatpush1.msra.mxu0 0.0
    %2293 = vmatprep.subr.mxu0 0.0
    %2294 = vmatpush1.msra.mxu0 0.0
    %2295 = vmatprep.subr.mxu0 0.0
    %2296 = vmatpush1.msra.mxu0 0.0
    %2297 = vmatprep.subr.mxu0 0.0
    %2298 = vmatpush1.msra.mxu0 0.0
    %2299 = vmatprep.subr.mxu0 0.0
    %2300 = vmatpush1.msra.mxu0 0.0
    %2301 = vmatprep.subr.mxu0 0.0
    %2302 = vmatpush1.msra.mxu0 0.0
    %2303 = vmatprep.subr.mxu0 0.0
    %2304 = vmatpush1.msra.mxu0 0.0
    %2305 = vmatprep.subr.mxu0 0.0
    %2306 = vmatpush1.msra.mxu0 0.0
    %2307 = vmatprep.subr.mxu0 0.0
    %2308 = vmatpush1.msra.mxu0 0.0
    %2309 = vmatprep.subr.mxu0 0.0
    %2310 = vmatpush1.msra.mxu0 0.0
    %2311 = vmatprep.subr.mxu0 0.0
    %2312 = vmatpush1.msra.mxu0 0.0
    %2313 = vmatprep.subr.mxu0 0.0
    %2314 = vmatpush1.msra.mxu0 0.0
    %2315 = vmatprep.subr.mxu0 0.0
    %2316 = vmatpush1.msra.mxu0 0.0
    %2317 = vmatprep.subr.mxu0 0.0
    %2318 = vmatpush1.msra.mxu0 0.0
    %2319 = vmatprep.subr.mxu0 0.0
    %2320 = vmatpush1.msra.mxu0 0.0
    %2321 = vmatprep.subr.mxu0 0.0
    %2322 = vmatpush1.msra.mxu0 0.0
    %2323 = vmatprep.subr.mxu0 0.0
    %2324 = vmatpush1.msra.mxu0 0.0
    %2325 = vmatprep.subr.mxu0 0.0
    %2326 = vmatpush1.msra.mxu0 0.0
    %2327 = vmatprep.subr.mxu0 0.0
    %2328 = vmatpush1.msra.mxu0 0.0
    %2329 = vmatprep.subr.mxu0 0.0
    %2330 = vmatpush1.msra.mxu0 0.0
    %2331 = vmatprep.subr.mxu0 0.0
    %2332 = vmatpush1.msra.mxu0 0.0
    %2333 = vmatprep.subr.mxu0 0.0
    %2334 = vmatpush1.msra.mxu0 0.0
    %2335 = vmatprep.subr.mxu0 0.0
    %2336 = vmatpush1.msra.mxu0 0.0
    %2337 = vmatprep.subr.mxu0 0.0
    %2338 = vmatpush1.msra.mxu0 0.0
    %2339 = vmatprep.mubr.f32.mxu0 0.0
    %2340 = vmatmul.mubr.f32.gmra.mrb[0].mxu0 %v2270
    %v2341 = vpop.f32.mrb[0].mxu0
    %v2342 = vadd.f32 0.0, %v2341
    %v2343 = vpop.f32.mrb[0].mxu0
    %2344 = vmatprep.mubr.f32.mxu0 0.0
    %2345 = vmatmul.mubr.f32.gmra.mrb[0].mxu0 %v2273
    %v2346 = vpop.f32.mrb[0].mxu0
    %v2347 = vadd.f32 0.0, %v2346
    %v2348 = vpop.f32.mrb[0].mxu0
    %2349 = vdwg.mxu0
    %v2350 = vmul.f32 %v2342, %v2178
    %v2351 = vmul.f32 %v2347, %v2183
    %v2352 = vadd.f32 %v2267, %v2350
    %v2353 = vadd.f32 %v2268, %v2351
    %v2354 = vlaneseq
    %v2355 = vshrl.u32 %v2354, 7
    %v2356 = vsub.s32 0, %v2355
    %v2357 = vrot.slane %v1618, %v2356
    %v2359 = vsel %vm199, %v2352, 0
    %v2362 = vsel %vm199, %v2353, 0
    %2364 = vmatprep.subr.mxu0 0.0
    %2365 = vmatpush1.msra.mxu0 %v1599
    %2366 = vmatprep.subr.mxu0 0.0
    %2367 = vmatpush1.msra.mxu0 %v1600
    %2368 = vmatprep.subr.mxu0 0.0
    %2369 = vmatpush1.msra.mxu0 %v1601
    %2370 = vmatprep.subr.mxu0 0.0
    %2371 = vmatpush1.msra.mxu0 %v1602
    %2372 = vmatprep.subr.mxu0 0.0
    %2373 = vmatpush1.msra.mxu0 0.0
    %2374 = vmatprep.subr.mxu0 0.0
    %2375 = vmatpush1.msra.mxu0 0.0
    %2376 = vmatprep.subr.mxu0 0.0
    %2377 = vmatpush1.msra.mxu0 0.0
    %2378 = vmatprep.subr.mxu0 0.0
    %2379 = vmatpush1.msra.mxu0 0.0
    %2380 = vmatprep.subr.mxu0 0.0
    %2381 = vmatpush1.msra.mxu0 0.0
    %2382 = vmatprep.subr.mxu0 0.0
    %2383 = vmatpush1.msra.mxu0 0.0
    %2384 = vmatprep.subr.mxu0 0.0
    %2385 = vmatpush1.msra.mxu0 0.0
    %2386 = vmatprep.subr.mxu0 0.0
    %2387 = vmatpush1.msra.mxu0 0.0
    %2388 = vmatprep.subr.mxu0 0.0
    %2389 = vmatpush1.msra.mxu0 0.0
    %2390 = vmatprep.subr.mxu0 0.0
    %2391 = vmatpush1.msra.mxu0 0.0
    %2392 = vmatprep.subr.mxu0 0.0
    %2393 = vmatpush1.msra.mxu0 0.0
    %2394 = vmatprep.subr.mxu0 0.0
    %2395 = vmatpush1.msra.mxu0 0.0
    %2396 = vmatprep.subr.mxu0 0.0
    %2397 = vmatpush1.msra.mxu0 0.0
    %2398 = vmatprep.subr.mxu0 0.0
    %2399 = vmatpush1.msra.mxu0 0.0
    %2400 = vmatprep.subr.mxu0 0.0
    %2401 = vmatpush1.msra.mxu0 0.0
    %2402 = vmatprep.subr.mxu0 0.0
    %2403 = vmatpush1.msra.mxu0 0.0
    %2404 = vmatprep.subr.mxu0 0.0
    %2405 = vmatpush1.msra.mxu0 0.0
    %2406 = vmatprep.subr.mxu0 0.0
    %2407 = vmatpush1.msra.mxu0 0.0
    %2408 = vmatprep.subr.mxu0 0.0
    %2409 = vmatpush1.msra.mxu0 0.0
    %2410 = vmatprep.subr.mxu0 0.0
    %2411 = vmatpush1.msra.mxu0 0.0
    %2412 = vmatprep.subr.mxu0 0.0
    %2413 = vmatpush1.msra.mxu0 0.0
    %2414 = vmatprep.subr.mxu0 0.0
    %2415 = vmatpush1.msra.mxu0 0.0
    %2416 = vmatprep.subr.mxu0 0.0
    %2417 = vmatpush1.msra.mxu0 0.0
    %2418 = vmatprep.subr.mxu0 0.0
    %2419 = vmatpush1.msra.mxu0 0.0
    %2420 = vmatprep.subr.mxu0 0.0
    %2421 = vmatpush1.msra.mxu0 0.0
    %2422 = vmatprep.subr.mxu0 0.0
    %2423 = vmatpush1.msra.mxu0 0.0
    %2424 = vmatprep.subr.mxu0 0.0
    %2425 = vmatpush1.msra.mxu0 0.0
    %2426 = vmatprep.subr.mxu0 0.0
    %2427 = vmatpush1.msra.mxu0 0.0
    %2428 = vmatprep.mubr.f32.mxu0 0.0
    %2429 = vmatmul.mubr.f32.gmra.mrb[0].mxu0 %v2359
    %v2430 = vpop.f32.mrb[0].mxu0
    %v2431 = vadd.f32 %v2357, %v2430
    %v2432 = vpop.f32.mrb[0].mxu0
    %2433 = vmatprep.mubr.f32.mxu0 0.0
    %2434 = vmatmul.mubr.f32.gmra.mrb[0].mxu0 %v2362
    %v2435 = vpop.f32.mrb[0].mxu0
    %v2436 = vadd.f32 %v2357, %v2435
    %v2437 = vpop.f32.mrb[0].mxu0
    %2438 = vdwg.mxu0
    %v2439 = vadd.f32 %v1585, %v2431
    %v2440 = vadd.f32 %v1586, %v2436
    %v2442 = vsel %vm199, %v2439, 0
    %v2445 = vsel %vm199, %v2440, 0
    %2447 = vmatprep.subr.mxu0 0.0
    %2448 = vmatpush1.msra.mxu0 %v21
    %2449 = vmatprep.subr.mxu0 0.0
    %2450 = vmatpush1.msra.mxu0 %v22
    %2451 = vmatprep.subr.mxu0 0.0
    %2452 = vmatpush1.msra.mxu0 %v23
    %2453 = vmatprep.subr.mxu0 0.0
    %2454 = vmatpush1.msra.mxu0 %v24
    %2455 = vmatprep.subr.mxu0 0.0
    %2456 = vmatpush1.msra.mxu0 0.0
    %2457 = vmatprep.subr.mxu0 0.0
    %2458 = vmatpush1.msra.mxu0 0.0
    %2459 = vmatprep.subr.mxu0 0.0
    %2460 = vmatpush1.msra.mxu0 0.0
    %2461 = vmatprep.subr.mxu0 0.0
    %2462 = vmatpush1.msra.mxu0 0.0
    %2463 = vmatprep.subr.mxu0 0.0
    %2464 = vmatpush1.msra.mxu0 0.0
    %2465 = vmatprep.subr.mxu0 0.0
    %2466 = vmatpush1.msra.mxu0 0.0
    %2467 = vmatprep.subr.mxu0 0.0
    %2468 = vmatpush1.msra.mxu0 0.0
    %2469 = vmatprep.subr.mxu0 0.0
    %2470 = vmatpush1.msra.mxu0 0.0
    %2471 = vmatprep.subr.mxu0 0.0
    %2472 = vmatpush1.msra.mxu0 0.0
    %2473 = vmatprep.subr.mxu0 0.0
    %2474 = vmatpush1.msra.mxu0 0.0
    %2475 = vmatprep.subr.mxu0 0.0
    %2476 = vmatpush1.msra.mxu0 0.0
    %2477 = vmatprep.subr.mxu0 0.0
    %2478 = vmatpush1.msra.mxu0 0.0
    %2479 = vmatprep.subr.mxu0 0.0
    %2480 = vmatpush1.msra.mxu0 0.0
    %2481 = vmatprep.subr.mxu0 0.0
    %2482 = vmatpush1.msra.mxu0 0.0
    %2483 = vmatprep.subr.mxu0 0.0
    %2484 = vmatpush1.msra.mxu0 0.0
    %2485 = vmatprep.subr.mxu0 0.0
    %2486 = vmatpush1.msra.mxu0 0.0
    %2487 = vmatprep.subr.mxu0 0.0
    %2488 = vmatpush1.msra.mxu0 0.0
    %2489 = vmatprep.subr.mxu0 0.0
    %2490 = vmatpush1.msra.mxu0 0.0
    %2491 = vmatprep.subr.mxu0 0.0
    %2492 = vmatpush1.msra.mxu0 0.0
    %2493 = vmatprep.subr.mxu0 0.0
    %2494 = vmatpush1.msra.mxu0 0.0
    %2495 = vmatprep.subr.mxu0 0.0
    %2496 = vmatpush1.msra.mxu0 0.0
    %2497 = vmatprep.subr.mxu0 0.0
    %2498 = vmatpush1.msra.mxu0 0.0
    %2499 = vmatprep.subr.mxu0 0.0
    %2500 = vmatpush1.msra.mxu0 0.0
    %2501 = vmatprep.subr.mxu0 0.0
    %2502 = vmatpush1.msra.mxu0 0.0
    %2503 = vmatprep.subr.mxu0 0.0
    %2504 = vmatpush1.msra.mxu0 0.0
    %2505 = vmatprep.subr.mxu0 0.0
    %2506 = vmatpush1.msra.mxu0 0.0
    %2507 = vmatprep.subr.mxu0 0.0
    %2508 = vmatpush1.msra.mxu0 0.0
    %2509 = vmatprep.subr.mxu0 0.0
    %2510 = vmatpush1.msra.mxu0 0.0
    %2511 = vmatprep.mubr.f32.mxu0 0.0
    %2512 = vmatmul.mubr.f32.gmra.mrb[0].mxu0 %v2442
    %v2513 = vpop.f32.mrb[0].mxu0
    %v2514 = vadd.f32 0.0, %v2513
    %v2515 = vpop.f32.mrb[0].mxu0
    %2516 = vmatprep.mubr.f32.mxu0 0.0
    %2517 = vmatmul.mubr.f32.gmra.mrb[0].mxu0 %v2445
    %v2518 = vpop.f32.mrb[0].mxu0
    %v2519 = vadd.f32 0.0, %v2518
    %v2520 = vpop.f32.mrb[0].mxu0
    %2521 = vdwg.mxu0
    %v2522 = vmul.f32 %v2439, %v2439
    %v2523 = vmul.f32 %v2440, %v2440
    %v2525 = vsel %vm199, %v2522, 0
    %v2528 = vsel %vm199, %v2523, 0
    %2530 = vmatprep.subr.mxu0 0.0
    %2531 = vmatpush1.msra.mxu0 %v21
    %2532 = vmatprep.subr.mxu0 0.0
    %2533 = vmatpush1.msra.mxu0 %v22
    %2534 = vmatprep.subr.mxu0 0.0
    %2535 = vmatpush1.msra.mxu0 %v23
    %2536 = vmatprep.subr.mxu0 0.0
    %2537 = vmatpush1.msra.mxu0 %v24
    %2538 = vmatprep.subr.mxu0 0.0
    %2539 = vmatpush1.msra.mxu0 0.0
    %2540 = vmatprep.subr.mxu0 0.0
    %2541 = vmatpush1.msra.mxu0 0.0
    %2542 = vmatprep.subr.mxu0 0.0
    %2543 = vmatpush1.msra.mxu0 0.0
    %2544 = vmatprep.subr.mxu0 0.0
    %2545 = vmatpush1.msra.mxu0 0.0
    %2546 = vmatprep.subr.mxu0 0.0
    %2547 = vmatpush1.msra.mxu0 0.0
    %2548 = vmatprep.subr.mxu0 0.0
    %2549 = vmatpush1.msra.mxu0 0.0
    %2550 = vmatprep.subr.mxu0 0.0
    %2551 = vmatpush1.msra.mxu0 0.0
    %2552 = vmatprep.subr.mxu0 0.0
    %2553 = vmatpush1.msra.mxu0 0.0
    %2554 = vmatprep.subr.mxu0 0.0
    %2555 = vmatpush1.msra.mxu0 0.0
    %2556 = vmatprep.subr.mxu0 0.0
    %2557 = vmatpush1.msra.mxu0 0.0
    %2558 = vmatprep.subr.mxu0 0.0
    %2559 = vmatpush1.msra.mxu0 0.0
    %2560 = vmatprep.subr.mxu0 0.0
    %2561 = vmatpush1.msra.mxu0 0.0
    %2562 = vmatprep.subr.mxu0 0.0
    %2563 = vmatpush1.msra.mxu0 0.0
    %2564 = vmatprep.subr.mxu0 0.0
    %2565 = vmatpush1.msra.mxu0 0.0
    %2566 = vmatprep.subr.mxu0 0.0
    %2567 = vmatpush1.msra.mxu0 0.0
    %2568 = vmatprep.subr.mxu0 0.0
    %2569 = vmatpush1.msra.mxu0 0.0
    %2570 = vmatprep.subr.mxu0 0.0
    %2571 = vmatpush1.msra.mxu0 0.0
    %2572 = vmatprep.subr.mxu0 0.0
    %2573 = vmatpush1.msra.mxu0 0.0
    %2574 = vmatprep.subr.mxu0 0.0
    %2575 = vmatpush1.msra.mxu0 0.0
    %2576 = vmatprep.subr.mxu0 0.0
    %2577 = vmatpush1.msra.mxu0 0.0
    %2578 = vmatprep.subr.mxu0 0.0
    %2579 = vmatpush1.msra.mxu0 0.0
    %2580 = vmatprep.subr.mxu0 0.0
    %2581 = vmatpush1.msra.mxu0 0.0
    %2582 = vmatprep.subr.mxu0 0.0
    %2583 = vmatpush1.msra.mxu0 0.0
    %2584 = vmatprep.subr.mxu0 0.0
    %2585 = vmatpush1.msra.mxu0 0.0
    %2586 = vmatprep.subr.mxu0 0.0
    %2587 = vmatpush1.msra.mxu0 0.0
    %2588 = vmatprep.subr.mxu0 0.0
    %2589 = vmatpush1.msra.mxu0 0.0
    %2590 = vmatprep.subr.mxu0 0.0
    %2591 = vmatpush1.msra.mxu0 0.0
    %2592 = vmatprep.subr.mxu0 0.0
    %2593 = vmatpush1.msra.mxu0 0.0
    %2594 = vmatprep.mubr.f32.mxu0 0.0
    %2595 = vmatmul.mubr.f32.gmra.mrb[0].mxu0 %v2525
    %v2596 = vpop.f32.mrb[0].mxu0
    %v2597 = vadd.f32 0.0, %v2596
    %v2598 = vpop.f32.mrb[0].mxu0
    %2599 = vmatprep.mubr.f32.mxu0 0.0
    %2600 = vmatmul.mubr.f32.gmra.mrb[0].mxu0 %v2528
    %v2601 = vpop.f32.mrb[0].mxu0
    %v2602 = vadd.f32 0.0, %v2601
    %v2603 = vpop.f32.mrb[0].mxu0
    %2604 = vdwg.mxu0
    %v2605 = vmul.f32 %v2514, %v2514
    %v2606 = vmul.f32 %v2519, %v2519
    %v2607 = vsub.f32 %v2597, %v2605
    %v2608 = vsub.f32 %v2602, %v2606
    %v2609 = vsub.f32 %v2439, %v2514
    %v2610 = vsub.f32 %v2440, %v2519
    %v2611 = vadd.f32 %v2607, 1e-05
    %v2612 = vadd.f32 %v2608, 1e-05
    %v2613 = vrsqrt.pop %v2611
    %v2614 = vrsqrt.pop %v2612
    %v2615 = vmul.f32 %v2609, %v2613
    %v2616 = vmul.f32 %v2610, %v2614
    %v2617 = vlaneseq
    %v2618 = vshrl.u32 %v2617, 7
    %v2619 = vsub.s32 0, %v2618
    %v2620 = vrot.slane %v1621, %v2619
    %v2621 = vmul.f32 %v2615, %v2620
    %v2622 = vmul.f32 %v2616, %v2620
    %v2623 = vlaneseq
    %v2624 = vshrl.u32 %v2623, 7
    %v2625 = vsub.s32 0, %v2624
    %v2626 = vrot.slane %v1622, %v2625
    %v2627 = vadd.f32 %v2621, %v2626
    %v2628 = vadd.f32 %v2622, %v2626
    %v2629 = vlaneseq
    %v2630 = vshrl.u32 %v2629, 7
    %v2631 = vsub.s32 0, %v2630
    %v2632 = vrot.slane %v1619, %v2631
    %v2634 = vsel %vm199, %v2627, 0
    %v2637 = vsel %vm199, %v2628, 0
    %2639 = vmatprep.subr.mxu0 0.0
    %2640 = vmatpush1.msra.mxu0 %v1603
    %2641 = vmatprep.subr.mxu0 0.0
    %2642 = vmatpush1.msra.mxu0 %v1604
    %2643 = vmatprep.subr.mxu0 0.0
    %2644 = vmatpush1.msra.mxu0 %v1605
    %2645 = vmatprep.subr.mxu0 0.0
    %2646 = vmatpush1.msra.mxu0 %v1606
    %2647 = vmatprep.subr.mxu0 0.0
    %2648 = vmatpush1.msra.mxu0 0.0
    %2649 = vmatprep.subr.mxu0 0.0
    %2650 = vmatpush1.msra.mxu0 0.0
    %2651 = vmatprep.subr.mxu0 0.0
    %2652 = vmatpush1.msra.mxu0 0.0
    %2653 = vmatprep.subr.mxu0 0.0
    %2654 = vmatpush1.msra.mxu0 0.0
    %2655 = vmatprep.subr.mxu0 0.0
    %2656 = vmatpush1.msra.mxu0 0.0
    %2657 = vmatprep.subr.mxu0 0.0
    %2658 = vmatpush1.msra.mxu0 0.0
    %2659 = vmatprep.subr.mxu0 0.0
    %2660 = vmatpush1.msra.mxu0 0.0
    %2661 = vmatprep.subr.mxu0 0.0
    %2662 = vmatpush1.msra.mxu0 0.0
    %2663 = vmatprep.subr.mxu0 0.0
    %2664 = vmatpush1.msra.mxu0 0.0
    %2665 = vmatprep.subr.mxu0 0.0
    %2666 = vmatpush1.msra.mxu0 0.0
    %2667 = vmatprep.subr.mxu0 0.0
    %2668 = vmatpush1.msra.mxu0 0.0
    %2669 = vmatprep.subr.mxu0 0.0
    %2670 = vmatpush1.msra.mxu0 0.0
    %2671 = vmatprep.subr.mxu0 0.0
    %2672 = vmatpush1.msra.mxu0 0.0
    %2673 = vmatprep.subr.mxu0 0.0
    %2674 = vmatpush1.msra.mxu0 0.0
    %2675 = vmatprep.subr.mxu0 0.0
    %2676 = vmatpush1.msra.mxu0 0.0
    %2677 = vmatprep.subr.mxu0 0.0
    %2678 = vmatpush1.msra.mxu0 0.0
    %2679 = vmatprep.subr.mxu0 0.0
    %2680 = vmatpush1.msra.mxu0 0.0
    %2681 = vmatprep.subr.mxu0 0.0
    %2682 = vmatpush1.msra.mxu0 0.0
    %2683 = vmatprep.subr.mxu0 0.0
    %2684 = vmatpush1.msra.mxu0 0.0
    %2685 = vmatprep.subr.mxu0 0.0
    %2686 = vmatpush1.msra.mxu0 0.0
    %2687 = vmatprep.subr.mxu0 0.0
    %2688 = vmatpush1.msra.mxu0 0.0
    %2689 = vmatprep.subr.mxu0 0.0
    %2690 = vmatpush1.msra.mxu0 0.0
    %2691 = vmatprep.subr.mxu0 0.0
    %2692 = vmatpush1.msra.mxu0 0.0
    %2693 = vmatprep.subr.mxu0 0.0
    %2694 = vmatpush1.msra.mxu0 0.0
    %2695 = vmatprep.subr.mxu0 0.0
    %2696 = vmatpush1.msra.mxu0 0.0
    %2697 = vmatprep.subr.mxu0 0.0
    %2698 = vmatpush1.msra.mxu0 0.0
    %2699 = vmatprep.subr.mxu0 0.0
    %2700 = vmatpush1.msra.mxu0 0.0
    %2701 = vmatprep.subr.mxu0 0.0
    %2702 = vmatpush1.msra.mxu0 0.0
    %2703 = vmatprep.mubr.f32.mxu0 0.0
    %2704 = vmatmul.mubr.f32.gmra.mrb[0].mxu0 %v2634
    %v2705 = vpop.f32.mrb[0].mxu0
    %v2706 = vadd.f32 %v2632, %v2705
    %v2707 = vpop.f32.mrb[0].mxu0
    %2708 = vmatprep.mubr.f32.mxu0 0.0
    %2709 = vmatmul.mubr.f32.gmra.mrb[0].mxu0 %v2637
    %v2710 = vpop.f32.mrb[0].mxu0
    %v2711 = vadd.f32 %v2632, %v2710
    %v2712 = vpop.f32.mrb[0].mxu0
    %2713 = vdwg.mxu0
    %v2714 = vmax.f32 %v2706, 0.0
    %v2715 = vmax.f32 %v2711, 0.0
    %v2716 = vlaneseq
    %v2717 = vshrl.u32 %v2716, 7
    %v2718 = vsub.s32 0, %v2717
    %v2719 = vrot.slane %v1620, %v2718
    %v2721 = vsel %vm1315, %v2714, 0
    %v2724 = vsel %vm1315, %v2715, 0
    %2726 = vmatprep.subr.mxu0 0.0
    %2727 = vmatpush1.msra.mxu0 %v1607
    %2728 = vmatprep.subr.mxu0 0.0
    %2729 = vmatpush1.msra.mxu0 %v1608
    %2730 = vmatprep.subr.mxu0 0.0
    %2731 = vmatpush1.msra.mxu0 %v1609
    %2732 = vmatprep.subr.mxu0 0.0
    %2733 = vmatpush1.msra.mxu0 %v1610
    %2734 = vmatprep.subr.mxu0 0.0
    %2735 = vmatpush1.msra.mxu0 %v1611
    %2736 = vmatprep.subr.mxu0 0.0
    %2737 = vmatpush1.msra.mxu0 %v1612
    %2738 = vmatprep.subr.mxu0 0.0
    %2739 = vmatpush1.msra.mxu0 %v1613
    %2740 = vmatprep.subr.mxu0 0.0
    %2741 = vmatpush1.msra.mxu0 %v1614
    %2742 = vmatprep.subr.mxu0 0.0
    %2743 = vmatpush1.msra.mxu0 0.0
    %2744 = vmatprep.subr.mxu0 0.0
    %2745 = vmatpush1.msra.mxu0 0.0
    %2746 = vmatprep.subr.mxu0 0.0
    %2747 = vmatpush1.msra.mxu0 0.0
    %2748 = vmatprep.subr.mxu0 0.0
    %2749 = vmatpush1.msra.mxu0 0.0
    %2750 = vmatprep.subr.mxu0 0.0
    %2751 = vmatpush1.msra.mxu0 0.0
    %2752 = vmatprep.subr.mxu0 0.0
    %2753 = vmatpush1.msra.mxu0 0.0
    %2754 = vmatprep.subr.mxu0 0.0
    %2755 = vmatpush1.msra.mxu0 0.0
    %2756 = vmatprep.subr.mxu0 0.0
    %2757 = vmatpush1.msra.mxu0 0.0
    %2758 = vmatprep.subr.mxu0 0.0
    %2759 = vmatpush1.msra.mxu0 0.0
    %2760 = vmatprep.subr.mxu0 0.0
    %2761 = vmatpush1.msra.mxu0 0.0
    %2762 = vmatprep.subr.mxu0 0.0
    %2763 = vmatpush1.msra.mxu0 0.0
    %2764 = vmatprep.subr.mxu0 0.0
    %2765 = vmatpush1.msra.mxu0 0.0
    %2766 = vmatprep.subr.mxu0 0.0
    %2767 = vmatpush1.msra.mxu0 0.0
    %2768 = vmatprep.subr.mxu0 0.0
    %2769 = vmatpush1.msra.mxu0 0.0
    %2770 = vmatprep.subr.mxu0 0.0
    %2771 = vmatpush1.msra.mxu0 0.0
    %2772 = vmatprep.subr.mxu0 0.0
    %2773 = vmatpush1.msra.mxu0 0.0
    %2774 = vmatprep.subr.mxu0 0.0
    %2775 = vmatpush1.msra.mxu0 0.0
    %2776 = vmatprep.subr.mxu0 0.0
    %2777 = vmatpush1.msra.mxu0 0.0
    %2778 = vmatprep.subr.mxu0 0.0
    %2779 = vmatpush1.msra.mxu0 0.0
    %2780 = vmatprep.subr.mxu0 0.0
    %2781 = vmatpush1.msra.mxu0 0.0
    %2782 = vmatprep.subr.mxu0 0.0
    %2783 = vmatpush1.msra.mxu0 0.0
    %2784 = vmatprep.subr.mxu0 0.0
    %2785 = vmatpush1.msra.mxu0 0.0
    %2786 = vmatprep.subr.mxu0 0.0
    %2787 = vmatpush1.msra.mxu0 0.0
    %2788 = vmatprep.subr.mxu0 0.0
    %2789 = vmatpush1.msra.mxu0 0.0
    %2790 = vmatprep.mubr.f32.mxu0 0.0
    %2791 = vmatmul.mubr.f32.gmra.mrb[0].mxu0 %v2721
    %v2792 = vpop.f32.mrb[0].mxu0
    %v2793 = vadd.f32 %v2719, %v2792
    %v2794 = vpop.f32.mrb[0].mxu0
    %2795 = vmatprep.mubr.f32.mxu0 0.0
    %2796 = vmatmul.mubr.f32.gmra.mrb[0].mxu0 %v2724
    %v2797 = vpop.f32.mrb[0].mxu0
    %v2798 = vadd.f32 %v2719, %v2797
    %v2799 = vpop.f32.mrb[0].mxu0
    %2800 = vdwg.mxu0
    %v2801 = vadd.f32 %v2627, %v2793
    %v2802 = vadd.f32 %v2628, %v2798
    %v2804 = vsel %vm199, %v2801, 0
    %v2807 = vsel %vm199, %v2802, 0
    %2809 = vmatprep.subr.mxu0 0.0
    %2810 = vmatpush1.msra.mxu0 %v21
    %2811 = vmatprep.subr.mxu0 0.0
    %2812 = vmatpush1.msra.mxu0 %v22
    %2813 = vmatprep.subr.mxu0 0.0
    %2814 = vmatpush1.msra.mxu0 %v23
    %2815 = vmatprep.subr.mxu0 0.0
    %2816 = vmatpush1.msra.mxu0 %v24
    %2817 = vmatprep.subr.mxu0 0.0
    %2818 = vmatpush1.msra.mxu0 0.0
    %2819 = vmatprep.subr.mxu0 0.0
    %2820 = vmatpush1.msra.mxu0 0.0
    %2821 = vmatprep.subr.mxu0 0.0
    %2822 = vmatpush1.msra.mxu0 0.0
    %2823 = vmatprep.subr.mxu0 0.0
    %2824 = vmatpush1.msra.mxu0 0.0
    %2825 = vmatprep.subr.mxu0 0.0
    %2826 = vmatpush1.msra.mxu0 0.0
    %2827 = vmatprep.subr.mxu0 0.0
    %2828 = vmatpush1.msra.mxu0 0.0
    %2829 = vmatprep.subr.mxu0 0.0
    %2830 = vmatpush1.msra.mxu0 0.0
    %2831 = vmatprep.subr.mxu0 0.0
    %2832 = vmatpush1.msra.mxu0 0.0
    %2833 = vmatprep.subr.mxu0 0.0
    %2834 = vmatpush1.msra.mxu0 0.0
    %2835 = vmatprep.subr.mxu0 0.0
    %2836 = vmatpush1.msra.mxu0 0.0
    %2837 = vmatprep.subr.mxu0 0.0
    %2838 = vmatpush1.msra.mxu0 0.0
    %2839 = vmatprep.subr.mxu0 0.0
    %2840 = vmatpush1.msra.mxu0 0.0
    %2841 = vmatprep.subr.mxu0 0.0
    %2842 = vmatpush1.msra.mxu0 0.0
    %2843 = vmatprep.subr.mxu0 0.0
    %2844 = vmatpush1.msra.mxu0 0.0
    %2845 = vmatprep.subr.mxu0 0.0
    %2846 = vmatpush1.msra.mxu0 0.0
    %2847 = vmatprep.subr.mxu0 0.0
    %2848 = vmatpush1.msra.mxu0 0.0
    %2849 = vmatprep.subr.mxu0 0.0
    %2850 = vmatpush1.msra.mxu0 0.0
    %2851 = vmatprep.subr.mxu0 0.0
    %2852 = vmatpush1.msra.mxu0 0.0
    %2853 = vmatprep.subr.mxu0 0.0
    %2854 = vmatpush1.msra.mxu0 0.0
    %2855 = vmatprep.subr.mxu0 0.0
    %2856 = vmatpush1.msra.mxu0 0.0
    %2857 = vmatprep.subr.mxu0 0.0
    %2858 = vmatpush1.msra.mxu0 0.0
    %2859 = vmatprep.subr.mxu0 0.0
    %2860 = vmatpush1.msra.mxu0 0.0
    %2861 = vmatprep.subr.mxu0 0.0
    %2862 = vmatpush1.msra.mxu0 0.0
    %2863 = vmatprep.subr.mxu0 0.0
    %2864 = vmatpush1.msra.mxu0 0.0
    %2865 = vmatprep.subr.mxu0 0.0
    %2866 = vmatpush1.msra.mxu0 0.0
    %2867 = vmatprep.subr.mxu0 0.0
    %2868 = vmatpush1.msra.mxu0 0.0
    %2869 = vmatprep.subr.mxu0 0.0
    %2870 = vmatpush1.msra.mxu0 0.0
    %2871 = vmatprep.subr.mxu0 0.0
    %2872 = vmatpush1.msra.mxu0 0.0
    %2873 = vmatprep.mubr.f32.mxu0 0.0
    %2874 = vmatmul.mubr.f32.gmra.mrb[0].mxu0 %v2804
    %v2875 = vpop.f32.mrb[0].mxu0
    %v2876 = vadd.f32 0.0, %v2875
    %v2877 = vpop.f32.mrb[0].mxu0
    %2878 = vmatprep.mubr.f32.mxu0 0.0
    %2879 = vmatmul.mubr.f32.gmra.mrb[0].mxu0 %v2807
    %v2880 = vpop.f32.mrb[0].mxu0
    %v2881 = vadd.f32 0.0, %v2880
    %v2882 = vpop.f32.mrb[0].mxu0
    %2883 = vdwg.mxu0
    %v2884 = vmul.f32 %v2801, %v2801
    %v2885 = vmul.f32 %v2802, %v2802
    %v2887 = vsel %vm199, %v2884, 0
    %v2890 = vsel %vm199, %v2885, 0
    %2892 = vmatprep.subr.mxu0 0.0
    %2893 = vmatpush1.msra.mxu0 %v21
    %2894 = vmatprep.subr.mxu0 0.0
    %2895 = vmatpush1.msra.mxu0 %v22
    %2896 = vmatprep.subr.mxu0 0.0
    %2897 = vmatpush1.msra.mxu0 %v23
    %2898 = vmatprep.subr.mxu0 0.0
    %2899 = vmatpush1.msra.mxu0 %v24
    %2900 = vmatprep.subr.mxu0 0.0
    %2901 = vmatpush1.msra.mxu0 0.0
    %2902 = vmatprep.subr.mxu0 0.0
    %2903 = vmatpush1.msra.mxu0 0.0
    %2904 = vmatprep.subr.mxu0 0.0
    %2905 = vmatpush1.msra.mxu0 0.0
    %2906 = vmatprep.subr.mxu0 0.0
    %2907 = vmatpush1.msra.mxu0 0.0
    %2908 = vmatprep.subr.mxu0 0.0
    %2909 = vmatpush1.msra.mxu0 0.0
    %2910 = vmatprep.subr.mxu0 0.0
    %2911 = vmatpush1.msra.mxu0 0.0
    %2912 = vmatprep.subr.mxu0 0.0
    %2913 = vmatpush1.msra.mxu0 0.0
    %2914 = vmatprep.subr.mxu0 0.0
    %2915 = vmatpush1.msra.mxu0 0.0
    %2916 = vmatprep.subr.mxu0 0.0
    %2917 = vmatpush1.msra.mxu0 0.0
    %2918 = vmatprep.subr.mxu0 0.0
    %2919 = vmatpush1.msra.mxu0 0.0
    %2920 = vmatprep.subr.mxu0 0.0
    %2921 = vmatpush1.msra.mxu0 0.0
    %2922 = vmatprep.subr.mxu0 0.0
    %2923 = vmatpush1.msra.mxu0 0.0
    %2924 = vmatprep.subr.mxu0 0.0
    %2925 = vmatpush1.msra.mxu0 0.0
    %2926 = vmatprep.subr.mxu0 0.0
    %2927 = vmatpush1.msra.mxu0 0.0
    %2928 = vmatprep.subr.mxu0 0.0
    %2929 = vmatpush1.msra.mxu0 0.0
    %2930 = vmatprep.subr.mxu0 0.0
    %2931 = vmatpush1.msra.mxu0 0.0
    %2932 = vmatprep.subr.mxu0 0.0
    %2933 = vmatpush1.msra.mxu0 0.0
    %2934 = vmatprep.subr.mxu0 0.0
    %2935 = vmatpush1.msra.mxu0 0.0
    %2936 = vmatprep.subr.mxu0 0.0
    %2937 = vmatpush1.msra.mxu0 0.0
    %2938 = vmatprep.subr.mxu0 0.0
    %2939 = vmatpush1.msra.mxu0 0.0
    %2940 = vmatprep.subr.mxu0 0.0
    %2941 = vmatpush1.msra.mxu0 0.0
    %2942 = vmatprep.subr.mxu0 0.0
    %2943 = vmatpush1.msra.mxu0 0.0
    %2944 = vmatprep.subr.mxu0 0.0
    %2945 = vmatpush1.msra.mxu0 0.0
    %2946 = vmatprep.subr.mxu0 0.0
    %2947 = vmatpush1.msra.mxu0 0.0
    %2948 = vmatprep.subr.mxu0 0.0
    %2949 = vmatpush1.msra.mxu0 0.0
    %2950 = vmatprep.subr.mxu0 0.0
    %2951 = vmatpush1.msra.mxu0 0.0
    %2952 = vmatprep.subr.mxu0 0.0
    %2953 = vmatpush1.msra.mxu0 0.0
    %2954 = vmatprep.subr.mxu0 0.0
    %2955 = vmatpush1.msra.mxu0 0.0
    %2956 = vmatprep.mubr.f32.mxu0 0.0
    %2957 = vmatmul.mubr.f32.gmra.mrb[0].mxu0 %v2887
    %v2958 = vpop.f32.mrb[0].mxu0
    %v2959 = vadd.f32 0.0, %v2958
    %v2960 = vpop.f32.mrb[0].mxu0
    %2961 = vmatprep.mubr.f32.mxu0 0.0
    %2962 = vmatmul.mubr.f32.gmra.mrb[0].mxu0 %v2890
    %v2963 = vpop.f32.mrb[0].mxu0
    %v2964 = vadd.f32 0.0, %v2963
    %v2965 = vpop.f32.mrb[0].mxu0
    %2966 = vdwg.mxu0
    %v2967 = vmul.f32 %v2876, %v2876
    %v2968 = vmul.f32 %v2881, %v2881
    %v2969 = vsub.f32 %v2959, %v2967
    %v2970 = vsub.f32 %v2964, %v2968
    %v2971 = vsub.f32 %v2801, %v2876
    %v2972 = vsub.f32 %v2802, %v2881
    %v2973 = vadd.f32 %v2969, 1e-05
    %v2974 = vadd.f32 %v2970, 1e-05
    %v2975 = vrsqrt.pop %v2973
    %v2976 = vrsqrt.pop %v2974
    %v2977 = vmul.f32 %v2971, %v2975
    %v2978 = vmul.f32 %v2972, %v2976
    %v2979 = vlaneseq
    %v2980 = vshrl.u32 %v2979, 7
    %v2981 = vsub.s32 0, %v2980
    %v2982 = vrot.slane %v1623, %v2981
    %v2983 = vmul.f32 %v2977, %v2982
    %v2984 = vmul.f32 %v2978, %v2982
    %v2985 = vlaneseq
    %v2986 = vshrl.u32 %v2985, 7
    %v2987 = vsub.s32 0, %v2986
    %v2988 = vrot.slane %v1624, %v2987
    %v2989 = vadd.f32 %v2983, %v2988
    %v2990 = vadd.f32 %v2984, %v2988
    %v2992 = vsel %vm439, %v43, 0
    %2994 = vmatprep.subr.mxu0 0.0
    %2995 = vmatpush1.msra.mxu0 %v2989
    %2996 = vmatprep.subr.mxu0 0.0
    %2997 = vmatpush1.msra.mxu0 %v2990
    %2998 = vmatprep.subr.mxu0 0.0
    %2999 = vmatpush1.msra.mxu0 0.0
    %3000 = vmatprep.subr.mxu0 0.0
    %3001 = vmatpush1.msra.mxu0 0.0
    %3002 = vmatprep.subr.mxu0 0.0
    %3003 = vmatpush1.msra.mxu0 0.0
    %3004 = vmatprep.subr.mxu0 0.0
    %3005 = vmatpush1.msra.mxu0 0.0
    %3006 = vmatprep.subr.mxu0 0.0
    %3007 = vmatpush1.msra.mxu0 0.0
    %3008 = vmatprep.subr.mxu0 0.0
    %3009 = vmatpush1.msra.mxu0 0.0
    %3010 = vmatprep.subr.mxu0 0.0
    %3011 = vmatpush1.msra.mxu0 0.0
    %3012 = vmatprep.subr.mxu0 0.0
    %3013 = vmatpush1.msra.mxu0 0.0
    %3014 = vmatprep.subr.mxu0 0.0
    %3015 = vmatpush1.msra.mxu0 0.0
    %3016 = vmatprep.subr.mxu0 0.0
    %3017 = vmatpush1.msra.mxu0 0.0
    %3018 = vmatprep.subr.mxu0 0.0
    %3019 = vmatpush1.msra.mxu0 0.0
    %3020 = vmatprep.subr.mxu0 0.0
    %3021 = vmatpush1.msra.mxu0 0.0
    %3022 = vmatprep.subr.mxu0 0.0
    %3023 = vmatpush1.msra.mxu0 0.0
    %3024 = vmatprep.subr.mxu0 0.0
    %3025 = vmatpush1.msra.mxu0 0.0
    %3026 = vmatprep.subr.mxu0 0.0
    %3027 = vmatpush1.msra.mxu0 0.0
    %3028 = vmatprep.subr.mxu0 0.0
    %3029 = vmatpush1.msra.mxu0 0.0
    %3030 = vmatprep.subr.mxu0 0.0
    %3031 = vmatpush1.msra.mxu0 0.0
    %3032 = vmatprep.subr.mxu0 0.0
    %3033 = vmatpush1.msra.mxu0 0.0
    %3034 = vmatprep.subr.mxu0 0.0
    %3035 = vmatpush1.msra.mxu0 0.0
    %3036 = vmatprep.subr.mxu0 0.0
    %3037 = vmatpush1.msra.mxu0 0.0
    %3038 = vmatprep.subr.mxu0 0.0
    %3039 = vmatpush1.msra.mxu0 0.0
    %3040 = vmatprep.subr.mxu0 0.0
    %3041 = vmatpush1.msra.mxu0 0.0
    %3042 = vmatprep.subr.mxu0 0.0
    %3043 = vmatpush1.msra.mxu0 0.0
    %3044 = vmatprep.subr.mxu0 0.0
    %3045 = vmatpush1.msra.mxu0 0.0
    %3046 = vmatprep.subr.mxu0 0.0
    %3047 = vmatpush1.msra.mxu0 0.0
    %3048 = vmatprep.subr.mxu0 0.0
    %3049 = vmatpush1.msra.mxu0 0.0
    %3050 = vmatprep.subr.mxu0 0.0
    %3051 = vmatpush1.msra.mxu0 0.0
    %3052 = vmatprep.subr.mxu0 0.0
    %3053 = vmatpush1.msra.mxu0 0.0
    %3054 = vmatprep.subr.mxu0 0.0
    %3055 = vmatpush1.msra.mxu0 0.0
    %3056 = vmatprep.subr.mxu0 0.0
    %3057 = vmatpush1.msra.mxu0 0.0
    %3058 = vmatprep.mubr.f32.mxu0 0.0
    %3059 = vmatmul.mubr.f32.gmra.mrb[0].mxu0 %v2992
    %v3060 = vpop.f32.mrb[0].mxu0
    %v3061 = vadd.f32 0.0, %v3060
    %v3062 = vpop.f32.mrb[0].mxu0
    %3063 = vdwg.mxu0
    %v3065 = vsel %vm199, %v3061, 0
    %3067 = vmatprep.subr.mxu0 0.0
    %3068 = vmatpush1.msra.mxu0 %v21
    %3069 = vmatprep.subr.mxu0 0.0
    %3070 = vmatpush1.msra.mxu0 %v22
    %3071 = vmatprep.subr.mxu0 0.0
    %3072 = vmatpush1.msra.mxu0 %v23
    %3073 = vmatprep.subr.mxu0 0.0
    %3074 = vmatpush1.msra.mxu0 %v24
    %3075 = vmatprep.subr.mxu0 0.0
    %3076 = vmatpush1.msra.mxu0 0.0
    %3077 = vmatprep.subr.mxu0 0.0
    %3078 = vmatpush1.msra.mxu0 0.0
    %3079 = vmatprep.subr.mxu0 0.0
    %3080 = vmatpush1.msra.mxu0 0.0
    %3081 = vmatprep.subr.mxu0 0.0
    %3082 = vmatpush1.msra.mxu0 0.0
    %3083 = vmatprep.subr.mxu0 0.0
    %3084 = vmatpush1.msra.mxu0 0.0
    %3085 = vmatprep.subr.mxu0 0.0
    %3086 = vmatpush1.msra.mxu0 0.0
    %3087 = vmatprep.subr.mxu0 0.0
    %3088 = vmatpush1.msra.mxu0 0.0
    %3089 = vmatprep.subr.mxu0 0.0
    %3090 = vmatpush1.msra.mxu0 0.0
    %3091 = vmatprep.subr.mxu0 0.0
    %3092 = vmatpush1.msra.mxu0 0.0
    %3093 = vmatprep.subr.mxu0 0.0
    %3094 = vmatpush1.msra.mxu0 0.0
    %3095 = vmatprep.subr.mxu0 0.0
    %3096 = vmatpush1.msra.mxu0 0.0
    %3097 = vmatprep.subr.mxu0 0.0
    %3098 = vmatpush1.msra.mxu0 0.0
    %3099 = vmatprep.subr.mxu0 0.0
    %3100 = vmatpush1.msra.mxu0 0.0
    %3101 = vmatprep.subr.mxu0 0.0
    %3102 = vmatpush1.msra.mxu0 0.0
    %3103 = vmatprep.subr.mxu0 0.0
    %3104 = vmatpush1.msra.mxu0 0.0
    %3105 = vmatprep.subr.mxu0 0.0
    %3106 = vmatpush1.msra.mxu0 0.0
    %3107 = vmatprep.subr.mxu0 0.0
    %3108 = vmatpush1.msra.mxu0 0.0
    %3109 = vmatprep.subr.mxu0 0.0
    %3110 = vmatpush1.msra.mxu0 0.0
    %3111 = vmatprep.subr.mxu0 0.0
    %3112 = vmatpush1.msra.mxu0 0.0
    %3113 = vmatprep.subr.mxu0 0.0
    %3114 = vmatpush1.msra.mxu0 0.0
    %3115 = vmatprep.subr.mxu0 0.0
    %3116 = vmatpush1.msra.mxu0 0.0
    %3117 = vmatprep.subr.mxu0 0.0
    %3118 = vmatpush1.msra.mxu0 0.0
    %3119 = vmatprep.subr.mxu0 0.0
    %3120 = vmatpush1.msra.mxu0 0.0
    %3121 = vmatprep.subr.mxu0 0.0
    %3122 = vmatpush1.msra.mxu0 0.0
    %3123 = vmatprep.subr.mxu0 0.0
    %3124 = vmatpush1.msra.mxu0 0.0
    %3125 = vmatprep.subr.mxu0 0.0
    %3126 = vmatpush1.msra.mxu0 0.0
    %3127 = vmatprep.subr.mxu0 0.0
    %3128 = vmatpush1.msra.mxu0 0.0
    %3129 = vmatprep.subr.mxu0 0.0
    %3130 = vmatpush1.msra.mxu0 0.0
    %3131 = vmatprep.mubr.f32.mxu0 0.0
    %3132 = vmatmul.mubr.f32.gmra.mrb[0].mxu0 %v3065
    %v3133 = vpop.f32.mrb[0].mxu0
    %v3134 = vadd.f32 0.0, %v3133
    %v3135 = vpop.f32.mrb[0].mxu0
    %3136 = vdwg.mxu0
    %v3137 = vmul.f32 %v3061, %v3061
    %v3139 = vsel %vm199, %v3137, 0
    %3141 = vmatprep.subr.mxu0 0.0
    %3142 = vmatpush1.msra.mxu0 %v21
    %3143 = vmatprep.subr.mxu0 0.0
    %3144 = vmatpush1.msra.mxu0 %v22
    %3145 = vmatprep.subr.mxu0 0.0
    %3146 = vmatpush1.msra.mxu0 %v23
    %3147 = vmatprep.subr.mxu0 0.0
    %3148 = vmatpush1.msra.mxu0 %v24
    %3149 = vmatprep.subr.mxu0 0.0
    %3150 = vmatpush1.msra.mxu0 0.0
    %3151 = vmatprep.subr.mxu0 0.0
    %3152 = vmatpush1.msra.mxu0 0.0
    %3153 = vmatprep.subr.mxu0 0.0
    %3154 = vmatpush1.msra.mxu0 0.0
    %3155 = vmatprep.subr.mxu0 0.0
    %3156 = vmatpush1.msra.mxu0 0.0
    %3157 = vmatprep.subr.mxu0 0.0
    %3158 = vmatpush1.msra.mxu0 0.0
    %3159 = vmatprep.subr.mxu0 0.0
    %3160 = vmatpush1.msra.mxu0 0.0
    %3161 = vmatprep.subr.mxu0 0.0
    %3162 = vmatpush1.msra.mxu0 0.0
    %3163 = vmatprep.subr.mxu0 0.0
    %3164 = vmatpush1.msra.mxu0 0.0
    %3165 = vmatprep.subr.mxu0 0.0
    %3166 = vmatpush1.msra.mxu0 0.0
    %3167 = vmatprep.subr.mxu0 0.0
    %3168 = vmatpush1.msra.mxu0 0.0
    %3169 = vmatprep.subr.mxu0 0.0
    %3170 = vmatpush1.msra.mxu0 0.0
    %3171 = vmatprep.subr.mxu0 0.0
    %3172 = vmatpush1.msra.mxu0 0.0
    %3173 = vmatprep.subr.mxu0 0.0
    %3174 = vmatpush1.msra.mxu0 0.0
    %3175 = vmatprep.subr.mxu0 0.0
    %3176 = vmatpush1.msra.mxu0 0.0
    %3177 = vmatprep.subr.mxu0 0.0
    %3178 = vmatpush1.msra.mxu0 0.0
    %3179 = vmatprep.subr.mxu0 0.0
    %3180 = vmatpush1.msra.mxu0 0.0
    %3181 = vmatprep.subr.mxu0 0.0
    %3182 = vmatpush1.msra.mxu0 0.0
    %3183 = vmatprep.subr.mxu0 0.0
    %3184 = vmatpush1.msra.mxu0 0.0
    %3185 = vmatprep.subr.mxu0 0.0
    %3186 = vmatpush1.msra.mxu0 0.0
    %3187 = vmatprep.subr.mxu0 0.0
    %3188 = vmatpush1.msra.mxu0 0.0
    %3189 = vmatprep.subr.mxu0 0.0
    %3190 = vmatpush1.msra.mxu0 0.0
    %3191 = vmatprep.subr.mxu0 0.0
    %3192 = vmatpush1.msra.mxu0 0.0
    %3193 = vmatprep.subr.mxu0 0.0
    %3194 = vmatpush1.msra.mxu0 0.0
    %3195 = vmatprep.subr.mxu0 0.0
    %3196 = vmatpush1.msra.mxu0 0.0
    %3197 = vmatprep.subr.mxu0 0.0
    %3198 = vmatpush1.msra.mxu0 0.0
    %3199 = vmatprep.subr.mxu0 0.0
    %3200 = vmatpush1.msra.mxu0 0.0
    %3201 = vmatprep.subr.mxu0 0.0
    %3202 = vmatpush1.msra.mxu0 0.0
    %3203 = vmatprep.subr.mxu0 0.0
    %3204 = vmatpush1.msra.mxu0 0.0
    %3205 = vmatprep.mubr.f32.mxu0 0.0
    %3206 = vmatmul.mubr.f32.gmra.mrb[0].mxu0 %v3139
    %v3207 = vpop.f32.mrb[0].mxu0
    %v3208 = vadd.f32 0.0, %v3207
    %v3209 = vpop.f32.mrb[0].mxu0
    %3210 = vdwg.mxu0
    %v3211 = vmul.f32 %v3134, %v3134
    %v3212 = vsub.f32 %v3208, %v3211
    %v3213 = vsub.f32 %v3061, %v3134
    %v3214 = vadd.f32 %v3212, 1e-05
    %v3215 = vrsqrt.pop %v3214
    %v3216 = vmul.f32 %v3213, %v3215
    %v3217 = vlaneseq
    %v3218 = vshrl.u32 %v3217, 7
    %v3219 = vsub.s32 0, %v3218
    %v3220 = vrot.slane %v29, %v3219
    %v3221 = vmul.f32 %v3216, %v3220
    %v3222 = vlaneseq
    %v3223 = vshrl.u32 %v3222, 7
    %v3224 = vsub.s32 0, %v3223
    %v3225 = vrot.slane %v30, %v3224
    %v3226 = vadd.f32 %v3221, %v3225
    %v3227 = vlaneseq
    %v3228 = vshrl.u32 %v3227, 7
    %v3229 = vsub.s32 0, %v3228
    %v3230 = vrot.slane %v31, %v3229
    %v3232 = vsel %vm199, %v3226, 0
    %3234 = vmatprep.subr.mxu0 0.0
    %3235 = vmatpush1.msra.mxu0 %v25
    %3236 = vmatprep.subr.mxu0 0.0
    %3237 = vmatpush1.msra.mxu0 %v26
    %3238 = vmatprep.subr.mxu0 0.0
    %3239 = vmatpush1.msra.mxu0 %v27
    %3240 = vmatprep.subr.mxu0 0.0
    %3241 = vmatpush1.msra.mxu0 %v28
    %3242 = vmatprep.subr.mxu0 0.0
    %3243 = vmatpush1.msra.mxu0 0.0
    %3244 = vmatprep.subr.mxu0 0.0
    %3245 = vmatpush1.msra.mxu0 0.0
    %3246 = vmatprep.subr.mxu0 0.0
    %3247 = vmatpush1.msra.mxu0 0.0
    %3248 = vmatprep.subr.mxu0 0.0
    %3249 = vmatpush1.msra.mxu0 0.0
    %3250 = vmatprep.subr.mxu0 0.0
    %3251 = vmatpush1.msra.mxu0 0.0
    %3252 = vmatprep.subr.mxu0 0.0
    %3253 = vmatpush1.msra.mxu0 0.0
    %3254 = vmatprep.subr.mxu0 0.0
    %3255 = vmatpush1.msra.mxu0 0.0
    %3256 = vmatprep.subr.mxu0 0.0
    %3257 = vmatpush1.msra.mxu0 0.0
    %3258 = vmatprep.subr.mxu0 0.0
    %3259 = vmatpush1.msra.mxu0 0.0
    %3260 = vmatprep.subr.mxu0 0.0
    %3261 = vmatpush1.msra.mxu0 0.0
    %3262 = vmatprep.subr.mxu0 0.0
    %3263 = vmatpush1.msra.mxu0 0.0
    %3264 = vmatprep.subr.mxu0 0.0
    %3265 = vmatpush1.msra.mxu0 0.0
    %3266 = vmatprep.subr.mxu0 0.0
    %3267 = vmatpush1.msra.mxu0 0.0
    %3268 = vmatprep.subr.mxu0 0.0
    %3269 = vmatpush1.msra.mxu0 0.0
    %3270 = vmatprep.subr.mxu0 0.0
    %3271 = vmatpush1.msra.mxu0 0.0
    %3272 = vmatprep.subr.mxu0 0.0
    %3273 = vmatpush1.msra.mxu0 0.0
    %3274 = vmatprep.subr.mxu0 0.0
    %3275 = vmatpush1.msra.mxu0 0.0
    %3276 = vmatprep.subr.mxu0 0.0
    %3277 = vmatpush1.msra.mxu0 0.0
    %3278 = vmatprep.subr.mxu0 0.0
    %3279 = vmatpush1.msra.mxu0 0.0
    %3280 = vmatprep.subr.mxu0 0.0
    %3281 = vmatpush1.msra.mxu0 0.0
    %3282 = vmatprep.subr.mxu0 0.0
    %3283 = vmatpush1.msra.mxu0 0.0
    %3284 = vmatprep.subr.mxu0 0.0
    %3285 = vmatpush1.msra.mxu0 0.0
    %3286 = vmatprep.subr.mxu0 0.0
    %3287 = vmatpush1.msra.mxu0 0.0
    %3288 = vmatprep.subr.mxu0 0.0
    %3289 = vmatpush1.msra.mxu0 0.0
    %3290 = vmatprep.subr.mxu0 0.0
    %3291 = vmatpush1.msra.mxu0 0.0
    %3292 = vmatprep.subr.mxu0 0.0
    %3293 = vmatpush1.msra.mxu0 0.0
    %3294 = vmatprep.subr.mxu0 0.0
    %3295 = vmatpush1.msra.mxu0 0.0
    %3296 = vmatprep.subr.mxu0 0.0
    %3297 = vmatpush1.msra.mxu0 0.0
    %3298 = vmatprep.mubr.f32.mxu0 0.0
    %3299 = vmatmul.mubr.f32.gmra.mrb[0].mxu0 %v3232
    %v3300 = vpop.f32.mrb[0].mxu0
    %v3301 = vadd.f32 %v3230, %v3300
    %v3302 = vpop.f32.mrb[0].mxu0
    %3303 = vdwg.mxu0
    %3304 = vst [vmem:[#allocation2] sm:$0x3] %v3301
    // Predicated region
    $region22: #{large_model_forward.1} parent=1 // pred_check
      _
    $region23: #{large_model_forward.1} parent=1 // pred_check_branch
      %3306 = sbr.rel (0) target = $region25
    $region24: #{large_model_forward.1} parent=1 // pred_region
      %s3308 = ssub.s32 32, 32
      %3309 = vsyncadd [#allocation3], %s3308
      %s3311 = sshll.u32 [#allocation2], 4
      %s3312 = int_to_ptr.vmem [resolvable:$true] %s3311
      %3314 = dma.vmem_to_hbm [thread:$0]  %s3312, 32, %s5, [#allocation3]
    $region25: #{large_model_forward.1} parent=1 // pred_fallthru
      _
    // Predicated region
    $region26: #{large_model_forward.1} parent=1 // pred_check
      _
    $region27: #{large_model_forward.1} parent=1 // pred_check_branch
      %3316 = sbr.rel (0) target = $region29
    $region28: #{large_model_forward.1} parent=1 // pred_region
      %3317 = dma.done [#allocation3], 32
    $region29: #{large_model_forward.1} parent=1 // pred_fallthru
      _
    %3318 = vsyncpa [#allocation3], 1

</llo_original>
